<compile_context>
chip_gen: v5e
topology: v5e:2x2
jax: 0.10.0
libtpu: 0.0.40
codegen_flags: <defaults>
</compile_context>

<pallas_src>
import numpy as np
import jax
import jax.numpy as jnp
from jax.experimental import pallas as pl
from jax.experimental.pallas import tpu as pltpu

_NUM_CLASSES = 10


# ---------------------------------------------------------------------------
# Fused kernel: one grid step == one batch tile, everything stays in VMEM.
# ---------------------------------------------------------------------------
def _fused_net_kernel(x_ref, a1_ref, b1_ref, a2_ref, b2_ref, a3_ref, b3_ref,
                      wfc_ref, bfc_ref, out_ref, zc1, act1, zc2, act2f):
    nb = x_ref.shape[1]                       # batch tile (multiple of 8)

    # ---- layer 1: conv(1->10, k5) -> maxpool2 -> relu -------------------
    # banded per-di matmuls with batch stacked into M = 24*nb
    acc = jnp.dot(x_ref[pl.ds(0, 24)].reshape(24 * nb, 28), a1_ref[0],
                  preferred_element_type=jnp.float32)
    for di in range(1, 5):
        acc = acc + jnp.dot(x_ref[pl.ds(di, 24)].reshape(24 * nb, 28),
                            a1_ref[di], preferred_element_type=jnp.float32)
    # W-direction pool: the two parity halves are 128-lane-aligned blocks.
    zc1[...] = jnp.maximum(acc[:, :128], acc[:, 128:]).reshape(24, nb, 128)
    # H-direction pool + bias + relu; each step handles a full (nb, 128) slab.
    b1 = b1_ref[...]
    for p in range(12):
        act1[p] = jnp.maximum(
            jnp.maximum(zc1[2 * p], zc1[2 * p + 1]) + b1, 0.0)

    # ---- layer 2: conv(10->20, k5) -> maxpool2 -> relu ------------------
    acc = jnp.dot(act1[pl.ds(0, 8)].reshape(8 * nb, 128), a2_ref[0],
                  preferred_element_type=jnp.float32)
    for di in range(1, 5):
        acc = acc + jnp.dot(act1[pl.ds(di, 8)].reshape(8 * nb, 128),
                            a2_ref[di], preferred_element_type=jnp.float32)
    zc2[...] = jnp.maximum(acc[:, :128], acc[:, 128:]).reshape(8, nb, 128)
    b2 = b2_ref[...]
    # H-pool + bias + relu, writing each pooled row into a 128-lane-aligned
    # slot of the flat (nb, 512) layer-3 input.
    for p in range(4):
        act2f[:, pl.ds(128 * p, 128)] = jnp.maximum(
            jnp.maximum(zc2[2 * p], zc2[2 * p + 1]) + b2, 0.0)

    # ---- layer 3: conv(20->40, k3) -> maxpool2 -> relu (single matmul) --
    y3 = jnp.dot(act2f[...], a3_ref[...], preferred_element_type=jnp.float32)
    # 2x2 max-pool == max over the four 128-lane-aligned position blocks.
    feat = jnp.maximum(jnp.maximum(y3[:, 0:128], y3[:, 128:256]),
                       jnp.maximum(y3[:, 256:384], y3[:, 384:512]))
    feat = jnp.maximum(feat + b3_ref[...], 0.0)          # (nb, 128), 40 real

    # ---- fc + softmax (exact normalization) ------------------------------
    logits = jnp.dot(feat, wfc_ref[...],
                     preferred_element_type=jnp.float32) + bfc_ref[...]
    lane = jax.lax.broadcasted_iota(jnp.int32, logits.shape, 1)
    logits = jnp.where(lane < _NUM_CLASSES, logits, -1e30)
    m = jnp.max(logits, axis=-1, keepdims=True)
    e = jnp.exp(logits - m)
    s = jnp.sum(e, axis=-1, keepdims=True)
    out_ref[...] = e / s


def _fused_forward(x_rows, packed, block_b):
    # x_rows: (28, N, 28) f32 -- H-leading image rows, lane index = w (Cin==1)
    assert block_b % 8 == 0
    n = x_rows.shape[1]
    pn = ((n + block_b - 1) // block_b) * block_b
    if pn != n:
        x_rows = jnp.pad(x_rows, ((0, 0), (0, pn - n), (0, 0)))

    weight_args = (packed["a1"], packed["b1"], packed["a2"], packed["b2"],
                   packed["a3"], packed["b3"], packed["wfc"], packed["bfc"])
    weight_specs = [
        pl.BlockSpec(tuple(w.shape), lambda i, nd=w.ndim: (0,) * nd)
        for w in weight_args
    ]
    out = pl.pallas_call(
        _fused_net_kernel,
        out_shape=jax.ShapeDtypeStruct((pn, 128), jnp.float32),
        grid=(pn // block_b,),
        in_specs=[pl.BlockSpec((28, block_b, 28), lambda i: (0, i, 0))]
                 + weight_specs,
        out_specs=pl.BlockSpec((block_b, 128), lambda i: (i, 0)),
        scratch_shapes=[
            pltpu.VMEM((24, block_b, 128), jnp.float32),   # layer1 col-pooled
            pltpu.VMEM((12, block_b, 128), jnp.float32),   # layer1 activation
            pltpu.VMEM((8, block_b, 128), jnp.float32),    # layer2 col-pooled
            pltpu.VMEM((block_b, 512), jnp.float32),       # layer3 flat input
        ],
        compiler_params=pltpu.CompilerParams(
            dimension_semantics=("parallel",)),
    )(x_rows, *weight_args)
    return out[:n, :_NUM_CLASSES]


# ---------------------------------------------------------------------------
# Host-side weight repacking (done once, outside jit, with numpy).
# ---------------------------------------------------------------------------
def _banded_conv(w, w_in, row_dim, half=128):
    """Repack (Cout, Cin, kh, kw) conv weights into kh banded matrices
    (row_dim, 2*half).  Column layout: (j%2)*half + (j//2)*Cout + cout, so the
    W-direction 2x2 pool is a max over the two 128-lane-aligned halves; unused
    rows/columns stay exactly zero."""
    w = np.asarray(w, np.float32)
    cout, cin, kh, kw = w.shape
    wo = w_in - kw + 1
    a = np.zeros((kh, row_dim, 2 * half), np.float32)
    for di in range(kh):
        for dj in range(kw):
            wt = w[:, :, di, dj].T                       # (cin, cout)
            for j in range(wo):
                col0 = (j % 2) * half + (j // 2) * cout
                row0 = (j + dj) * cin
                a[di, row0:row0 + cin, col0:col0 + cout] = wt
    return a


def _layer3_matrix(w):
    """Whole conv3 (2x2 output positions) as one (512, 512) matrix acting on
    the flat layer-2 activation; each of the 4 position blocks is 128-lane
    aligned so the 2x2 pool is a max over aligned blocks."""
    w = np.asarray(w, np.float32)
    cout, cin, kh, kw = w.shape
    a = np.zeros((512, 512), np.float32)
    for i in range(2):
        for j in range(2):
            col0 = (i * 2 + j) * 128
            for di in range(kh):
                for dj in range(kw):
                    row0 = (i + di) * 128 + (j + dj) * cin
                    a[row0:row0 + cin, col0:col0 + cout] = w[:, :, di, dj].T
    return a


def _tiled_bias(b, reps, width=128):
    b = np.asarray(b, np.float32)
    out = np.zeros((1, width), np.float32)
    out[0, :b.size * reps] = np.tile(b, reps)
    return out


def pack_params(params):
    w1, b1 = params["conv1"]
    w2, b2 = params["conv2"]
    w3, b3 = params["conv3"]
    fw, fb = params["fc"]
    wfc = np.zeros((128, 128), np.float32)
    wfc[:40, :_NUM_CLASSES] = np.asarray(fw, np.float32).T
    bfc = np.zeros((1, 128), np.float32)
    bfc[0, :_NUM_CLASSES] = np.asarray(fb, np.float32)
    return {
        "a1": jnp.asarray(_banded_conv(w1, w_in=28, row_dim=28)),   # (5,28,256)
        "b1": jnp.asarray(_tiled_bias(b1, 12)),                     # (1,128)
        "a2": jnp.asarray(_banded_conv(w2, w_in=12, row_dim=128)),  # (5,128,256)
        "b2": jnp.asarray(_tiled_bias(b2, 4)),                      # (1,128)
        "a3": jnp.asarray(_layer3_matrix(w3)),                      # (512,512)
        "b3": jnp.asarray(_tiled_bias(b3, 1)),                      # (1,128)
        "wfc": jnp.asarray(wfc),                                    # (128,128)
        "bfc": jnp.asarray(bfc),                                    # (1,128)
    }


# ---------------------------------------------------------------------------
# Full forward pass (matches PyTorch Net.forward semantics)
# ---------------------------------------------------------------------------
def net_forward(x_nchw, packed, block_b=None):
    n = x_nchw.shape[0]
    if block_b is None:
        block_b = 64 if n >= 64 else max(8, ((n + 7) // 8) * 8)
    # (N, 1, 28, 28) -> H-leading rows (28, N, 28); lane index = w (Cin == 1).
    x_rows = jnp.transpose(x_nchw.reshape(n, 28, 28).astype(jnp.float32),
                           (1, 0, 2))
    return _fused_forward(x_rows, packed, block_b)


# Pure-JAX reference (for correctness check only)
def net_reference(x_nchw, params):
    x = jnp.transpose(x_nchw, (0, 2, 3, 1)).astype(jnp.float32)
    for name in ("conv1", "conv2", "conv3"):
        w, b = params[name]
        y = jax.lax.conv_general_dilated(
            x, jnp.transpose(w, (2, 3, 1, 0)), (1, 1), "VALID",
            dimension_numbers=("NHWC", "HWIO", "NHWC"),
            precision=jax.lax.Precision.HIGHEST) + b
        y = jax.lax.reduce_window(y, -jnp.inf, jax.lax.max,
                                  (1, 2, 2, 1), (1, 2, 2, 1), "VALID")
        x = jnp.maximum(y, 0.0)
    feat = x.reshape(x.shape[0], -1)
    fw, fb = params["fc"]
    logits = jnp.dot(feat, fw.T, precision=jax.lax.Precision.HIGHEST) + fb
    return jax.nn.softmax(logits, axis=-1)


# ---------------------------------------------------------------------------
# Deterministic parameter init (shapes from Net.__init__)
# ---------------------------------------------------------------------------
def init_params(key):
    def uinit(k, shape, fan_in):
        bound = 1.0 / float(fan_in) ** 0.5
        return jax.random.uniform(k, shape, jnp.float32, -bound, bound)

    ks = jax.random.split(key, 8)
    return {
        "conv1": (uinit(ks[0], (10, 1, 5, 5), 25), uinit(ks[1], (10,), 25)),
        "conv2": (uinit(ks[2], (20, 10, 5, 5), 250), uinit(ks[3], (20,), 250)),
        "conv3": (uinit(ks[4], (40, 20, 3, 3), 180), uinit(ks[5], (40,), 180)),
        "fc": (uinit(ks[6], (10, 40), 40), uinit(ks[7], (10,), 40)),
    }


if __name__ == "__main__":
    key = jax.random.PRNGKey(0)
    k_x, k_p = jax.random.split(key)
    # Small demo batch; block_b=8 -> grid of 3 steps (exercises batch tiling
    # + padding).  28x28 input is required so the flatten yields 40 features.
    x = jax.random.normal(k_x, (20, 1, 28, 28), dtype=jnp.float32)
    params = init_params(k_p)
    packed = pack_params(params)

    fwd = jax.jit(net_forward, static_argnames=("block_b",))
    out = jax.block_until_ready(fwd(x, packed, block_b=8))

    assert out.shape == (20, _NUM_CLASSES), out.shape
    assert bool(jnp.all(jnp.isfinite(out)))
    # softmax rows sum to 1 (exact division in-kernel)
    assert bool(jnp.allclose(jnp.sum(out, axis=1), 1.0, atol=1e-4))
    # matches the pure-JAX reference of the PyTorch module
    ref = net_reference(x, params)
    err = float(jnp.max(jnp.abs(out - ref)))
    assert bool(jnp.allclose(out, ref, atol=3e-3, rtol=0.0)), err
    print("KERNEL_OK")
</pallas_src>

<mosaic_0001>
module attributes {stable_mosaic.version = 11 : i64} {
  func.func @_fused_net_kernel(%arg0: i32, %arg1: memref<28x8x28xf32, #tpu.memory_space<vmem>>, %arg2: memref<5x28x256xf32, #tpu.memory_space<vmem>>, %arg3: memref<1x128xf32, #tpu.memory_space<vmem>>, %arg4: memref<5x128x256xf32, #tpu.memory_space<vmem>>, %arg5: memref<1x128xf32, #tpu.memory_space<vmem>>, %arg6: memref<512x512xf32, #tpu.memory_space<vmem>>, %arg7: memref<1x128xf32, #tpu.memory_space<vmem>>, %arg8: memref<128x128xf32, #tpu.memory_space<vmem>>, %arg9: memref<1x128xf32, #tpu.memory_space<vmem>>, %arg10: memref<8x128xf32, #tpu.memory_space<vmem>>, %arg11: memref<24x8x128xf32, #tpu.memory_space<vmem>>, %arg12: memref<12x8x128xf32, #tpu.memory_space<vmem>>, %arg13: memref<8x8x128xf32, #tpu.memory_space<vmem>>, %arg14: memref<8x512xf32, #tpu.memory_space<vmem>>) attributes {dimension_semantics = [#tpu.dimension_semantics<parallel>], iteration_bounds = array<i64: 3>, scalar_prefetch = 0 : i64, scratch_operands = 4 : i64, tpu.core_type = #tpu.core_type<tc>, window_params = [{transform_indices = @transform_0, window_bounds = array<i64: 28, 8, 28>}, {pipeline_mode = #tpu.pipeline_mode<synchronous>, transform_indices = @transform_1, window_bounds = array<i64: 5, 28, 256>}, {pipeline_mode = #tpu.pipeline_mode<synchronous>, transform_indices = @transform_2, window_bounds = array<i64: 1, 128>}, {pipeline_mode = #tpu.pipeline_mode<synchronous>, transform_indices = @transform_3, window_bounds = array<i64: 5, 128, 256>}, {pipeline_mode = #tpu.pipeline_mode<synchronous>, transform_indices = @transform_4, window_bounds = array<i64: 1, 128>}, {pipeline_mode = #tpu.pipeline_mode<synchronous>, transform_indices = @transform_5, window_bounds = array<i64: 512, 512>}, {pipeline_mode = #tpu.pipeline_mode<synchronous>, transform_indices = @transform_6, window_bounds = array<i64: 1, 128>}, {pipeline_mode = #tpu.pipeline_mode<synchronous>, transform_indices = @transform_7, window_bounds = array<i64: 128, 128>}, {pipeline_mode = #tpu.pipeline_mode<synchronous>, transform_indices = @transform_8, window_bounds = array<i64: 1, 128>}, {transform_indices = @transform_9, window_bounds = array<i64: 8, 128>}]} {
    %c0 = arith.constant 0 : index
    %c0_0 = arith.constant 0 : index
    %c0_1 = arith.constant 0 : index
    %0 = vector.load %arg1[%c0, %c0_0, %c0_1] : memref<28x8x28xf32, #tpu.memory_space<vmem>>, vector<24x8x28xf32>
    %1 = vector.shape_cast %0 : vector<24x8x28xf32> to vector<192x28xf32>
    %c0_2 = arith.constant 0 : index
    %c0_3 = arith.constant 0 : index
    %c0_4 = arith.constant 0 : index
    %2 = vector.load %arg2[%c0_2, %c0_3, %c0_4] : memref<5x28x256xf32, #tpu.memory_space<vmem>>, vector<1x28x256xf32>
    %3 = vector.shape_cast %2 : vector<1x28x256xf32> to vector<28x256xf32>
    %cst = arith.constant dense<0.000000e+00> : vector<192x256xf32>
    %4 = tpu.matmul %1, %3, %cst {dimension_numbers = #tpu.dot_dimension_numbers<[1], [0], [0], [1], [0, 0, 1, 1], [], []>} : vector<192x28xf32>, vector<28x256xf32>, vector<192x256xf32> -> vector<192x256xf32>
    %c1 = arith.constant 1 : index
    %c0_5 = arith.constant 0 : index
    %c0_6 = arith.constant 0 : index
    %5 = vector.load %arg1[%c1, %c0_5, %c0_6] : memref<28x8x28xf32, #tpu.memory_space<vmem>>, vector<24x8x28xf32>
    %6 = vector.shape_cast %5 : vector<24x8x28xf32> to vector<192x28xf32>
    %c1_7 = arith.constant 1 : index
    %c0_8 = arith.constant 0 : index
    %c0_9 = arith.constant 0 : index
    %7 = vector.load %arg2[%c1_7, %c0_8, %c0_9] : memref<5x28x256xf32, #tpu.memory_space<vmem>>, vector<1x28x256xf32>
    %8 = vector.shape_cast %7 : vector<1x28x256xf32> to vector<28x256xf32>
    %cst_10 = arith.constant dense<0.000000e+00> : vector<192x256xf32>
    %9 = tpu.matmul %6, %8, %cst_10 {dimension_numbers = #tpu.dot_dimension_numbers<[1], [0], [0], [1], [0, 0, 1, 1], [], []>} : vector<192x28xf32>, vector<28x256xf32>, vector<192x256xf32> -> vector<192x256xf32>
    %10 = arith.addf %4, %9 : vector<192x256xf32>
    %c2 = arith.constant 2 : index
    %c0_11 = arith.constant 0 : index
    %c0_12 = arith.constant 0 : index
    %11 = vector.load %arg1[%c2, %c0_11, %c0_12] : memref<28x8x28xf32, #tpu.memory_space<vmem>>, vector<24x8x28xf32>
    %12 = vector.shape_cast %11 : vector<24x8x28xf32> to vector<192x28xf32>
    %c2_13 = arith.constant 2 : index
    %c0_14 = arith.constant 0 : index
    %c0_15 = arith.constant 0 : index
    %13 = vector.load %arg2[%c2_13, %c0_14, %c0_15] : memref<5x28x256xf32, #tpu.memory_space<vmem>>, vector<1x28x256xf32>
    %14 = vector.shape_cast %13 : vector<1x28x256xf32> to vector<28x256xf32>
    %cst_16 = arith.constant dense<0.000000e+00> : vector<192x256xf32>
    %15 = tpu.matmul %12, %14, %cst_16 {dimension_numbers = #tpu.dot_dimension_numbers<[1], [0], [0], [1], [0, 0, 1, 1], [], []>} : vector<192x28xf32>, vector<28x256xf32>, vector<192x256xf32> -> vector<192x256xf32>
    %16 = arith.addf %10, %15 : vector<192x256xf32>
    %c3 = arith.constant 3 : index
    %c0_17 = arith.constant 0 : index
    %c0_18 = arith.constant 0 : index
    %17 = vector.load %arg1[%c3, %c0_17, %c0_18] : memref<28x8x28xf32, #tpu.memory_space<vmem>>, vector<24x8x28xf32>
    %18 = vector.shape_cast %17 : vector<24x8x28xf32> to vector<192x28xf32>
    %c3_19 = arith.constant 3 : index
    %c0_20 = arith.constant 0 : index
    %c0_21 = arith.constant 0 : index
    %19 = vector.load %arg2[%c3_19, %c0_20, %c0_21] : memref<5x28x256xf32, #tpu.memory_space<vmem>>, vector<1x28x256xf32>
    %20 = vector.shape_cast %19 : vector<1x28x256xf32> to vector<28x256xf32>
    %cst_22 = arith.constant dense<0.000000e+00> : vector<192x256xf32>
    %21 = tpu.matmul %18, %20, %cst_22 {dimension_numbers = #tpu.dot_dimension_numbers<[1], [0], [0], [1], [0, 0, 1, 1], [], []>} : vector<192x28xf32>, vector<28x256xf32>, vector<192x256xf32> -> vector<192x256xf32>
    %22 = arith.addf %16, %21 : vector<192x256xf32>
    %c4 = arith.constant 4 : index
    %c0_23 = arith.constant 0 : index
    %c0_24 = arith.constant 0 : index
    %23 = vector.load %arg1[%c4, %c0_23, %c0_24] : memref<28x8x28xf32, #tpu.memory_space<vmem>>, vector<24x8x28xf32>
    %24 = vector.shape_cast %23 : vector<24x8x28xf32> to vector<192x28xf32>
    %c4_25 = arith.constant 4 : index
    %c0_26 = arith.constant 0 : index
    %c0_27 = arith.constant 0 : index
    %25 = vector.load %arg2[%c4_25, %c0_26, %c0_27] : memref<5x28x256xf32, #tpu.memory_space<vmem>>, vector<1x28x256xf32>
    %26 = vector.shape_cast %25 : vector<1x28x256xf32> to vector<28x256xf32>
    %cst_28 = arith.constant dense<0.000000e+00> : vector<192x256xf32>
    %27 = tpu.matmul %24, %26, %cst_28 {dimension_numbers = #tpu.dot_dimension_numbers<[1], [0], [0], [1], [0, 0, 1, 1], [], []>} : vector<192x28xf32>, vector<28x256xf32>, vector<192x256xf32> -> vector<192x256xf32>
    %28 = arith.addf %22, %27 : vector<192x256xf32>
    %29 = vector.extract_strided_slice %28 {offsets = [0, 0], sizes = [192, 128], strides = [1, 1]} : vector<192x256xf32> to vector<192x128xf32>
    %30 = vector.extract_strided_slice %28 {offsets = [0, 128], sizes = [192, 128], strides = [1, 1]} : vector<192x256xf32> to vector<192x128xf32>
    %31 = arith.maximumf %29, %30 : vector<192x128xf32>
    %32 = vector.shape_cast %31 : vector<192x128xf32> to vector<24x8x128xf32>
    %c0_29 = arith.constant 0 : index
    %c0_30 = arith.constant 0 : index
    %c0_31 = arith.constant 0 : index
    %33 = vector.load %arg11[%c0_29, %c0_30, %c0_31] : memref<24x8x128xf32, #tpu.memory_space<vmem>>, vector<24x8x128xf32>
    tpu.vector_store %arg11[%c0_29, %c0_30, %c0_31], %32 {strides = array<i32>} : memref<24x8x128xf32, #tpu.memory_space<vmem>>, vector<24x8x128xf32>,
    %c0_32 = arith.constant 0 : index
    %c0_33 = arith.constant 0 : index
    %34 = vector.load %arg3[%c0_32, %c0_33] : memref<1x128xf32, #tpu.memory_space<vmem>>, vector<1x128xf32>
    %c0_34 = arith.constant 0 : index
    %c0_35 = arith.constant 0 : index
    %c0_36 = arith.constant 0 : index
    %35 = vector.load %arg11[%c0_34, %c0_35, %c0_36] : memref<24x8x128xf32, #tpu.memory_space<vmem>>, vector<1x8x128xf32>
    %36 = vector.shape_cast %35 : vector<1x8x128xf32> to vector<8x128xf32>
    %c1_37 = arith.constant 1 : index
    %c0_38 = arith.constant 0 : index
    %c0_39 = arith.constant 0 : index
    %37 = vector.load %arg11[%c1_37, %c0_38, %c0_39] : memref<24x8x128xf32, #tpu.memory_space<vmem>>, vector<1x8x128xf32>
    %38 = vector.shape_cast %37 : vector<1x8x128xf32> to vector<8x128xf32>
    %39 = arith.maximumf %36, %38 : vector<8x128xf32>
    %40 = vector.broadcast %34 : vector<1x128xf32> to vector<8x128xf32>
    %41 = arith.addf %39, %40 : vector<8x128xf32>
    %cst_40 = arith.constant 0.000000e+00 : f32
    %42 = vector.broadcast %cst_40 : f32 to vector<8x128xf32>
    %43 = arith.maximumf %41, %42 : vector<8x128xf32>
    %c0_41 = arith.constant 0 : index
    %c0_42 = arith.constant 0 : index
    %c0_43 = arith.constant 0 : index
    %44 = vector.load %arg12[%c0_41, %c0_42, %c0_43] : memref<12x8x128xf32, #tpu.memory_space<vmem>>, vector<1x8x128xf32>
    %45 = vector.shape_cast %44 : vector<1x8x128xf32> to vector<8x128xf32>
    %46 = vector.shape_cast %43 : vector<8x128xf32> to vector<1x8x128xf32>
    tpu.vector_store %arg12[%c0_41, %c0_42, %c0_43], %46 {strides = array<i32>} : memref<12x8x128xf32, #tpu.memory_space<vmem>>, vector<1x8x128xf32>,
    %c2_44 = arith.constant 2 : index
    %c0_45 = arith.constant 0 : index
    %c0_46 = arith.constant 0 : index
    %47 = vector.load %arg11[%c2_44, %c0_45, %c0_46] : memref<24x8x128xf32, #tpu.memory_space<vmem>>, vector<1x8x128xf32>
    %48 = vector.shape_cast %47 : vector<1x8x128xf32> to vector<8x128xf32>
    %c3_47 = arith.constant 3 : index
    %c0_48 = arith.constant 0 : index
    %c0_49 = arith.constant 0 : index
    %49 = vector.load %arg11[%c3_47, %c0_48, %c0_49] : memref<24x8x128xf32, #tpu.memory_space<vmem>>, vector<1x8x128xf32>
    %50 = vector.shape_cast %49 : vector<1x8x128xf32> to vector<8x128xf32>
    %51 = arith.maximumf %48, %50 : vector<8x128xf32>
    %52 = vector.broadcast %34 : vector<1x128xf32> to vector<8x128xf32>
    %53 = arith.addf %51, %52 : vector<8x128xf32>
    %cst_50 = arith.constant 0.000000e+00 : f32
    %54 = vector.broadcast %cst_50 : f32 to vector<8x128xf32>
    %55 = arith.maximumf %53, %54 : vector<8x128xf32>
    %c1_51 = arith.constant 1 : index
    %c0_52 = arith.constant 0 : index
    %c0_53 = arith.constant 0 : index
    %56 = vector.load %arg12[%c1_51, %c0_52, %c0_53] : memref<12x8x128xf32, #tpu.memory_space<vmem>>, vector<1x8x128xf32>
    %57 = vector.shape_cast %56 : vector<1x8x128xf32> to vector<8x128xf32>
    %58 = vector.shape_cast %55 : vector<8x128xf32> to vector<1x8x128xf32>
    tpu.vector_store %arg12[%c1_51, %c0_52, %c0_53], %58 {strides = array<i32>} : memref<12x8x128xf32, #tpu.memory_space<vmem>>, vector<1x8x128xf32>,
    %c4_54 = arith.constant 4 : index
    %c0_55 = arith.constant 0 : index
    %c0_56 = arith.constant 0 : index
    %59 = vector.load %arg11[%c4_54, %c0_55, %c0_56] : memref<24x8x128xf32, #tpu.memory_space<vmem>>, vector<1x8x128xf32>
    %60 = vector.shape_cast %59 : vector<1x8x128xf32> to vector<8x128xf32>
    %c5 = arith.constant 5 : index
    %c0_57 = arith.constant 0 : index
    %c0_58 = arith.constant 0 : index
    %61 = vector.load %arg11[%c5, %c0_57, %c0_58] : memref<24x8x128xf32, #tpu.memory_space<vmem>>, vector<1x8x128xf32>
    %62 = vector.shape_cast %61 : vector<1x8x128xf32> to vector<8x128xf32>
    %63 = arith.maximumf %60, %62 : vector<8x128xf32>
    %64 = vector.broadcast %34 : vector<1x128xf32> to vector<8x128xf32>
    %65 = arith.addf %63, %64 : vector<8x128xf32>
    %cst_59 = arith.constant 0.000000e+00 : f32
    %66 = vector.broadcast %cst_59 : f32 to vector<8x128xf32>
    %67 = arith.maximumf %65, %66 : vector<8x128xf32>
    %c2_60 = arith.constant 2 : index
    %c0_61 = arith.constant 0 : index
    %c0_62 = arith.constant 0 : index
    %68 = vector.load %arg12[%c2_60, %c0_61, %c0_62] : memref<12x8x128xf32, #tpu.memory_space<vmem>>, vector<1x8x128xf32>
    %69 = vector.shape_cast %68 : vector<1x8x128xf32> to vector<8x128xf32>
    %70 = vector.shape_cast %67 : vector<8x128xf32> to vector<1x8x128xf32>
    tpu.vector_store %arg12[%c2_60, %c0_61, %c0_62], %70 {strides = array<i32>} : memref<12x8x128xf32, #tpu.memory_space<vmem>>, vector<1x8x128xf32>,
    %c6 = arith.constant 6 : index
    %c0_63 = arith.constant 0 : index
    %c0_64 = arith.constant 0 : index
    %71 = vector.load %arg11[%c6, %c0_63, %c0_64] : memref<24x8x128xf32, #tpu.memory_space<vmem>>, vector<1x8x128xf32>
    %72 = vector.shape_cast %71 : vector<1x8x128xf32> to vector<8x128xf32>
    %c7 = arith.constant 7 : index
    %c0_65 = arith.constant 0 : index
    %c0_66 = arith.constant 0 : index
    %73 = vector.load %arg11[%c7, %c0_65, %c0_66] : memref<24x8x128xf32, #tpu.memory_space<vmem>>, vector<1x8x128xf32>
    %74 = vector.shape_cast %73 : vector<1x8x128xf32> to vector<8x128xf32>
    %75 = arith.maximumf %72, %74 : vector<8x128xf32>
    %76 = vector.broadcast %34 : vector<1x128xf32> to vector<8x128xf32>
    %77 = arith.addf %75, %76 : vector<8x128xf32>
    %cst_67 = arith.constant 0.000000e+00 : f32
    %78 = vector.broadcast %cst_67 : f32 to vector<8x128xf32>
    %79 = arith.maximumf %77, %78 : vector<8x128xf32>
    %c3_68 = arith.constant 3 : index
    %c0_69 = arith.constant 0 : index
    %c0_70 = arith.constant 0 : index
    %80 = vector.load %arg12[%c3_68, %c0_69, %c0_70] : memref<12x8x128xf32, #tpu.memory_space<vmem>>, vector<1x8x128xf32>
    %81 = vector.shape_cast %80 : vector<1x8x128xf32> to vector<8x128xf32>
    %82 = vector.shape_cast %79 : vector<8x128xf32> to vector<1x8x128xf32>
    tpu.vector_store %arg12[%c3_68, %c0_69, %c0_70], %82 {strides = array<i32>} : memref<12x8x128xf32, #tpu.memory_space<vmem>>, vector<1x8x128xf32>,
    %c8 = arith.constant 8 : index
    %c0_71 = arith.constant 0 : index
    %c0_72 = arith.constant 0 : index
    %83 = vector.load %arg11[%c8, %c0_71, %c0_72] : memref<24x8x128xf32, #tpu.memory_space<vmem>>, vector<1x8x128xf32>
    %84 = vector.shape_cast %83 : vector<1x8x128xf32> to vector<8x128xf32>
    %c9 = arith.constant 9 : index
    %c0_73 = arith.constant 0 : index
    %c0_74 = arith.constant 0 : index
    %85 = vector.load %arg11[%c9, %c0_73, %c0_74] : memref<24x8x128xf32, #tpu.memory_space<vmem>>, vector<1x8x128xf32>
    %86 = vector.shape_cast %85 : vector<1x8x128xf32> to vector<8x128xf32>
    %87 = arith.maximumf %84, %86 : vector<8x128xf32>
    %88 = vector.broadcast %34 : vector<1x128xf32> to vector<8x128xf32>
    %89 = arith.addf %87, %88 : vector<8x128xf32>
    %cst_75 = arith.constant 0.000000e+00 : f32
    %90 = vector.broadcast %cst_75 : f32 to vector<8x128xf32>
    %91 = arith.maximumf %89, %90 : vector<8x128xf32>
    %c4_76 = arith.constant 4 : index
    %c0_77 = arith.constant 0 : index
    %c0_78 = arith.constant 0 : index
    %92 = vector.load %arg12[%c4_76, %c0_77, %c0_78] : memref<12x8x128xf32, #tpu.memory_space<vmem>>, vector<1x8x128xf32>
    %93 = vector.shape_cast %92 : vector<1x8x128xf32> to vector<8x128xf32>
    %94 = vector.shape_cast %91 : vector<8x128xf32> to vector<1x8x128xf32>
    tpu.vector_store %arg12[%c4_76, %c0_77, %c0_78], %94 {strides = array<i32>} : memref<12x8x128xf32, #tpu.memory_space<vmem>>, vector<1x8x128xf32>,
    %c10 = arith.constant 10 : index
    %c0_79 = arith.constant 0 : index
    %c0_80 = arith.constant 0 : index
    %95 = vector.load %arg11[%c10, %c0_79, %c0_80] : memref<24x8x128xf32, #tpu.memory_space<vmem>>, vector<1x8x128xf32>
    %96 = vector.shape_cast %95 : vector<1x8x128xf32> to vector<8x128xf32>
    %c11 = arith.constant 11 : index
    %c0_81 = arith.constant 0 : index
    %c0_82 = arith.constant 0 : index
    %97 = vector.load %arg11[%c11, %c0_81, %c0_82] : memref<24x8x128xf32, #tpu.memory_space<vmem>>, vector<1x8x128xf32>
    %98 = vector.shape_cast %97 : vector<1x8x128xf32> to vector<8x128xf32>
    %99 = arith.maximumf %96, %98 : vector<8x128xf32>
    %100 = vector.broadcast %34 : vector<1x128xf32> to vector<8x128xf32>
    %101 = arith.addf %99, %100 : vector<8x128xf32>
    %cst_83 = arith.constant 0.000000e+00 : f32
    %102 = vector.broadcast %cst_83 : f32 to vector<8x128xf32>
    %103 = arith.maximumf %101, %102 : vector<8x128xf32>
    %c5_84 = arith.constant 5 : index
    %c0_85 = arith.constant 0 : index
    %c0_86 = arith.constant 0 : index
    %104 = vector.load %arg12[%c5_84, %c0_85, %c0_86] : memref<12x8x128xf32, #tpu.memory_space<vmem>>, vector<1x8x128xf32>
    %105 = vector.shape_cast %104 : vector<1x8x128xf32> to vector<8x128xf32>
    %106 = vector.shape_cast %103 : vector<8x128xf32> to vector<1x8x128xf32>
    tpu.vector_store %arg12[%c5_84, %c0_85, %c0_86], %106 {strides = array<i32>} : memref<12x8x128xf32, #tpu.memory_space<vmem>>, vector<1x8x128xf32>,
    %c12 = arith.constant 12 : index
    %c0_87 = arith.constant 0 : index
    %c0_88 = arith.constant 0 : index
    %107 = vector.load %arg11[%c12, %c0_87, %c0_88] : memref<24x8x128xf32, #tpu.memory_space<vmem>>, vector<1x8x128xf32>
    %108 = vector.shape_cast %107 : vector<1x8x128xf32> to vector<8x128xf32>
    %c13 = arith.constant 13 : index
    %c0_89 = arith.constant 0 : index
    %c0_90 = arith.constant 0 : index
    %109 = vector.load %arg11[%c13, %c0_89, %c0_90] : memref<24x8x128xf32, #tpu.memory_space<vmem>>, vector<1x8x128xf32>
    %110 = vector.shape_cast %109 : vector<1x8x128xf32> to vector<8x128xf32>
    %111 = arith.maximumf %108, %110 : vector<8x128xf32>
    %112 = vector.broadcast %34 : vector<1x128xf32> to vector<8x128xf32>
    %113 = arith.addf %111, %112 : vector<8x128xf32>
    %cst_91 = arith.constant 0.000000e+00 : f32
    %114 = vector.broadcast %cst_91 : f32 to vector<8x128xf32>
    %115 = arith.maximumf %113, %114 : vector<8x128xf32>
    %c6_92 = arith.constant 6 : index
    %c0_93 = arith.constant 0 : index
    %c0_94 = arith.constant 0 : index
    %116 = vector.load %arg12[%c6_92, %c0_93, %c0_94] : memref<12x8x128xf32, #tpu.memory_space<vmem>>, vector<1x8x128xf32>
    %117 = vector.shape_cast %116 : vector<1x8x128xf32> to vector<8x128xf32>
    %118 = vector.shape_cast %115 : vector<8x128xf32> to vector<1x8x128xf32>
    tpu.vector_store %arg12[%c6_92, %c0_93, %c0_94], %118 {strides = array<i32>} : memref<12x8x128xf32, #tpu.memory_space<vmem>>, vector<1x8x128xf32>,
    %c14 = arith.constant 14 : index
    %c0_95 = arith.constant 0 : index
    %c0_96 = arith.constant 0 : index
    %119 = vector.load %arg11[%c14, %c0_95, %c0_96] : memref<24x8x128xf32, #tpu.memory_space<vmem>>, vector<1x8x128xf32>
    %120 = vector.shape_cast %119 : vector<1x8x128xf32> to vector<8x128xf32>
    %c15 = arith.constant 15 : index
    %c0_97 = arith.constant 0 : index
    %c0_98 = arith.constant 0 : index
    %121 = vector.load %arg11[%c15, %c0_97, %c0_98] : memref<24x8x128xf32, #tpu.memory_space<vmem>>, vector<1x8x128xf32>
    %122 = vector.shape_cast %121 : vector<1x8x128xf32> to vector<8x128xf32>
    %123 = arith.maximumf %120, %122 : vector<8x128xf32>
    %124 = vector.broadcast %34 : vector<1x128xf32> to vector<8x128xf32>
    %125 = arith.addf %123, %124 : vector<8x128xf32>
    %cst_99 = arith.constant 0.000000e+00 : f32
    %126 = vector.broadcast %cst_99 : f32 to vector<8x128xf32>
    %127 = arith.maximumf %125, %126 : vector<8x128xf32>
    %c7_100 = arith.constant 7 : index
    %c0_101 = arith.constant 0 : index
    %c0_102 = arith.constant 0 : index
    %128 = vector.load %arg12[%c7_100, %c0_101, %c0_102] : memref<12x8x128xf32, #tpu.memory_space<vmem>>, vector<1x8x128xf32>
    %129 = vector.shape_cast %128 : vector<1x8x128xf32> to vector<8x128xf32>
    %130 = vector.shape_cast %127 : vector<8x128xf32> to vector<1x8x128xf32>
    tpu.vector_store %arg12[%c7_100, %c0_101, %c0_102], %130 {strides = array<i32>} : memref<12x8x128xf32, #tpu.memory_space<vmem>>, vector<1x8x128xf32>,
    %c16 = arith.constant 16 : index
    %c0_103 = arith.constant 0 : index
    %c0_104 = arith.constant 0 : index
    %131 = vector.load %arg11[%c16, %c0_103, %c0_104] : memref<24x8x128xf32, #tpu.memory_space<vmem>>, vector<1x8x128xf32>
    %132 = vector.shape_cast %131 : vector<1x8x128xf32> to vector<8x128xf32>
    %c17 = arith.constant 17 : index
    %c0_105 = arith.constant 0 : index
    %c0_106 = arith.constant 0 : index
    %133 = vector.load %arg11[%c17, %c0_105, %c0_106] : memref<24x8x128xf32, #tpu.memory_space<vmem>>, vector<1x8x128xf32>
    %134 = vector.shape_cast %133 : vector<1x8x128xf32> to vector<8x128xf32>
    %135 = arith.maximumf %132, %134 : vector<8x128xf32>
    %136 = vector.broadcast %34 : vector<1x128xf32> to vector<8x128xf32>
    %137 = arith.addf %135, %136 : vector<8x128xf32>
    %cst_107 = arith.constant 0.000000e+00 : f32
    %138 = vector.broadcast %cst_107 : f32 to vector<8x128xf32>
    %139 = arith.maximumf %137, %138 : vector<8x128xf32>
    %c8_108 = arith.constant 8 : index
    %c0_109 = arith.constant 0 : index
    %c0_110 = arith.constant 0 : index
    %140 = vector.load %arg12[%c8_108, %c0_109, %c0_110] : memref<12x8x128xf32, #tpu.memory_space<vmem>>, vector<1x8x128xf32>
    %141 = vector.shape_cast %140 : vector<1x8x128xf32> to vector<8x128xf32>
    %142 = vector.shape_cast %139 : vector<8x128xf32> to vector<1x8x128xf32>
    tpu.vector_store %arg12[%c8_108, %c0_109, %c0_110], %142 {strides = array<i32>} : memref<12x8x128xf32, #tpu.memory_space<vmem>>, vector<1x8x128xf32>,
    %c18 = arith.constant 18 : index
    %c0_111 = arith.constant 0 : index
    %c0_112 = arith.constant 0 : index
    %143 = vector.load %arg11[%c18, %c0_111, %c0_112] : memref<24x8x128xf32, #tpu.memory_space<vmem>>, vector<1x8x128xf32>
    %144 = vector.shape_cast %143 : vector<1x8x128xf32> to vector<8x128xf32>
    %c19 = arith.constant 19 : index
    %c0_113 = arith.constant 0 : index
    %c0_114 = arith.constant 0 : index
    %145 = vector.load %arg11[%c19, %c0_113, %c0_114] : memref<24x8x128xf32, #tpu.memory_space<vmem>>, vector<1x8x128xf32>
    %146 = vector.shape_cast %145 : vector<1x8x128xf32> to vector<8x128xf32>
    %147 = arith.maximumf %144, %146 : vector<8x128xf32>
    %148 = vector.broadcast %34 : vector<1x128xf32> to vector<8x128xf32>
    %149 = arith.addf %147, %148 : vector<8x128xf32>
    %cst_115 = arith.constant 0.000000e+00 : f32
    %150 = vector.broadcast %cst_115 : f32 to vector<8x128xf32>
    %151 = arith.maximumf %149, %150 : vector<8x128xf32>
    %c9_116 = arith.constant 9 : index
    %c0_117 = arith.constant 0 : index
    %c0_118 = arith.constant 0 : index
    %152 = vector.load %arg12[%c9_116, %c0_117, %c0_118] : memref<12x8x128xf32, #tpu.memory_space<vmem>>, vector<1x8x128xf32>
    %153 = vector.shape_cast %152 : vector<1x8x128xf32> to vector<8x128xf32>
    %154 = vector.shape_cast %151 : vector<8x128xf32> to vector<1x8x128xf32>
    tpu.vector_store %arg12[%c9_116, %c0_117, %c0_118], %154 {strides = array<i32>} : memref<12x8x128xf32, #tpu.memory_space<vmem>>, vector<1x8x128xf32>,
    %c20 = arith.constant 20 : index
    %c0_119 = arith.constant 0 : index
    %c0_120 = arith.constant 0 : index
    %155 = vector.load %arg11[%c20, %c0_119, %c0_120] : memref<24x8x128xf32, #tpu.memory_space<vmem>>, vector<1x8x128xf32>
    %156 = vector.shape_cast %155 : vector<1x8x128xf32> to vector<8x128xf32>
    %c21 = arith.constant 21 : index
    %c0_121 = arith.constant 0 : index
    %c0_122 = arith.constant 0 : index
    %157 = vector.load %arg11[%c21, %c0_121, %c0_122] : memref<24x8x128xf32, #tpu.memory_space<vmem>>, vector<1x8x128xf32>
    %158 = vector.shape_cast %157 : vector<1x8x128xf32> to vector<8x128xf32>
    %159 = arith.maximumf %156, %158 : vector<8x128xf32>
    %160 = vector.broadcast %34 : vector<1x128xf32> to vector<8x128xf32>
    %161 = arith.addf %159, %160 : vector<8x128xf32>
    %cst_123 = arith.constant 0.000000e+00 : f32
    %162 = vector.broadcast %cst_123 : f32 to vector<8x128xf32>
    %163 = arith.maximumf %161, %162 : vector<8x128xf32>
    %c10_124 = arith.constant 10 : index
    %c0_125 = arith.constant 0 : index
    %c0_126 = arith.constant 0 : index
    %164 = vector.load %arg12[%c10_124, %c0_125, %c0_126] : memref<12x8x128xf32, #tpu.memory_space<vmem>>, vector<1x8x128xf32>
    %165 = vector.shape_cast %164 : vector<1x8x128xf32> to vector<8x128xf32>
    %166 = vector.shape_cast %163 : vector<8x128xf32> to vector<1x8x128xf32>
    tpu.vector_store %arg12[%c10_124, %c0_125, %c0_126], %166 {strides = array<i32>} : memref<12x8x128xf32, #tpu.memory_space<vmem>>, vector<1x8x128xf32>,
    %c22 = arith.constant 22 : index
    %c0_127 = arith.constant 0 : index
    %c0_128 = arith.constant 0 : index
    %167 = vector.load %arg11[%c22, %c0_127, %c0_128] : memref<24x8x128xf32, #tpu.memory_space<vmem>>, vector<1x8x128xf32>
    %168 = vector.shape_cast %167 : vector<1x8x128xf32> to vector<8x128xf32>
    %c23 = arith.constant 23 : index
    %c0_129 = arith.constant 0 : index
    %c0_130 = arith.constant 0 : index
    %169 = vector.load %arg11[%c23, %c0_129, %c0_130] : memref<24x8x128xf32, #tpu.memory_space<vmem>>, vector<1x8x128xf32>
    %170 = vector.shape_cast %169 : vector<1x8x128xf32> to vector<8x128xf32>
    %171 = arith.maximumf %168, %170 : vector<8x128xf32>
    %172 = vector.broadcast %34 : vector<1x128xf32> to vector<8x128xf32>
    %173 = arith.addf %171, %172 : vector<8x128xf32>
    %cst_131 = arith.constant 0.000000e+00 : f32
    %174 = vector.broadcast %cst_131 : f32 to vector<8x128xf32>
    %175 = arith.maximumf %173, %174 : vector<8x128xf32>
    %c11_132 = arith.constant 11 : index
    %c0_133 = arith.constant 0 : index
    %c0_134 = arith.constant 0 : index
    %176 = vector.load %arg12[%c11_132, %c0_133, %c0_134] : memref<12x8x128xf32, #tpu.memory_space<vmem>>, vector<1x8x128xf32>
    %177 = vector.shape_cast %176 : vector<1x8x128xf32> to vector<8x128xf32>
    %178 = vector.shape_cast %175 : vector<8x128xf32> to vector<1x8x128xf32>
    tpu.vector_store %arg12[%c11_132, %c0_133, %c0_134], %178 {strides = array<i32>} : memref<12x8x128xf32, #tpu.memory_space<vmem>>, vector<1x8x128xf32>,
    %c0_135 = arith.constant 0 : index
    %c0_136 = arith.constant 0 : index
    %c0_137 = arith.constant 0 : index
    %179 = vector.load %arg12[%c0_135, %c0_136, %c0_137] : memref<12x8x128xf32, #tpu.memory_space<vmem>>, vector<8x8x128xf32>
    %180 = vector.shape_cast %179 : vector<8x8x128xf32> to vector<64x128xf32>
    %c0_138 = arith.constant 0 : index
    %c0_139 = arith.constant 0 : index
    %c0_140 = arith.constant 0 : index
    %181 = vector.load %arg4[%c0_138, %c0_139, %c0_140] : memref<5x128x256xf32, #tpu.memory_space<vmem>>, vector<1x128x256xf32>
    %182 = vector.shape_cast %181 : vector<1x128x256xf32> to vector<128x256xf32>
    %cst_141 = arith.constant dense<0.000000e+00> : vector<64x256xf32>
    %183 = tpu.matmul %180, %182, %cst_141 {dimension_numbers = #tpu.dot_dimension_numbers<[1], [0], [0], [1], [0, 0, 1, 1], [], []>} : vector<64x128xf32>, vector<128x256xf32>, vector<64x256xf32> -> vector<64x256xf32>
    %c1_142 = arith.constant 1 : index
    %c0_143 = arith.constant 0 : index
    %c0_144 = arith.constant 0 : index
    %184 = vector.load %arg12[%c1_142, %c0_143, %c0_144] : memref<12x8x128xf32, #tpu.memory_space<vmem>>, vector<8x8x128xf32>
    %185 = vector.shape_cast %184 : vector<8x8x128xf32> to vector<64x128xf32>
    %c1_145 = arith.constant 1 : index
    %c0_146 = arith.constant 0 : index
    %c0_147 = arith.constant 0 : index
    %186 = vector.load %arg4[%c1_145, %c0_146, %c0_147] : memref<5x128x256xf32, #tpu.memory_space<vmem>>, vector<1x128x256xf32>
    %187 = vector.shape_cast %186 : vector<1x128x256xf32> to vector<128x256xf32>
    %cst_148 = arith.constant dense<0.000000e+00> : vector<64x256xf32>
    %188 = tpu.matmul %185, %187, %cst_148 {dimension_numbers = #tpu.dot_dimension_numbers<[1], [0], [0], [1], [0, 0, 1, 1], [], []>} : vector<64x128xf32>, vector<128x256xf32>, vector<64x256xf32> -> vector<64x256xf32>
    %189 = arith.addf %183, %188 : vector<64x256xf32>
    %c2_149 = arith.constant 2 : index
    %c0_150 = arith.constant 0 : index
    %c0_151 = arith.constant 0 : index
    %190 = vector.load %arg12[%c2_149, %c0_150, %c0_151] : memref<12x8x128xf32, #tpu.memory_space<vmem>>, vector<8x8x128xf32>
    %191 = vector.shape_cast %190 : vector<8x8x128xf32> to vector<64x128xf32>
    %c2_152 = arith.constant 2 : index
    %c0_153 = arith.constant 0 : index
    %c0_154 = arith.constant 0 : index
    %192 = vector.load %arg4[%c2_152, %c0_153, %c0_154] : memref<5x128x256xf32, #tpu.memory_space<vmem>>, vector<1x128x256xf32>
    %193 = vector.shape_cast %192 : vector<1x128x256xf32> to vector<128x256xf32>
    %cst_155 = arith.constant dense<0.000000e+00> : vector<64x256xf32>
    %194 = tpu.matmul %191, %193, %cst_155 {dimension_numbers = #tpu.dot_dimension_numbers<[1], [0], [0], [1], [0, 0, 1, 1], [], []>} : vector<64x128xf32>, vector<128x256xf32>, vector<64x256xf32> -> vector<64x256xf32>
    %195 = arith.addf %189, %194 : vector<64x256xf32>
    %c3_156 = arith.constant 3 : index
    %c0_157 = arith.constant 0 : index
    %c0_158 = arith.constant 0 : index
    %196 = vector.load %arg12[%c3_156, %c0_157, %c0_158] : memref<12x8x128xf32, #tpu.memory_space<vmem>>, vector<8x8x128xf32>
    %197 = vector.shape_cast %196 : vector<8x8x128xf32> to vector<64x128xf32>
    %c3_159 = arith.constant 3 : index
    %c0_160 = arith.constant 0 : index
    %c0_161 = arith.constant 0 : index
    %198 = vector.load %arg4[%c3_159, %c0_160, %c0_161] : memref<5x128x256xf32, #tpu.memory_space<vmem>>, vector<1x128x256xf32>
    %199 = vector.shape_cast %198 : vector<1x128x256xf32> to vector<128x256xf32>
    %cst_162 = arith.constant dense<0.000000e+00> : vector<64x256xf32>
    %200 = tpu.matmul %197, %199, %cst_162 {dimension_numbers = #tpu.dot_dimension_numbers<[1], [0], [0], [1], [0, 0, 1, 1], [], []>} : vector<64x128xf32>, vector<128x256xf32>, vector<64x256xf32> -> vector<64x256xf32>
    %201 = arith.addf %195, %200 : vector<64x256xf32>
    %c4_163 = arith.constant 4 : index
    %c0_164 = arith.constant 0 : index
    %c0_165 = arith.constant 0 : index
    %202 = vector.load %arg12[%c4_163, %c0_164, %c0_165] : memref<12x8x128xf32, #tpu.memory_space<vmem>>, vector<8x8x128xf32>
    %203 = vector.shape_cast %202 : vector<8x8x128xf32> to vector<64x128xf32>
    %c4_166 = arith.constant 4 : index
    %c0_167 = arith.constant 0 : index
    %c0_168 = arith.constant 0 : index
    %204 = vector.load %arg4[%c4_166, %c0_167, %c0_168] : memref<5x128x256xf32, #tpu.memory_space<vmem>>, vector<1x128x256xf32>
    %205 = vector.shape_cast %204 : vector<1x128x256xf32> to vector<128x256xf32>
    %cst_169 = arith.constant dense<0.000000e+00> : vector<64x256xf32>
    %206 = tpu.matmul %203, %205, %cst_169 {dimension_numbers = #tpu.dot_dimension_numbers<[1], [0], [0], [1], [0, 0, 1, 1], [], []>} : vector<64x128xf32>, vector<128x256xf32>, vector<64x256xf32> -> vector<64x256xf32>
    %207 = arith.addf %201, %206 : vector<64x256xf32>
    %208 = vector.extract_strided_slice %207 {offsets = [0, 0], sizes = [64, 128], strides = [1, 1]} : vector<64x256xf32> to vector<64x128xf32>
    %209 = vector.extract_strided_slice %207 {offsets = [0, 128], sizes = [64, 128], strides = [1, 1]} : vector<64x256xf32> to vector<64x128xf32>
    %210 = arith.maximumf %208, %209 : vector<64x128xf32>
    %211 = vector.shape_cast %210 : vector<64x128xf32> to vector<8x8x128xf32>
    %c0_170 = arith.constant 0 : index
    %c0_171 = arith.constant 0 : index
    %c0_172 = arith.constant 0 : index
    %212 = vector.load %arg13[%c0_170, %c0_171, %c0_172] : memref<8x8x128xf32, #tpu.memory_space<vmem>>, vector<8x8x128xf32>
    tpu.vector_store %arg13[%c0_170, %c0_171, %c0_172], %211 {strides = array<i32>} : memref<8x8x128xf32, #tpu.memory_space<vmem>>, vector<8x8x128xf32>,
    %c0_173 = arith.constant 0 : index
    %c0_174 = arith.constant 0 : index
    %213 = vector.load %arg5[%c0_173, %c0_174] : memref<1x128xf32, #tpu.memory_space<vmem>>, vector<1x128xf32>
    %c0_175 = arith.constant 0 : index
    %c0_176 = arith.constant 0 : index
    %c0_177 = arith.constant 0 : index
    %214 = vector.load %arg13[%c0_175, %c0_176, %c0_177] : memref<8x8x128xf32, #tpu.memory_space<vmem>>, vector<1x8x128xf32>
    %215 = vector.shape_cast %214 : vector<1x8x128xf32> to vector<8x128xf32>
    %c1_178 = arith.constant 1 : index
    %c0_179 = arith.constant 0 : index
    %c0_180 = arith.constant 0 : index
    %216 = vector.load %arg13[%c1_178, %c0_179, %c0_180] : memref<8x8x128xf32, #tpu.memory_space<vmem>>, vector<1x8x128xf32>
    %217 = vector.shape_cast %216 : vector<1x8x128xf32> to vector<8x128xf32>
    %218 = arith.maximumf %215, %217 : vector<8x128xf32>
    %219 = vector.broadcast %213 : vector<1x128xf32> to vector<8x128xf32>
    %220 = arith.addf %218, %219 : vector<8x128xf32>
    %cst_181 = arith.constant 0.000000e+00 : f32
    %221 = vector.broadcast %cst_181 : f32 to vector<8x128xf32>
    %222 = arith.maximumf %220, %221 : vector<8x128xf32>
    %c0_182 = arith.constant 0 : index
    %c0_183 = arith.constant 0 : index
    %223 = vector.load %arg14[%c0_182, %c0_183] : memref<8x512xf32, #tpu.memory_space<vmem>>, vector<8x128xf32>
    tpu.vector_store %arg14[%c0_182, %c0_183], %222 {strides = array<i32>} : memref<8x512xf32, #tpu.memory_space<vmem>>, vector<8x128xf32>,
    %c2_184 = arith.constant 2 : index
    %c0_185 = arith.constant 0 : index
    %c0_186 = arith.constant 0 : index
    %224 = vector.load %arg13[%c2_184, %c0_185, %c0_186] : memref<8x8x128xf32, #tpu.memory_space<vmem>>, vector<1x8x128xf32>
    %225 = vector.shape_cast %224 : vector<1x8x128xf32> to vector<8x128xf32>
    %c3_187 = arith.constant 3 : index
    %c0_188 = arith.constant 0 : index
    %c0_189 = arith.constant 0 : index
    %226 = vector.load %arg13[%c3_187, %c0_188, %c0_189] : memref<8x8x128xf32, #tpu.memory_space<vmem>>, vector<1x8x128xf32>
    %227 = vector.shape_cast %226 : vector<1x8x128xf32> to vector<8x128xf32>
    %228 = arith.maximumf %225, %227 : vector<8x128xf32>
    %229 = vector.broadcast %213 : vector<1x128xf32> to vector<8x128xf32>
    %230 = arith.addf %228, %229 : vector<8x128xf32>
    %cst_190 = arith.constant 0.000000e+00 : f32
    %231 = vector.broadcast %cst_190 : f32 to vector<8x128xf32>
    %232 = arith.maximumf %230, %231 : vector<8x128xf32>
    %c0_191 = arith.constant 0 : index
    %c128 = arith.constant 128 : index
    %233 = vector.load %arg14[%c0_191, %c128] : memref<8x512xf32, #tpu.memory_space<vmem>>, vector<8x128xf32>
    tpu.vector_store %arg14[%c0_191, %c128], %232 {strides = array<i32>} : memref<8x512xf32, #tpu.memory_space<vmem>>, vector<8x128xf32>,
    %c4_192 = arith.constant 4 : index
    %c0_193 = arith.constant 0 : index
    %c0_194 = arith.constant 0 : index
    %234 = vector.load %arg13[%c4_192, %c0_193, %c0_194] : memref<8x8x128xf32, #tpu.memory_space<vmem>>, vector<1x8x128xf32>
    %235 = vector.shape_cast %234 : vector<1x8x128xf32> to vector<8x128xf32>
    %c5_195 = arith.constant 5 : index
    %c0_196 = arith.constant 0 : index
    %c0_197 = arith.constant 0 : index
    %236 = vector.load %arg13[%c5_195, %c0_196, %c0_197] : memref<8x8x128xf32, #tpu.memory_space<vmem>>, vector<1x8x128xf32>
    %237 = vector.shape_cast %236 : vector<1x8x128xf32> to vector<8x128xf32>
    %238 = arith.maximumf %235, %237 : vector<8x128xf32>
    %239 = vector.broadcast %213 : vector<1x128xf32> to vector<8x128xf32>
    %240 = arith.addf %238, %239 : vector<8x128xf32>
    %cst_198 = arith.constant 0.000000e+00 : f32
    %241 = vector.broadcast %cst_198 : f32 to vector<8x128xf32>
    %242 = arith.maximumf %240, %241 : vector<8x128xf32>
    %c0_199 = arith.constant 0 : index
    %c256 = arith.constant 256 : index
    %243 = vector.load %arg14[%c0_199, %c256] : memref<8x512xf32, #tpu.memory_space<vmem>>, vector<8x128xf32>
    tpu.vector_store %arg14[%c0_199, %c256], %242 {strides = array<i32>} : memref<8x512xf32, #tpu.memory_space<vmem>>, vector<8x128xf32>,
    %c6_200 = arith.constant 6 : index
    %c0_201 = arith.constant 0 : index
    %c0_202 = arith.constant 0 : index
    %244 = vector.load %arg13[%c6_200, %c0_201, %c0_202] : memref<8x8x128xf32, #tpu.memory_space<vmem>>, vector<1x8x128xf32>
    %245 = vector.shape_cast %244 : vector<1x8x128xf32> to vector<8x128xf32>
    %c7_203 = arith.constant 7 : index
    %c0_204 = arith.constant 0 : index
    %c0_205 = arith.constant 0 : index
    %246 = vector.load %arg13[%c7_203, %c0_204, %c0_205] : memref<8x8x128xf32, #tpu.memory_space<vmem>>, vector<1x8x128xf32>
    %247 = vector.shape_cast %246 : vector<1x8x128xf32> to vector<8x128xf32>
    %248 = arith.maximumf %245, %247 : vector<8x128xf32>
    %249 = vector.broadcast %213 : vector<1x128xf32> to vector<8x128xf32>
    %250 = arith.addf %248, %249 : vector<8x128xf32>
    %cst_206 = arith.constant 0.000000e+00 : f32
    %251 = vector.broadcast %cst_206 : f32 to vector<8x128xf32>
    %252 = arith.maximumf %250, %251 : vector<8x128xf32>
    %c0_207 = arith.constant 0 : index
    %c384 = arith.constant 384 : index
    %253 = vector.load %arg14[%c0_207, %c384] : memref<8x512xf32, #tpu.memory_space<vmem>>, vector<8x128xf32>
    tpu.vector_store %arg14[%c0_207, %c384], %252 {strides = array<i32>} : memref<8x512xf32, #tpu.memory_space<vmem>>, vector<8x128xf32>,
    %c0_208 = arith.constant 0 : index
    %c0_209 = arith.constant 0 : index
    %254 = vector.load %arg14[%c0_208, %c0_209] : memref<8x512xf32, #tpu.memory_space<vmem>>, vector<8x512xf32>
    %c0_210 = arith.constant 0 : index
    %c0_211 = arith.constant 0 : index
    %255 = vector.load %arg6[%c0_210, %c0_211] : memref<512x512xf32, #tpu.memory_space<vmem>>, vector<512x512xf32>
    %cst_212 = arith.constant dense<0.000000e+00> : vector<8x512xf32>
    %256 = tpu.matmul %254, %255, %cst_212 {dimension_numbers = #tpu.dot_dimension_numbers<[1], [0], [0], [1], [0, 0, 1, 1], [], []>} : vector<8x512xf32>, vector<512x512xf32>, vector<8x512xf32> -> vector<8x512xf32>
    %257 = vector.extract_strided_slice %256 {offsets = [0, 0], sizes = [8, 128], strides = [1, 1]} : vector<8x512xf32> to vector<8x128xf32>
    %258 = vector.extract_strided_slice %256 {offsets = [0, 128], sizes = [8, 128], strides = [1, 1]} : vector<8x512xf32> to vector<8x128xf32>
    %259 = arith.maximumf %257, %258 : vector<8x128xf32>
    %260 = vector.extract_strided_slice %256 {offsets = [0, 256], sizes = [8, 128], strides = [1, 1]} : vector<8x512xf32> to vector<8x128xf32>
    %261 = vector.extract_strided_slice %256 {offsets = [0, 384], sizes = [8, 128], strides = [1, 1]} : vector<8x512xf32> to vector<8x128xf32>
    %262 = arith.maximumf %260, %261 : vector<8x128xf32>
    %263 = arith.maximumf %259, %262 : vector<8x128xf32>
    %c0_213 = arith.constant 0 : index
    %c0_214 = arith.constant 0 : index
    %264 = vector.load %arg7[%c0_213, %c0_214] : memref<1x128xf32, #tpu.memory_space<vmem>>, vector<1x128xf32>
    %265 = vector.broadcast %264 : vector<1x128xf32> to vector<8x128xf32>
    %266 = arith.addf %263, %265 : vector<8x128xf32>
    %cst_215 = arith.constant 0.000000e+00 : f32
    %267 = vector.broadcast %cst_215 : f32 to vector<8x128xf32>
    %268 = arith.maximumf %266, %267 : vector<8x128xf32>
    %c0_216 = arith.constant 0 : index
    %c0_217 = arith.constant 0 : index
    %269 = vector.load %arg8[%c0_216, %c0_217] : memref<128x128xf32, #tpu.memory_space<vmem>>, vector<128x128xf32>
    %cst_218 = arith.constant dense<0.000000e+00> : vector<8x128xf32>
    %270 = tpu.matmul %268, %269, %cst_218 {dimension_numbers = #tpu.dot_dimension_numbers<[1], [0], [0], [1], [0, 0, 1, 1], [], []>} : vector<8x128xf32>, vector<128x128xf32>, vector<8x128xf32> -> vector<8x128xf32>
    %c0_219 = arith.constant 0 : index
    %c0_220 = arith.constant 0 : index
    %271 = vector.load %arg9[%c0_219, %c0_220] : memref<1x128xf32, #tpu.memory_space<vmem>>, vector<1x128xf32>
    %272 = vector.broadcast %271 : vector<1x128xf32> to vector<8x128xf32>
    %273 = arith.addf %270, %272 : vector<8x128xf32>
    %274 = tpu.iota {dimensions = array<i32: 1>} : vector<8x128xi32>
    %c10_i32 = arith.constant 10 : i32
    %275 = vector.broadcast %c10_i32 : i32 to vector<8x128xi32>
    %276 = arith.cmpi slt, %274, %275 : vector<8x128xi32>
    %cst_221 = arith.constant -1.000000e+30 : f32
    %277 = vector.broadcast %cst_221 : f32 to vector<8x128xf32>
    %278 = arith.select %276, %273, %277 : vector<8x128xi1>, vector<8x128xf32>
    %cst_222 = arith.constant dense<0xFF800000> : vector<8xf32>
    %279 = vector.multi_reduction <maximumf>, %278, %cst_222 [1] : vector<8x128xf32> to vector<8xf32>
    %280 = vector.shape_cast %279 : vector<8xf32> to vector<8x1xf32>
    %281 = vector.broadcast %280 : vector<8x1xf32> to vector<8x128xf32>
    %282 = arith.subf %278, %281 : vector<8x128xf32>
    %283 = math.exp %282 : vector<8x128xf32>
    %cst_223 = arith.constant dense<0.000000e+00> : vector<8xf32>
    %284 = vector.multi_reduction <add>, %283, %cst_223 [1] : vector<8x128xf32> to vector<8xf32>
    %285 = vector.shape_cast %284 : vector<8xf32> to vector<8x1xf32>
    %286 = vector.broadcast %285 : vector<8x1xf32> to vector<8x128xf32>
    %287 = arith.divf %283, %286 : vector<8x128xf32>
    %c0_224 = arith.constant 0 : index
    %c0_225 = arith.constant 0 : index
    %288 = vector.load %arg10[%c0_224, %c0_225] : memref<8x128xf32, #tpu.memory_space<vmem>>, vector<8x128xf32>
    tpu.vector_store %arg10[%c0_224, %c0_225], %287 {strides = array<i32>} : memref<8x128xf32, #tpu.memory_space<vmem>>, vector<8x128xf32>,
    return
  }
  func.func @transform_0(%arg0: i32) -> (i32, i32, i32) {
    %c0_i32 = arith.constant 0 : i32
    %c0_i32_0 = arith.constant 0 : i32
    %c0_i32_1 = arith.constant 0 : i32
    return %c0_i32, %arg0, %c0_i32_0 : i32, i32, i32
  }
  func.func @transform_1(%arg0: i32) -> (i32, i32, i32) {
    %c0_i32 = arith.constant 0 : i32
    %c0_i32_0 = arith.constant 0 : i32
    %c0_i32_1 = arith.constant 0 : i32
    %c0_i32_2 = arith.constant 0 : i32
    return %c0_i32, %c0_i32_0, %c0_i32_1 : i32, i32, i32
  }
  func.func @transform_2(%arg0: i32) -> (i32, i32) {
    %c0_i32 = arith.constant 0 : i32
    %c0_i32_0 = arith.constant 0 : i32
    %c0_i32_1 = arith.constant 0 : i32
    return %c0_i32, %c0_i32_0 : i32, i32
  }
  func.func @transform_3(%arg0: i32) -> (i32, i32, i32) {
    %c0_i32 = arith.constant 0 : i32
    %c0_i32_0 = arith.constant 0 : i32
    %c0_i32_1 = arith.constant 0 : i32
    %c0_i32_2 = arith.constant 0 : i32
    return %c0_i32, %c0_i32_0, %c0_i32_1 : i32, i32, i32
  }
  func.func @transform_4(%arg0: i32) -> (i32, i32) {
    %c0_i32 = arith.constant 0 : i32
    %c0_i32_0 = arith.constant 0 : i32
    %c0_i32_1 = arith.constant 0 : i32
    return %c0_i32, %c0_i32_0 : i32, i32
  }
  func.func @transform_5(%arg0: i32) -> (i32, i32) {
    %c0_i32 = arith.constant 0 : i32
    %c0_i32_0 = arith.constant 0 : i32
    %c0_i32_1 = arith.constant 0 : i32
    return %c0_i32, %c0_i32_0 : i32, i32
  }
  func.func @transform_6(%arg0: i32) -> (i32, i32) {
    %c0_i32 = arith.constant 0 : i32
    %c0_i32_0 = arith.constant 0 : i32
    %c0_i32_1 = arith.constant 0 : i32
    return %c0_i32, %c0_i32_0 : i32, i32
  }
  func.func @transform_7(%arg0: i32) -> (i32, i32) {
    %c0_i32 = arith.constant 0 : i32
    %c0_i32_0 = arith.constant 0 : i32
    %c0_i32_1 = arith.constant 0 : i32
    return %c0_i32, %c0_i32_0 : i32, i32
  }
  func.func @transform_8(%arg0: i32) -> (i32, i32) {
    %c0_i32 = arith.constant 0 : i32
    %c0_i32_0 = arith.constant 0 : i32
    %c0_i32_1 = arith.constant 0 : i32
    return %c0_i32, %c0_i32_0 : i32, i32
  }
  func.func @transform_9(%arg0: i32) -> (i32, i32) {
    %c0_i32 = arith.constant 0 : i32
    %c0_i32_0 = arith.constant 0 : i32
    return %arg0, %c0_i32 : i32, i32
  }
}

</mosaic_0001>

<llo_original>
// kernel: net_forward.1
$region0: #{net_forward.1}
  #allocation0 [shape = 'u32[]', space=smem, size = 0x4, offset = 0x4, fixed_abs, tag = 'smem constant byte address 0x4 - core index']
  #allocation1 [shape = 'u32[72,128]{1,0:T(1,128)}', space=vmem, size = 0x9000, scoped, tag = 'internal scratch']
  #allocation2 [shape = 'f32[24,8,128]{2,1,0:T(8,128)}', space=vmem, size = 0x18000, scoped, tag = 'scratch operand']
  #allocation3 [shape = 'f32[12,8,128]{2,1,0:T(8,128)}', space=vmem, size = 0xc000, scoped, tag = 'scratch operand']
  #allocation4 [shape = 'f32[8,8,128]{2,1,0:T(8,128)}', space=vmem, size = 0x8000, scoped, tag = 'scratch operand']
  #allocation5 [shape = 'f32[8,512]{1,0:T(8,128)}', space=vmem, size = 0x4000, scoped, tag = 'scratch operand']
  %s0 = inlined_call_operand.vmem [shape: f32[28,24,28], index: 0, kind: input, shape index: {}]
  %s1 = inlined_call_operand.vmem [shape: f32[5,28,256], index: 1, kind: input, shape index: {}]
  %s2 = inlined_call_operand.vmem [shape: f32[1,128], index: 2, kind: input, shape index: {}]
  %s3 = inlined_call_operand.hbm [shape: f32[5,128,256], index: 3, kind: input, shape index: {}]
  %s4 = inlined_call_operand.vmem [shape: f32[1,128], index: 4, kind: input, shape index: {}]
  %s5 = inlined_call_operand.vmem [shape: f32[512,512], index: 5, kind: input, shape index: {}]
  %s6 = inlined_call_operand.vmem [shape: f32[1,128], index: 6, kind: input, shape index: {}]
  %s7 = inlined_call_operand.vmem [shape: f32[128,128], index: 7, kind: input, shape index: {}]
  %s8 = inlined_call_operand.vmem [shape: f32[1,128], index: 8, kind: input, shape index: {}]
  %s9 = inlined_call_operand.vmem [shape: f32[24,128], index: 9, kind: output, shape index: {}]
  %s10 = sld [smem:[#allocation0]]
  $region111: #{net_forward.1} parent=0
    _
  %s12 = ssub.s32 1, %s10
  %s13 = scalar_select 0, %s12, %s10
  $region1: #{net_forward.1} parent=0
    #allocation6 [shape = 'u8[229376]{0}', space=vmem, size = 0x38000, scoped, tag = 'input window, operand 0']
    #allocation7 [shape = 'u8[655360]{0}', space=vmem, size = 0xa0000, scoped, tag = 'input window, operand 3, single buffered']
    #allocation8 [shape = 's32[2]{0}', space=sflag, size = 0x8, scoped, tag = 'scoped memory for net_forward.1']
    %14 = vsyncpa [#allocation8], 0
    loop: start=0, step=1, limit=5
    $region2: #{net_forward.1} parent=1 // loop_pre_header
      _
    $region3: #{net_forward.1} parent=1 // loop_header
      %s16 = sphi 0, %s20
      %p17 = scmp.ge.s32.totalorder %s16, 5
      %s26 = sphi 0, %s28
      %s29 = sphi 0, %s26
      %s30 = sphi 0, %s29
      %s46 = sphi 0, %s30
      %s50 = sphi 0, %s50
      %s52 = sphi 0, %s50
      %s53 = sphi 0, %s52
      %s67 = sphi 0, %s53
      %s71 = sphi 0, %s71
      %s73 = sphi 0, %s71
      %s74 = sphi 0, %s73
      %s88 = sphi 0, %s74
      %s92 = sphi 0, %s92
      %s94 = sphi 0, %s92
      %s95 = sphi 0, %s94
      %s109 = sphi 0, %s95
      %s113 = sphi 0, %s113
      %s115 = sphi 0, %s113
      %s116 = sphi 0, %s115
      %s130 = sphi 0, %s116
      %s134 = sphi 0, %s134
      %s136 = sphi 0, %s134
      %s137 = sphi 0, %s136
      %s151 = sphi 0, %s137
      %s155 = sphi 0, %s155
      %s157 = sphi 0, %s155
      %s158 = sphi 0, %s157
      %s172 = sphi 0, %s158
      %s176 = sphi 0, %s176
      %s178 = sphi 0, %s176
      %s179 = sphi 0, %s178
      %s193 = sphi 0, %s179
      %s197 = sphi 0, %s197
      %s199 = sphi 0, %s197
      %s200 = sphi 0, %s199
      %s214 = sphi 0, %s200
      %s220 = sphi 0, %s222
      %s223 = sphi 0, %s220
      %s224 = sphi 0, %s223
      %s240 = sphi 0, %s224
    $region4: #{net_forward.1} parent=1 // loop_header_branch
      %19 = sbr.rel (%p17) target = $region8
    $region5: #{net_forward.1} parent=1 // loop_body
      %s21 = ssub.s32 %s16, 1
      %s22 = ssub.s32 %s16, 2
      %s23 = sadd.s32 %s16, 1
      %s24 = ssub.s32 %s16, %s23
      %p25 = scmp.eq.s32.totalorder %s24, 0
      %s27 = sadd.s32 %s26, 1
      %s28 = scalar_select %p25, %s26, %s27
      %p31 = pneg %p25
      %p32 = scmp.eq.s32.totalorder %s16, 2
      %p33 = por %p31, %p32
      %p34 = scmp.ne.s32.totalorder %s26, %s29
      %p35 = scmp.eq.s32.totalorder %s16, 0
      %p36 = por %p34, %p35
      %p37 = scmp.ne.s32.totalorder %s26, %s29
      %p38 = scmp.eq.s32.totalorder %s21, 2
      %p39 = por %p37, %p38
      %p40 = scmp.ne.s32.totalorder %s29, %s30
      %p41 = scmp.eq.s32.totalorder %s21, 0
      %p42 = por %p40, %p41
      %p43 = scmp.ne.s32.totalorder %s29, %s30
      %p44 = scmp.eq.s32.totalorder %s22, 2
      %p45 = por %p43, %p44
      %p47 = scmp.ne.s32.totalorder %s30, %s46
      %p48 = scmp.eq.s32.totalorder %s22, 0
      %p49 = por %p47, %p48
      %s51 = sadd.s32 %s50, 1
      %p54 = scmp.eq.s32.totalorder %s16, 2
      %p55 = scmp.ne.s32.totalorder %s50, %s52
      %p56 = scmp.eq.s32.totalorder %s16, 0
      %p57 = por %p55, %p56
      %p58 = scmp.ne.s32.totalorder %s50, %s52
      %p59 = scmp.eq.s32.totalorder %s21, 2
      %p60 = por %p58, %p59
      %p61 = scmp.ne.s32.totalorder %s52, %s53
      %p62 = scmp.eq.s32.totalorder %s21, 0
      %p63 = por %p61, %p62
      %p64 = scmp.ne.s32.totalorder %s52, %s53
      %p65 = scmp.eq.s32.totalorder %s22, 2
      %p66 = por %p64, %p65
      %p68 = scmp.ne.s32.totalorder %s53, %s67
      %p69 = scmp.eq.s32.totalorder %s22, 0
      %p70 = por %p68, %p69
      %s72 = sadd.s32 %s71, 1
      %p75 = scmp.eq.s32.totalorder %s16, 2
      %p76 = scmp.ne.s32.totalorder %s71, %s73
      %p77 = scmp.eq.s32.totalorder %s16, 0
      %p78 = por %p76, %p77
      %p79 = scmp.ne.s32.totalorder %s71, %s73
      %p80 = scmp.eq.s32.totalorder %s21, 2
      %p81 = por %p79, %p80
      %p82 = scmp.ne.s32.totalorder %s73, %s74
      %p83 = scmp.eq.s32.totalorder %s21, 0
      %p84 = por %p82, %p83
      %p85 = scmp.ne.s32.totalorder %s73, %s74
      %p86 = scmp.eq.s32.totalorder %s22, 2
      %p87 = por %p85, %p86
      %p89 = scmp.ne.s32.totalorder %s74, %s88
      %p90 = scmp.eq.s32.totalorder %s22, 0
      %p91 = por %p89, %p90
      %s93 = sadd.s32 %s92, 1
      %p96 = scmp.eq.s32.totalorder %s16, 2
      %p97 = scmp.ne.s32.totalorder %s92, %s94
      %p98 = scmp.eq.s32.totalorder %s16, 0
      %p99 = por %p97, %p98
      %p100 = scmp.ne.s32.totalorder %s92, %s94
      %p101 = scmp.eq.s32.totalorder %s21, 2
      %p102 = por %p100, %p101
      %p103 = scmp.ne.s32.totalorder %s94, %s95
      %p104 = scmp.eq.s32.totalorder %s21, 0
      %p105 = por %p103, %p104
      %p106 = scmp.ne.s32.totalorder %s94, %s95
      %p107 = scmp.eq.s32.totalorder %s22, 2
      %p108 = por %p106, %p107
      %p110 = scmp.ne.s32.totalorder %s95, %s109
      %p111 = scmp.eq.s32.totalorder %s22, 0
      %p112 = por %p110, %p111
      %s114 = sadd.s32 %s113, 1
      %p117 = scmp.eq.s32.totalorder %s16, 2
      %p118 = scmp.ne.s32.totalorder %s113, %s115
      %p119 = scmp.eq.s32.totalorder %s16, 0
      %p120 = por %p118, %p119
      %p121 = scmp.ne.s32.totalorder %s113, %s115
      %p122 = scmp.eq.s32.totalorder %s21, 2
      %p123 = por %p121, %p122
      %p124 = scmp.ne.s32.totalorder %s115, %s116
      %p125 = scmp.eq.s32.totalorder %s21, 0
      %p126 = por %p124, %p125
      %p127 = scmp.ne.s32.totalorder %s115, %s116
      %p128 = scmp.eq.s32.totalorder %s22, 2
      %p129 = por %p127, %p128
      %p131 = scmp.ne.s32.totalorder %s116, %s130
      %p132 = scmp.eq.s32.totalorder %s22, 0
      %p133 = por %p131, %p132
      %s135 = sadd.s32 %s134, 1
      %p138 = scmp.eq.s32.totalorder %s16, 2
      %p139 = scmp.ne.s32.totalorder %s134, %s136
      %p140 = scmp.eq.s32.totalorder %s16, 0
      %p141 = por %p139, %p140
      %p142 = scmp.ne.s32.totalorder %s134, %s136
      %p143 = scmp.eq.s32.totalorder %s21, 2
      %p144 = por %p142, %p143
      %p145 = scmp.ne.s32.totalorder %s136, %s137
      %p146 = scmp.eq.s32.totalorder %s21, 0
      %p147 = por %p145, %p146
      %p148 = scmp.ne.s32.totalorder %s136, %s137
      %p149 = scmp.eq.s32.totalorder %s22, 2
      %p150 = por %p148, %p149
      %p152 = scmp.ne.s32.totalorder %s137, %s151
      %p153 = scmp.eq.s32.totalorder %s22, 0
      %p154 = por %p152, %p153
      %s156 = sadd.s32 %s155, 1
      %p159 = scmp.eq.s32.totalorder %s16, 2
      %p160 = scmp.ne.s32.totalorder %s155, %s157
      %p161 = scmp.eq.s32.totalorder %s16, 0
      %p162 = por %p160, %p161
      %p163 = scmp.ne.s32.totalorder %s155, %s157
      %p164 = scmp.eq.s32.totalorder %s21, 2
      %p165 = por %p163, %p164
      %p166 = scmp.ne.s32.totalorder %s157, %s158
      %p167 = scmp.eq.s32.totalorder %s21, 0
      %p168 = por %p166, %p167
      %p169 = scmp.ne.s32.totalorder %s157, %s158
      %p170 = scmp.eq.s32.totalorder %s22, 2
      %p171 = por %p169, %p170
      %p173 = scmp.ne.s32.totalorder %s158, %s172
      %p174 = scmp.eq.s32.totalorder %s22, 0
      %p175 = por %p173, %p174
      %s177 = sadd.s32 %s176, 1
      %p180 = scmp.eq.s32.totalorder %s16, 2
      %p181 = scmp.ne.s32.totalorder %s176, %s178
      %p182 = scmp.eq.s32.totalorder %s16, 0
      %p183 = por %p181, %p182
      %p184 = scmp.ne.s32.totalorder %s176, %s178
      %p185 = scmp.eq.s32.totalorder %s21, 2
      %p186 = por %p184, %p185
      %p187 = scmp.ne.s32.totalorder %s178, %s179
      %p188 = scmp.eq.s32.totalorder %s21, 0
      %p189 = por %p187, %p188
      %p190 = scmp.ne.s32.totalorder %s178, %s179
      %p191 = scmp.eq.s32.totalorder %s22, 2
      %p192 = por %p190, %p191
      %p194 = scmp.ne.s32.totalorder %s179, %s193
      %p195 = scmp.eq.s32.totalorder %s22, 0
      %p196 = por %p194, %p195
      %s198 = sadd.s32 %s197, 1
      %p201 = scmp.eq.s32.totalorder %s16, 2
      %p202 = scmp.ne.s32.totalorder %s197, %s199
      %p203 = scmp.eq.s32.totalorder %s16, 0
      %p204 = por %p202, %p203
      %p205 = scmp.ne.s32.totalorder %s197, %s199
      %p206 = scmp.eq.s32.totalorder %s21, 2
      %p207 = por %p205, %p206
      %p208 = scmp.ne.s32.totalorder %s199, %s200
      %p209 = scmp.eq.s32.totalorder %s21, 0
      %p210 = por %p208, %p209
      %p211 = scmp.ne.s32.totalorder %s199, %s200
      %p212 = scmp.eq.s32.totalorder %s22, 2
      %p213 = por %p211, %p212
      %p215 = scmp.ne.s32.totalorder %s200, %s214
      %p216 = scmp.eq.s32.totalorder %s22, 0
      %p217 = por %p215, %p216
      %s218 = ssub.s32 %s16, %s23
      %p219 = scmp.eq.s32.totalorder %s218, 0
      %s221 = sadd.s32 %s220, 1
      %s222 = scalar_select %p219, %s220, %s221
      %p225 = pneg %p219
      %p226 = scmp.eq.s32.totalorder %s16, 2
      %p227 = por %p225, %p226
      %p228 = scmp.ne.s32.totalorder %s220, %s223
      %p229 = scmp.eq.s32.totalorder %s16, 0
      %p230 = por %p228, %p229
      %p231 = scmp.ne.s32.totalorder %s220, %s223
      %p232 = scmp.eq.s32.totalorder %s21, 2
      %p233 = por %p231, %p232
      %p234 = scmp.ne.s32.totalorder %s223, %s224
      %p235 = scmp.eq.s32.totalorder %s21, 0
      %p236 = por %p234, %p235
      %p237 = scmp.ne.s32.totalorder %s223, %s224
      %p238 = scmp.eq.s32.totalorder %s22, 2
      %p239 = por %p237, %p238
      %p241 = scmp.ne.s32.totalorder %s224, %s240
      %p242 = scmp.eq.s32.totalorder %s22, 0
      %p243 = por %p241, %p242
      %p244 = scmp.le.s32.totalorder 1, %s16
      %p245 = scmp.lt.s32.totalorder %s16, 4
      %p246 = pnand %p244, %p245
      %p247 = pneg %p246
      // Predicated region
      $region9: #{net_forward.1} parent=5 // pred_check
        _
      $region10: #{net_forward.1} parent=5 // pred_check_branch
        %249 = sbr.rel (%p246) target = $region12
      $region11: #{net_forward.1} parent=5 // pred_region
        %s250 = ssub.s32 %s16, 1
        // Predicated region
        $region13: #{net_forward.1} parent=11 // pred_check
          %p251 = pneg %p63
        $region14: #{net_forward.1} parent=11 // pred_check_branch
          %253 = sbr.rel (%p251) target = $region16
        $region15: #{net_forward.1} parent=11 // pred_region
          _
        $region16: #{net_forward.1} parent=11 // pred_fallthru
          _
        // Predicated region
        $region17: #{net_forward.1} parent=11 // pred_check
          %p254 = pneg %p84
        $region18: #{net_forward.1} parent=11 // pred_check_branch
          %256 = sbr.rel (%p254) target = $region20
        $region19: #{net_forward.1} parent=11 // pred_region
          _
        $region20: #{net_forward.1} parent=11 // pred_fallthru
          _
        // Predicated region
        $region21: #{net_forward.1} parent=11 // pred_check
          %p257 = pneg %p105
        $region22: #{net_forward.1} parent=11 // pred_check_branch
          %259 = sbr.rel (%p257) target = $region24
        $region23: #{net_forward.1} parent=11 // pred_region
          %261 = vsyncadd [#allocation8], 0
          %s262 = sshll.u32 %s3, 4
          %s263 = int_to_ptr.hbm [resolvable:$true] %s262
          %s264 = sshll.u32 [#allocation7], 4
          %s265 = int_to_ptr.vmem [resolvable:$true] %s264
          %270 = dma.hbm_to_vmem [thread:$0]  %s263, 20480, %s265, [#allocation8], 256, 256, 16
        $region24: #{net_forward.1} parent=11 // pred_fallthru
          _
        // Predicated region
        $region25: #{net_forward.1} parent=11 // pred_check
          %p271 = pneg %p126
        $region26: #{net_forward.1} parent=11 // pred_check_branch
          %273 = sbr.rel (%p271) target = $region28
        $region27: #{net_forward.1} parent=11 // pred_region
          _
        $region28: #{net_forward.1} parent=11 // pred_fallthru
          _
        // Predicated region
        $region29: #{net_forward.1} parent=11 // pred_check
          %p274 = pneg %p147
        $region30: #{net_forward.1} parent=11 // pred_check_branch
          %276 = sbr.rel (%p274) target = $region32
        $region31: #{net_forward.1} parent=11 // pred_region
          _
        $region32: #{net_forward.1} parent=11 // pred_fallthru
          _
        // Predicated region
        $region33: #{net_forward.1} parent=11 // pred_check
          %p277 = pneg %p168
        $region34: #{net_forward.1} parent=11 // pred_check_branch
          %279 = sbr.rel (%p277) target = $region36
        $region35: #{net_forward.1} parent=11 // pred_region
          _
        $region36: #{net_forward.1} parent=11 // pred_fallthru
          _
        // Predicated region
        $region37: #{net_forward.1} parent=11 // pred_check
          %p280 = pneg %p189
        $region38: #{net_forward.1} parent=11 // pred_check_branch
          %282 = sbr.rel (%p280) target = $region40
        $region39: #{net_forward.1} parent=11 // pred_region
          _
        $region40: #{net_forward.1} parent=11 // pred_fallthru
          _
        // Predicated region
        $region41: #{net_forward.1} parent=11 // pred_check
          %p283 = pneg %p210
        $region42: #{net_forward.1} parent=11 // pred_check_branch
          %285 = sbr.rel (%p283) target = $region44
        $region43: #{net_forward.1} parent=11 // pred_region
          _
        $region44: #{net_forward.1} parent=11 // pred_fallthru
          _
      $region12: #{net_forward.1} parent=5 // pred_fallthru
        _
      %p286 = scmp.lt.s32.totalorder %s16, 3
      // Predicated region
      $region45: #{net_forward.1} parent=5 // pred_check
        %p287 = pneg %p286
      $region46: #{net_forward.1} parent=5 // pred_check_branch
        %289 = sbr.rel (%p287) target = $region48
      $region47: #{net_forward.1} parent=5 // pred_region
        // Predicated region
        $region49: #{net_forward.1} parent=47 // pred_check
          %p290 = pneg %p36
        $region50: #{net_forward.1} parent=47 // pred_check_branch
          %292 = sbr.rel (%p290) target = $region52
        $region51: #{net_forward.1} parent=47 // pred_region
          %s293 = sand.u32 %s26, 1
          %s294 = sand.u32 %s26, 1
          %s295 = smul.addr %s294, 224
          %s296 = scalar_lea.vmem [#allocation6], %s295
          %s297 = smul.addr %s16, 8
          %s298 = scalar_lea.vmem %s0, %s297
          // Predicated region
          $region53: #{net_forward.1} parent=51 // pred_check
            _
          $region54: #{net_forward.1} parent=51 // pred_check_branch
            %300 = sbr.rel (0) target = $region56
          $region55: #{net_forward.1} parent=51 // pred_region
            // Predicated region
            $region57: #{net_forward.1} parent=55 // pred_check
              _
            $region58: #{net_forward.1} parent=55 // pred_check_branch
              %302 = sbr.rel (0) target = $region60
            $region59: #{net_forward.1} parent=55 // pred_region
              // Predicated region
              $region72: #{net_forward.1} parent=59 // pred_check
                _
              $region73: #{net_forward.1} parent=59 // pred_check_branch
                %372 = sbr.rel (0) target = $region75
              $region74: #{net_forward.1} parent=59 // pred_region
                loop: start=0, step=1, limit=1
                $region76: #{net_forward.1} parent=74 // loop_pre_header
                  _
                $region77: #{net_forward.1} parent=74 // loop_header
                  %s374 = sphi 0, %s378
                  %p375 = scmp.ge.s32.totalorder %s374, 1
                  %s379 = sphi %s298, %s298
                  %s380 = sphi %s296, %s296
                $region78: #{net_forward.1} parent=74 // loop_header_branch
                  %377 = sbr.rel (%p375) target = $region82
                $region79: #{net_forward.1} parent=74 // loop_body
                  %v381 = vld [vmem:[%s379] sm:$0xff]
                  %382 = vst [vmem:[%s380] sm:$0xff] %v381
                  %v383 = vld [vmem:[%s379 + $0x18] sm:$0xff]
                  %384 = vst [vmem:[%s380 + $0x8] sm:$0xff] %v383
                  %v385 = vld [vmem:[%s379 + $0x30] sm:$0xff]
                  %386 = vst [vmem:[%s380 + $0x10] sm:$0xff] %v385
                  %v387 = vld [vmem:[%s379 + $0x48] sm:$0xff]
                  %388 = vst [vmem:[%s380 + $0x18] sm:$0xff] %v387
                  %v389 = vld [vmem:[%s379 + $0x60] sm:$0xff]
                  %390 = vst [vmem:[%s380 + $0x20] sm:$0xff] %v389
                  %v391 = vld [vmem:[%s379 + $0x78] sm:$0xff]
                  %392 = vst [vmem:[%s380 + $0x28] sm:$0xff] %v391
                  %v393 = vld [vmem:[%s379 + $0x90] sm:$0xff]
                  %394 = vst [vmem:[%s380 + $0x30] sm:$0xff] %v393
                  %v395 = vld [vmem:[%s379 + $0xa8] sm:$0xff]
                  %396 = vst [vmem:[%s380 + $0x38] sm:$0xff] %v395
                  %v397 = vld [vmem:[%s379 + $0xc0] sm:$0xff]
                  %398 = vst [vmem:[%s380 + $0x40] sm:$0xff] %v397
                  %v399 = vld [vmem:[%s379 + $0xd8] sm:$0xff]
                  %400 = vst [vmem:[%s380 + $0x48] sm:$0xff] %v399
                  %v401 = vld [vmem:[%s379 + $0xf0] sm:$0xff]
                  %402 = vst [vmem:[%s380 + $0x50] sm:$0xff] %v401
                  %v403 = vld [vmem:[%s379 + $0x108] sm:$0xff]
                  %404 = vst [vmem:[%s380 + $0x58] sm:$0xff] %v403
                  %v405 = vld [vmem:[%s379 + $0x120] sm:$0xff]
                  %406 = vst [vmem:[%s380 + $0x60] sm:$0xff] %v405
                  %v407 = vld [vmem:[%s379 + $0x138] sm:$0xff]
                  %408 = vst [vmem:[%s380 + $0x68] sm:$0xff] %v407
                  %v409 = vld [vmem:[%s379 + $0x150] sm:$0xff]
                  %410 = vst [vmem:[%s380 + $0x70] sm:$0xff] %v409
                  %v411 = vld [vmem:[%s379 + $0x168] sm:$0xff]
                  %412 = vst [vmem:[%s380 + $0x78] sm:$0xff] %v411
                  %v413 = vld [vmem:[%s379 + $0x180] sm:$0xff]
                  %414 = vst [vmem:[%s380 + $0x80] sm:$0xff] %v413
                  %v415 = vld [vmem:[%s379 + $0x198] sm:$0xff]
                  %416 = vst [vmem:[%s380 + $0x88] sm:$0xff] %v415
                  %v417 = vld [vmem:[%s379 + $0x1b0] sm:$0xff]
                  %418 = vst [vmem:[%s380 + $0x90] sm:$0xff] %v417
                  %v419 = vld [vmem:[%s379 + $0x1c8] sm:$0xff]
                  %420 = vst [vmem:[%s380 + $0x98] sm:$0xff] %v419
                  %v421 = vld [vmem:[%s379 + $0x1e0] sm:$0xff]
                  %422 = vst [vmem:[%s380 + $0xa0] sm:$0xff] %v421
                  %v423 = vld [vmem:[%s379 + $0x1f8] sm:$0xff]
                  %424 = vst [vmem:[%s380 + $0xa8] sm:$0xff] %v423
                  %v425 = vld [vmem:[%s379 + $0x210] sm:$0xff]
                  %426 = vst [vmem:[%s380 + $0xb0] sm:$0xff] %v425
                  %v427 = vld [vmem:[%s379 + $0x228] sm:$0xff]
                  %428 = vst [vmem:[%s380 + $0xb8] sm:$0xff] %v427
                  %v429 = vld [vmem:[%s379 + $0x240] sm:$0xff]
                  %430 = vst [vmem:[%s380 + $0xc0] sm:$0xff] %v429
                  %v431 = vld [vmem:[%s379 + $0x258] sm:$0xff]
                  %432 = vst [vmem:[%s380 + $0xc8] sm:$0xff] %v431
                  %v433 = vld [vmem:[%s379 + $0x270] sm:$0xff]
                  %434 = vst [vmem:[%s380 + $0xd0] sm:$0xff] %v433
                  %v435 = vld [vmem:[%s379 + $0x288] sm:$0xff]
                  %436 = vst [vmem:[%s380 + $0xd8] sm:$0xff] %v435
                $region80: #{net_forward.1} parent=74 // loop_footer
                  %s378 = sadd.s32 1, %s374
                $region81: #{net_forward.1} parent=74 // loop_footer_branch
                  %373 = sbr.rel target = $region77
                $region82: #{net_forward.1} parent=74 // loop_exit
                  _
              $region75: #{net_forward.1} parent=59 // pred_fallthru
                _
              // Predicated region
              $region83: #{net_forward.1} parent=59 // pred_check
                _
              $region84: #{net_forward.1} parent=59 // pred_check_branch
                %438 = sbr.rel target = $region86
              $region85: #{net_forward.1} parent=59 // pred_region
                _
              $region86: #{net_forward.1} parent=59 // pred_fallthru
                _
            $region60: #{net_forward.1} parent=55 // pred_fallthru
              _
            // Predicated region
            $region61: #{net_forward.1} parent=55 // pred_check
              _
            $region62: #{net_forward.1} parent=55 // pred_check_branch
              %304 = sbr.rel target = $region64
            $region63: #{net_forward.1} parent=55 // pred_region
              %s306 = ssub.s32 256, 1
              loop: start=0, step=1, limit=1
              $region65: #{net_forward.1} parent=63 // loop_pre_header
                _
              $region66: #{net_forward.1} parent=63 // loop_header
                %s308 = sphi 0, %s312
                %p309 = scmp.ge.s32.totalorder %s308, 1
                %s313 = sphi %s298, %s298
                %s314 = sphi %s296, %s296
              $region67: #{net_forward.1} parent=63 // loop_header_branch
                %311 = sbr.rel (%p309) target = $region71
              $region68: #{net_forward.1} parent=63 // loop_body
                %v315 = vld [vmem:[%s313] sm:%s306]
                %316 = vst [vmem:[%s314] sm:%s306] %v315
                %v317 = vld [vmem:[%s313 + $0x18] sm:%s306]
                %318 = vst [vmem:[%s314 + $0x8] sm:%s306] %v317
                %v319 = vld [vmem:[%s313 + $0x30] sm:%s306]
                %320 = vst [vmem:[%s314 + $0x10] sm:%s306] %v319
                %v321 = vld [vmem:[%s313 + $0x48] sm:%s306]
                %322 = vst [vmem:[%s314 + $0x18] sm:%s306] %v321
                %v323 = vld [vmem:[%s313 + $0x60] sm:%s306]
                %324 = vst [vmem:[%s314 + $0x20] sm:%s306] %v323
                %v325 = vld [vmem:[%s313 + $0x78] sm:%s306]
                %326 = vst [vmem:[%s314 + $0x28] sm:%s306] %v325
                %v327 = vld [vmem:[%s313 + $0x90] sm:%s306]
                %328 = vst [vmem:[%s314 + $0x30] sm:%s306] %v327
                %v329 = vld [vmem:[%s313 + $0xa8] sm:%s306]
                %330 = vst [vmem:[%s314 + $0x38] sm:%s306] %v329
                %v331 = vld [vmem:[%s313 + $0xc0] sm:%s306]
                %332 = vst [vmem:[%s314 + $0x40] sm:%s306] %v331
                %v333 = vld [vmem:[%s313 + $0xd8] sm:%s306]
                %334 = vst [vmem:[%s314 + $0x48] sm:%s306] %v333
                %v335 = vld [vmem:[%s313 + $0xf0] sm:%s306]
                %336 = vst [vmem:[%s314 + $0x50] sm:%s306] %v335
                %v337 = vld [vmem:[%s313 + $0x108] sm:%s306]
                %338 = vst [vmem:[%s314 + $0x58] sm:%s306] %v337
                %v339 = vld [vmem:[%s313 + $0x120] sm:%s306]
                %340 = vst [vmem:[%s314 + $0x60] sm:%s306] %v339
                %v341 = vld [vmem:[%s313 + $0x138] sm:%s306]
                %342 = vst [vmem:[%s314 + $0x68] sm:%s306] %v341
                %v343 = vld [vmem:[%s313 + $0x150] sm:%s306]
                %344 = vst [vmem:[%s314 + $0x70] sm:%s306] %v343
                %v345 = vld [vmem:[%s313 + $0x168] sm:%s306]
                %346 = vst [vmem:[%s314 + $0x78] sm:%s306] %v345
                %v347 = vld [vmem:[%s313 + $0x180] sm:%s306]
                %348 = vst [vmem:[%s314 + $0x80] sm:%s306] %v347
                %v349 = vld [vmem:[%s313 + $0x198] sm:%s306]
                %350 = vst [vmem:[%s314 + $0x88] sm:%s306] %v349
                %v351 = vld [vmem:[%s313 + $0x1b0] sm:%s306]
                %352 = vst [vmem:[%s314 + $0x90] sm:%s306] %v351
                %v353 = vld [vmem:[%s313 + $0x1c8] sm:%s306]
                %354 = vst [vmem:[%s314 + $0x98] sm:%s306] %v353
                %v355 = vld [vmem:[%s313 + $0x1e0] sm:%s306]
                %356 = vst [vmem:[%s314 + $0xa0] sm:%s306] %v355
                %v357 = vld [vmem:[%s313 + $0x1f8] sm:%s306]
                %358 = vst [vmem:[%s314 + $0xa8] sm:%s306] %v357
                %v359 = vld [vmem:[%s313 + $0x210] sm:%s306]
                %360 = vst [vmem:[%s314 + $0xb0] sm:%s306] %v359
                %v361 = vld [vmem:[%s313 + $0x228] sm:%s306]
                %362 = vst [vmem:[%s314 + $0xb8] sm:%s306] %v361
                %v363 = vld [vmem:[%s313 + $0x240] sm:%s306]
                %364 = vst [vmem:[%s314 + $0xc0] sm:%s306] %v363
                %v365 = vld [vmem:[%s313 + $0x258] sm:%s306]
                %366 = vst [vmem:[%s314 + $0xc8] sm:%s306] %v365
                %v367 = vld [vmem:[%s313 + $0x270] sm:%s306]
                %368 = vst [vmem:[%s314 + $0xd0] sm:%s306] %v367
                %v369 = vld [vmem:[%s313 + $0x288] sm:%s306]
                %370 = vst [vmem:[%s314 + $0xd8] sm:%s306] %v369
              $region69: #{net_forward.1} parent=63 // loop_footer
                %s312 = sadd.s32 1, %s308
              $region70: #{net_forward.1} parent=63 // loop_footer_branch
                %307 = sbr.rel target = $region66
              $region71: #{net_forward.1} parent=63 // loop_exit
                _
            $region64: #{net_forward.1} parent=55 // pred_fallthru
              _
          $region56: #{net_forward.1} parent=51 // pred_fallthru
            _
          %439 = vnop
        $region52: #{net_forward.1} parent=47 // pred_fallthru
          _
      $region48: #{net_forward.1} parent=5 // pred_fallthru
        _
      %p440 = scmp.le.s32.totalorder 1, %s16
      %p441 = scmp.lt.s32.totalorder %s16, 4
      %p442 = pnand %p440, %p441
      %p443 = pneg %p442
      // Predicated region
      $region87: #{net_forward.1} parent=5 // pred_check
        _
      $region88: #{net_forward.1} parent=5 // pred_check_branch
        %445 = sbr.rel (%p442) target = $region90
      $region89: #{net_forward.1} parent=5 // pred_region
        %s446 = ssub.s32 %s16, 1
        %s447 = sand.u32 %s29, 1
        %s448 = sand.u32 %s29, 1
        %s449 = smul.addr %s448, 224
        %s450 = scalar_lea.vmem [#allocation6], %s449
        // Predicated region
        $region91: #{net_forward.1} parent=89 // pred_check
          %p451 = pneg %p42
        $region92: #{net_forward.1} parent=89 // pred_check_branch
          %453 = sbr.rel (%p451) target = $region94
        $region93: #{net_forward.1} parent=89 // pred_region
          _
        $region94: #{net_forward.1} parent=89 // pred_fallthru
          _
        // Predicated region
        $region95: #{net_forward.1} parent=89 // pred_check
          %p454 = pneg %p105
        $region96: #{net_forward.1} parent=89 // pred_check_branch
          %456 = sbr.rel (%p454) target = $region98
        $region97: #{net_forward.1} parent=89 // pred_region
          %458 = dma.done [#allocation8], 20480
        $region98: #{net_forward.1} parent=89 // pred_fallthru
          _
        %s459 = sand.u32 %s29, 1
        %s460 = sand.u32 %s29, 1
        %s461 = smul.addr %s460, 224
        %s462 = scalar_lea.vmem [#allocation6], %s461
        %p463 = pneg %p42
        %p464 = pneg %p39
        %p465 = pneg %p63
        %p466 = pneg %p60
        %p467 = pneg %p84
        %p468 = pneg %p81
        %p469 = pneg %p105
        %p470 = pneg %p102
        %p471 = pneg %p126
        %p472 = pneg %p123
        %p473 = pneg %p147
        %p474 = pneg %p144
        %p475 = pneg %p168
        %p476 = pneg %p165
        %p477 = pneg %p189
        %p478 = pneg %p186
        %p479 = pneg %p210
        %p480 = pneg %p207
        %p481 = pneg %p236
        %p482 = pneg %p233
        %p483 = scmp.lt.s32.totalorder %s21, 2
        %s484 = scalar_select %p483, %s21, 2
        %s485 = smul.addr %s484, 8
        %s486 = scalar_lea.vmem %s9, %s485
        %p487 = scmp.lt.s32.totalorder %s21, 2
        %s488 = scalar_select %p487, %s21, 2
        %s489 = smul.addr %s488, 8
        %s490 = scalar_lea.vmem %s9, %s489
        %v491 = vld [vmem:[%s450] sm:$0xff]
        %v492 = vld [vmem:[%s450 + $0x8] sm:$0xff]
        %v493 = vld [vmem:[%s450 + $0x10] sm:$0xff]
        %v494 = vld [vmem:[%s450 + $0x18] sm:$0xff]
        %v495 = vld [vmem:[%s450 + $0x20] sm:$0xff]
        %v496 = vld [vmem:[%s450 + $0x28] sm:$0xff]
        %v497 = vld [vmem:[%s450 + $0x30] sm:$0xff]
        %v498 = vld [vmem:[%s450 + $0x38] sm:$0xff]
        %v499 = vld [vmem:[%s450 + $0x40] sm:$0xff]
        %v500 = vld [vmem:[%s450 + $0x48] sm:$0xff]
        %v501 = vld [vmem:[%s450 + $0x50] sm:$0xff]
        %v502 = vld [vmem:[%s450 + $0x58] sm:$0xff]
        %v503 = vld [vmem:[%s450 + $0x60] sm:$0xff]
        %v504 = vld [vmem:[%s450 + $0x68] sm:$0xff]
        %v505 = vld [vmem:[%s450 + $0x70] sm:$0xff]
        %v506 = vld [vmem:[%s450 + $0x78] sm:$0xff]
        %v507 = vld [vmem:[%s450 + $0x80] sm:$0xff]
        %v508 = vld [vmem:[%s450 + $0x88] sm:$0xff]
        %v509 = vld [vmem:[%s450 + $0x90] sm:$0xff]
        %v510 = vld [vmem:[%s450 + $0x98] sm:$0xff]
        %v511 = vld [vmem:[%s450 + $0xa0] sm:$0xff]
        %v512 = vld [vmem:[%s450 + $0xa8] sm:$0xff]
        %v513 = vld [vmem:[%s450 + $0xb0] sm:$0xff]
        %v514 = vld [vmem:[%s450 + $0xb8] sm:$0xff]
        %v515 = vld [vmem:[%s1] sm:$0xff]
        %v516 = vld [vmem:[%s1 + $0x8] sm:$0xff]
        %v517 = vld [vmem:[%s1 + $0x10] sm:$0xff]
        %v518 = vld [vmem:[%s1 + $0x18] sm:$0xff]
        %v519 = vld [vmem:[%s1 + $0x20] sm:$0xff]
        %v520 = vld [vmem:[%s1 + $0x28] sm:$0xff]
        %v521 = vld [vmem:[%s1 + $0x30] sm:$0xf]
        %v522 = vld [vmem:[%s1 + $0x38] sm:$0xf]
        %s523 = scalar_lea.vmem %s450, 8 [#allocation6]
        %v524 = vld [vmem:[%s523] sm:$0xff]
        %v525 = vld [vmem:[%s523 + $0x8] sm:$0xff]
        %v526 = vld [vmem:[%s523 + $0x10] sm:$0xff]
        %v527 = vld [vmem:[%s523 + $0x18] sm:$0xff]
        %v528 = vld [vmem:[%s523 + $0x20] sm:$0xff]
        %v529 = vld [vmem:[%s523 + $0x28] sm:$0xff]
        %v530 = vld [vmem:[%s523 + $0x30] sm:$0xff]
        %v531 = vld [vmem:[%s523 + $0x38] sm:$0xff]
        %v532 = vld [vmem:[%s523 + $0x40] sm:$0xff]
        %v533 = vld [vmem:[%s523 + $0x48] sm:$0xff]
        %v534 = vld [vmem:[%s523 + $0x50] sm:$0xff]
        %v535 = vld [vmem:[%s523 + $0x58] sm:$0xff]
        %v536 = vld [vmem:[%s523 + $0x60] sm:$0xff]
        %v537 = vld [vmem:[%s523 + $0x68] sm:$0xff]
        %v538 = vld [vmem:[%s523 + $0x70] sm:$0xff]
        %v539 = vld [vmem:[%s523 + $0x78] sm:$0xff]
        %v540 = vld [vmem:[%s523 + $0x80] sm:$0xff]
        %v541 = vld [vmem:[%s523 + $0x88] sm:$0xff]
        %v542 = vld [vmem:[%s523 + $0x90] sm:$0xff]
        %v543 = vld [vmem:[%s523 + $0x98] sm:$0xff]
        %v544 = vld [vmem:[%s523 + $0xa0] sm:$0xff]
        %v545 = vld [vmem:[%s523 + $0xa8] sm:$0xff]
        %v546 = vld [vmem:[%s523 + $0xb0] sm:$0xff]
        %v547 = vld [vmem:[%s523 + $0xb8] sm:$0xff]
        %s548 = scalar_lea.vmem %s1, 64
        %v549 = vld [vmem:[%s548] sm:$0xff]
        %v550 = vld [vmem:[%s548 + $0x8] sm:$0xff]
        %v551 = vld [vmem:[%s548 + $0x10] sm:$0xff]
        %v552 = vld [vmem:[%s548 + $0x18] sm:$0xff]
        %v553 = vld [vmem:[%s548 + $0x20] sm:$0xff]
        %v554 = vld [vmem:[%s548 + $0x28] sm:$0xff]
        %v555 = vld [vmem:[%s548 + $0x30] sm:$0xf]
        %v556 = vld [vmem:[%s548 + $0x38] sm:$0xf]
        %vm557 = vcmask 228352
        %v559 = vsel %vm557, %v524, 0
        %v562 = vsel %vm557, %v525, 0
        %v565 = vsel %vm557, %v526, 0
        %v568 = vsel %vm557, %v527, 0
        %v571 = vsel %vm557, %v528, 0
        %v574 = vsel %vm557, %v529, 0
        %v577 = vsel %vm557, %v530, 0
        %v580 = vsel %vm557, %v531, 0
        %v583 = vsel %vm557, %v532, 0
        %v586 = vsel %vm557, %v533, 0
        %v589 = vsel %vm557, %v534, 0
        %v592 = vsel %vm557, %v535, 0
        %v595 = vsel %vm557, %v536, 0
        %v598 = vsel %vm557, %v537, 0
        %v601 = vsel %vm557, %v538, 0
        %v604 = vsel %vm557, %v539, 0
        %v607 = vsel %vm557, %v540, 0
        %v610 = vsel %vm557, %v541, 0
        %v613 = vsel %vm557, %v542, 0
        %v616 = vsel %vm557, %v543, 0
        %v619 = vsel %vm557, %v544, 0
        %v622 = vsel %vm557, %v545, 0
        %v625 = vsel %vm557, %v546, 0
        %v628 = vsel %vm557, %v547, 0
        %vm630 = vcmask 1043456
        %v632 = vsel %vm630, %v555, 0
        %v635 = vsel %vm630, %v556, 0
        %637 = vmatpush.msra.mxu0 0.0
        %638 = vmatpush.msra.mxu0 0.0
        %639 = vmatpush.msra.mxu0 0.0
        %640 = vmatpush.msra.mxu0 0.0
        %641 = vmatpush.msra.mxu0 0.0
        %642 = vmatpush.msra.mxu0 0.0
        %643 = vmatpush.msra.mxu0 0.0
        %644 = vmatpush.msra.mxu0 0.0
        %645 = vmatpush.msra.mxu0 0.0
        %646 = vmatpush.msra.mxu0 0.0
        %647 = vmatpush.msra.mxu0 0.0
        %648 = vmatpush.msra.mxu0 0.0
        %649 = vmatpush.msra.mxu0 %v632
        %650 = vmatpush.msra.mxu0 %v553
        %651 = vmatpush.msra.mxu0 %v551
        %652 = vmatpush.msra.mxu0 %v549
        %653 = vmatmul.f32.gmra.mxu0 %v559
        %v654 = vpop.f32.mrf.mxu0
        %v655 = vadd.f32 0.0, %v654
        %656 = vmatmul.f32.gmra.mxu0 %v562
        %v657 = vpop.f32.mrf.mxu0
        %v658 = vadd.f32 0.0, %v657
        %659 = vmatmul.f32.gmra.mxu0 %v565
        %v660 = vpop.f32.mrf.mxu0
        %v661 = vadd.f32 0.0, %v660
        %662 = vmatmul.f32.gmra.mxu0 %v568
        %v663 = vpop.f32.mrf.mxu0
        %v664 = vadd.f32 0.0, %v663
        %665 = vmatmul.f32.gmra.mxu0 %v571
        %v666 = vpop.f32.mrf.mxu0
        %v667 = vadd.f32 0.0, %v666
        %668 = vmatmul.f32.gmra.mxu0 %v574
        %v669 = vpop.f32.mrf.mxu0
        %v670 = vadd.f32 0.0, %v669
        %671 = vmatmul.f32.gmra.mxu0 %v577
        %v672 = vpop.f32.mrf.mxu0
        %v673 = vadd.f32 0.0, %v672
        %674 = vmatmul.f32.gmra.mxu0 %v580
        %v675 = vpop.f32.mrf.mxu0
        %v676 = vadd.f32 0.0, %v675
        %677 = vmatmul.f32.gmra.mxu0 %v583
        %v678 = vpop.f32.mrf.mxu0
        %v679 = vadd.f32 0.0, %v678
        %680 = vmatmul.f32.gmra.mxu0 %v586
        %v681 = vpop.f32.mrf.mxu0
        %v682 = vadd.f32 0.0, %v681
        %683 = vmatmul.f32.gmra.mxu0 %v589
        %v684 = vpop.f32.mrf.mxu0
        %v685 = vadd.f32 0.0, %v684
        %686 = vmatmul.f32.gmra.mxu0 %v592
        %v687 = vpop.f32.mrf.mxu0
        %v688 = vadd.f32 0.0, %v687
        %689 = vmatmul.f32.gmra.mxu0 %v595
        %v690 = vpop.f32.mrf.mxu0
        %v691 = vadd.f32 0.0, %v690
        %692 = vmatmul.f32.gmra.mxu0 %v598
        %v693 = vpop.f32.mrf.mxu0
        %v694 = vadd.f32 0.0, %v693
        %695 = vmatmul.f32.gmra.mxu0 %v601
        %v696 = vpop.f32.mrf.mxu0
        %v697 = vadd.f32 0.0, %v696
        %698 = vmatmul.f32.gmra.mxu0 %v604
        %v699 = vpop.f32.mrf.mxu0
        %v700 = vadd.f32 0.0, %v699
        %701 = vmatmul.f32.gmra.mxu0 %v607
        %v702 = vpop.f32.mrf.mxu0
        %v703 = vadd.f32 0.0, %v702
        %704 = vmatmul.f32.gmra.mxu0 %v610
        %v705 = vpop.f32.mrf.mxu0
        %v706 = vadd.f32 0.0, %v705
        %707 = vmatmul.f32.gmra.mxu0 %v613
        %v708 = vpop.f32.mrf.mxu0
        %v709 = vadd.f32 0.0, %v708
        %710 = vmatmul.f32.gmra.mxu0 %v616
        %v711 = vpop.f32.mrf.mxu0
        %v712 = vadd.f32 0.0, %v711
        %713 = vmatmul.f32.gmra.mxu0 %v619
        %v714 = vpop.f32.mrf.mxu0
        %v715 = vadd.f32 0.0, %v714
        %716 = vmatmul.f32.gmra.mxu0 %v622
        %v717 = vpop.f32.mrf.mxu0
        %v718 = vadd.f32 0.0, %v717
        %719 = vmatmul.f32.gmra.mxu0 %v625
        %v720 = vpop.f32.mrf.mxu0
        %v721 = vadd.f32 0.0, %v720
        %722 = vmatmul.f32.gmra.mxu0 %v628
        %v723 = vpop.f32.mrf.mxu0
        %v724 = vadd.f32 0.0, %v723
        %725 = vdwg.mxu0
        %726 = vmatpush.msra.mxu0 0.0
        %727 = vmatpush.msra.mxu0 0.0
        %728 = vmatpush.msra.mxu0 0.0
        %729 = vmatpush.msra.mxu0 0.0
        %730 = vmatpush.msra.mxu0 0.0
        %731 = vmatpush.msra.mxu0 0.0
        %732 = vmatpush.msra.mxu0 0.0
        %733 = vmatpush.msra.mxu0 0.0
        %734 = vmatpush.msra.mxu0 0.0
        %735 = vmatpush.msra.mxu0 0.0
        %736 = vmatpush.msra.mxu0 0.0
        %737 = vmatpush.msra.mxu0 0.0
        %738 = vmatpush.msra.mxu0 %v635
        %739 = vmatpush.msra.mxu0 %v554
        %740 = vmatpush.msra.mxu0 %v552
        %741 = vmatpush.msra.mxu0 %v550
        %742 = vmatmul.f32.gmra.mxu0 %v559
        %v743 = vpop.f32.mrf.mxu0
        %v744 = vadd.f32 0.0, %v743
        %745 = vmatmul.f32.gmra.mxu0 %v562
        %v746 = vpop.f32.mrf.mxu0
        %v747 = vadd.f32 0.0, %v746
        %748 = vmatmul.f32.gmra.mxu0 %v565
        %v749 = vpop.f32.mrf.mxu0
        %v750 = vadd.f32 0.0, %v749
        %751 = vmatmul.f32.gmra.mxu0 %v568
        %v752 = vpop.f32.mrf.mxu0
        %v753 = vadd.f32 0.0, %v752
        %754 = vmatmul.f32.gmra.mxu0 %v571
        %v755 = vpop.f32.mrf.mxu0
        %v756 = vadd.f32 0.0, %v755
        %757 = vmatmul.f32.gmra.mxu0 %v574
        %v758 = vpop.f32.mrf.mxu0
        %v759 = vadd.f32 0.0, %v758
        %760 = vmatmul.f32.gmra.mxu0 %v577
        %v761 = vpop.f32.mrf.mxu0
        %v762 = vadd.f32 0.0, %v761
        %763 = vmatmul.f32.gmra.mxu0 %v580
        %v764 = vpop.f32.mrf.mxu0
        %v765 = vadd.f32 0.0, %v764
        %766 = vmatmul.f32.gmra.mxu0 %v583
        %v767 = vpop.f32.mrf.mxu0
        %v768 = vadd.f32 0.0, %v767
        %769 = vmatmul.f32.gmra.mxu0 %v586
        %v770 = vpop.f32.mrf.mxu0
        %v771 = vadd.f32 0.0, %v770
        %772 = vmatmul.f32.gmra.mxu0 %v589
        %v773 = vpop.f32.mrf.mxu0
        %v774 = vadd.f32 0.0, %v773
        %775 = vmatmul.f32.gmra.mxu0 %v592
        %v776 = vpop.f32.mrf.mxu0
        %v777 = vadd.f32 0.0, %v776
        %778 = vmatmul.f32.gmra.mxu0 %v595
        %v779 = vpop.f32.mrf.mxu0
        %v780 = vadd.f32 0.0, %v779
        %781 = vmatmul.f32.gmra.mxu0 %v598
        %v782 = vpop.f32.mrf.mxu0
        %v783 = vadd.f32 0.0, %v782
        %784 = vmatmul.f32.gmra.mxu0 %v601
        %v785 = vpop.f32.mrf.mxu0
        %v786 = vadd.f32 0.0, %v785
        %787 = vmatmul.f32.gmra.mxu0 %v604
        %v788 = vpop.f32.mrf.mxu0
        %v789 = vadd.f32 0.0, %v788
        %790 = vmatmul.f32.gmra.mxu0 %v607
        %v791 = vpop.f32.mrf.mxu0
        %v792 = vadd.f32 0.0, %v791
        %793 = vmatmul.f32.gmra.mxu0 %v610
        %v794 = vpop.f32.mrf.mxu0
        %v795 = vadd.f32 0.0, %v794
        %796 = vmatmul.f32.gmra.mxu0 %v613
        %v797 = vpop.f32.mrf.mxu0
        %v798 = vadd.f32 0.0, %v797
        %799 = vmatmul.f32.gmra.mxu0 %v616
        %v800 = vpop.f32.mrf.mxu0
        %v801 = vadd.f32 0.0, %v800
        %802 = vmatmul.f32.gmra.mxu0 %v619
        %v803 = vpop.f32.mrf.mxu0
        %v804 = vadd.f32 0.0, %v803
        %805 = vmatmul.f32.gmra.mxu0 %v622
        %v806 = vpop.f32.mrf.mxu0
        %v807 = vadd.f32 0.0, %v806
        %808 = vmatmul.f32.gmra.mxu0 %v625
        %v809 = vpop.f32.mrf.mxu0
        %v810 = vadd.f32 0.0, %v809
        %811 = vmatmul.f32.gmra.mxu0 %v628
        %v812 = vpop.f32.mrf.mxu0
        %v813 = vadd.f32 0.0, %v812
        %814 = vdwg.mxu0
        %v816 = vsel %vm557, %v491, 0
        %v819 = vsel %vm557, %v492, 0
        %v822 = vsel %vm557, %v493, 0
        %v825 = vsel %vm557, %v494, 0
        %v828 = vsel %vm557, %v495, 0
        %v831 = vsel %vm557, %v496, 0
        %v834 = vsel %vm557, %v497, 0
        %v837 = vsel %vm557, %v498, 0
        %v840 = vsel %vm557, %v499, 0
        %v843 = vsel %vm557, %v500, 0
        %v846 = vsel %vm557, %v501, 0
        %v849 = vsel %vm557, %v502, 0
        %v852 = vsel %vm557, %v503, 0
        %v855 = vsel %vm557, %v504, 0
        %v858 = vsel %vm557, %v505, 0
        %v861 = vsel %vm557, %v506, 0
        %v864 = vsel %vm557, %v507, 0
        %v867 = vsel %vm557, %v508, 0
        %v870 = vsel %vm557, %v509, 0
        %v873 = vsel %vm557, %v510, 0
        %v876 = vsel %vm557, %v511, 0
        %v879 = vsel %vm557, %v512, 0
        %v882 = vsel %vm557, %v513, 0
        %v885 = vsel %vm557, %v514, 0
        %v888 = vsel %vm630, %v521, 0
        %v891 = vsel %vm630, %v522, 0
        %893 = vmatpush.msra.mxu0 0.0
        %894 = vmatpush.msra.mxu0 0.0
        %895 = vmatpush.msra.mxu0 0.0
        %896 = vmatpush.msra.mxu0 0.0
        %897 = vmatpush.msra.mxu0 0.0
        %898 = vmatpush.msra.mxu0 0.0
        %899 = vmatpush.msra.mxu0 0.0
        %900 = vmatpush.msra.mxu0 0.0
        %901 = vmatpush.msra.mxu0 0.0
        %902 = vmatpush.msra.mxu0 0.0
        %903 = vmatpush.msra.mxu0 0.0
        %904 = vmatpush.msra.mxu0 0.0
        %905 = vmatpush.msra.mxu0 %v888
        %906 = vmatpush.msra.mxu0 %v519
        %907 = vmatpush.msra.mxu0 %v517
        %908 = vmatpush.msra.mxu0 %v515
        %909 = vmatmul.f32.gmra.mxu0 %v816
        %v910 = vpop.f32.mrf.mxu0
        %v911 = vadd.f32 %v655, %v910
        %912 = vmatmul.f32.gmra.mxu0 %v819
        %v913 = vpop.f32.mrf.mxu0
        %v914 = vadd.f32 %v658, %v913
        %915 = vmatmul.f32.gmra.mxu0 %v822
        %v916 = vpop.f32.mrf.mxu0
        %v917 = vadd.f32 %v661, %v916
        %918 = vmatmul.f32.gmra.mxu0 %v825
        %v919 = vpop.f32.mrf.mxu0
        %v920 = vadd.f32 %v664, %v919
        %921 = vmatmul.f32.gmra.mxu0 %v828
        %v922 = vpop.f32.mrf.mxu0
        %v923 = vadd.f32 %v667, %v922
        %924 = vmatmul.f32.gmra.mxu0 %v831
        %v925 = vpop.f32.mrf.mxu0
        %v926 = vadd.f32 %v670, %v925
        %927 = vmatmul.f32.gmra.mxu0 %v834
        %v928 = vpop.f32.mrf.mxu0
        %v929 = vadd.f32 %v673, %v928
        %930 = vmatmul.f32.gmra.mxu0 %v837
        %v931 = vpop.f32.mrf.mxu0
        %v932 = vadd.f32 %v676, %v931
        %933 = vmatmul.f32.gmra.mxu0 %v840
        %v934 = vpop.f32.mrf.mxu0
        %v935 = vadd.f32 %v679, %v934
        %936 = vmatmul.f32.gmra.mxu0 %v843
        %v937 = vpop.f32.mrf.mxu0
        %v938 = vadd.f32 %v682, %v937
        %939 = vmatmul.f32.gmra.mxu0 %v846
        %v940 = vpop.f32.mrf.mxu0
        %v941 = vadd.f32 %v685, %v940
        %942 = vmatmul.f32.gmra.mxu0 %v849
        %v943 = vpop.f32.mrf.mxu0
        %v944 = vadd.f32 %v688, %v943
        %945 = vmatmul.f32.gmra.mxu0 %v852
        %v946 = vpop.f32.mrf.mxu0
        %v947 = vadd.f32 %v691, %v946
        %948 = vmatmul.f32.gmra.mxu0 %v855
        %v949 = vpop.f32.mrf.mxu0
        %v950 = vadd.f32 %v694, %v949
        %951 = vmatmul.f32.gmra.mxu0 %v858
        %v952 = vpop.f32.mrf.mxu0
        %v953 = vadd.f32 %v697, %v952
        %954 = vmatmul.f32.gmra.mxu0 %v861
        %v955 = vpop.f32.mrf.mxu0
        %v956 = vadd.f32 %v700, %v955
        %957 = vmatmul.f32.gmra.mxu0 %v864
        %v958 = vpop.f32.mrf.mxu0
        %v959 = vadd.f32 %v703, %v958
        %960 = vmatmul.f32.gmra.mxu0 %v867
        %v961 = vpop.f32.mrf.mxu0
        %v962 = vadd.f32 %v706, %v961
        %963 = vmatmul.f32.gmra.mxu0 %v870
        %v964 = vpop.f32.mrf.mxu0
        %v965 = vadd.f32 %v709, %v964
        %966 = vmatmul.f32.gmra.mxu0 %v873
        %v967 = vpop.f32.mrf.mxu0
        %v968 = vadd.f32 %v712, %v967
        %969 = vmatmul.f32.gmra.mxu0 %v876
        %v970 = vpop.f32.mrf.mxu0
        %v971 = vadd.f32 %v715, %v970
        %972 = vmatmul.f32.gmra.mxu0 %v879
        %v973 = vpop.f32.mrf.mxu0
        %v974 = vadd.f32 %v718, %v973
        %975 = vmatmul.f32.gmra.mxu0 %v882
        %v976 = vpop.f32.mrf.mxu0
        %v977 = vadd.f32 %v721, %v976
        %978 = vmatmul.f32.gmra.mxu0 %v885
        %v979 = vpop.f32.mrf.mxu0
        %v980 = vadd.f32 %v724, %v979
        %981 = vdwg.mxu0
        %982 = vmatpush.msra.mxu0 0.0
        %983 = vmatpush.msra.mxu0 0.0
        %984 = vmatpush.msra.mxu0 0.0
        %985 = vmatpush.msra.mxu0 0.0
        %986 = vmatpush.msra.mxu0 0.0
        %987 = vmatpush.msra.mxu0 0.0
        %988 = vmatpush.msra.mxu0 0.0
        %989 = vmatpush.msra.mxu0 0.0
        %990 = vmatpush.msra.mxu0 0.0
        %991 = vmatpush.msra.mxu0 0.0
        %992 = vmatpush.msra.mxu0 0.0
        %993 = vmatpush.msra.mxu0 0.0
        %994 = vmatpush.msra.mxu0 %v891
        %995 = vmatpush.msra.mxu0 %v520
        %996 = vmatpush.msra.mxu0 %v518
        %997 = vmatpush.msra.mxu0 %v516
        %998 = vmatmul.f32.gmra.mxu0 %v816
        %v999 = vpop.f32.mrf.mxu0
        %v1000 = vadd.f32 %v744, %v999
        %1001 = vmatmul.f32.gmra.mxu0 %v819
        %v1002 = vpop.f32.mrf.mxu0
        %v1003 = vadd.f32 %v747, %v1002
        %1004 = vmatmul.f32.gmra.mxu0 %v822
        %v1005 = vpop.f32.mrf.mxu0
        %v1006 = vadd.f32 %v750, %v1005
        %1007 = vmatmul.f32.gmra.mxu0 %v825
        %v1008 = vpop.f32.mrf.mxu0
        %v1009 = vadd.f32 %v753, %v1008
        %1010 = vmatmul.f32.gmra.mxu0 %v828
        %v1011 = vpop.f32.mrf.mxu0
        %v1012 = vadd.f32 %v756, %v1011
        %1013 = vmatmul.f32.gmra.mxu0 %v831
        %v1014 = vpop.f32.mrf.mxu0
        %v1015 = vadd.f32 %v759, %v1014
        %1016 = vmatmul.f32.gmra.mxu0 %v834
        %v1017 = vpop.f32.mrf.mxu0
        %v1018 = vadd.f32 %v762, %v1017
        %1019 = vmatmul.f32.gmra.mxu0 %v837
        %v1020 = vpop.f32.mrf.mxu0
        %v1021 = vadd.f32 %v765, %v1020
        %1022 = vmatmul.f32.gmra.mxu0 %v840
        %v1023 = vpop.f32.mrf.mxu0
        %v1024 = vadd.f32 %v768, %v1023
        %1025 = vmatmul.f32.gmra.mxu0 %v843
        %v1026 = vpop.f32.mrf.mxu0
        %v1027 = vadd.f32 %v771, %v1026
        %1028 = vmatmul.f32.gmra.mxu0 %v846
        %v1029 = vpop.f32.mrf.mxu0
        %v1030 = vadd.f32 %v774, %v1029
        %1031 = vmatmul.f32.gmra.mxu0 %v849
        %v1032 = vpop.f32.mrf.mxu0
        %v1033 = vadd.f32 %v777, %v1032
        %1034 = vmatmul.f32.gmra.mxu0 %v852
        %v1035 = vpop.f32.mrf.mxu0
        %v1036 = vadd.f32 %v780, %v1035
        %1037 = vmatmul.f32.gmra.mxu0 %v855
        %v1038 = vpop.f32.mrf.mxu0
        %v1039 = vadd.f32 %v783, %v1038
        %1040 = vmatmul.f32.gmra.mxu0 %v858
        %v1041 = vpop.f32.mrf.mxu0
        %v1042 = vadd.f32 %v786, %v1041
        %1043 = vmatmul.f32.gmra.mxu0 %v861
        %v1044 = vpop.f32.mrf.mxu0
        %v1045 = vadd.f32 %v789, %v1044
        %1046 = vmatmul.f32.gmra.mxu0 %v864
        %v1047 = vpop.f32.mrf.mxu0
        %v1048 = vadd.f32 %v792, %v1047
        %1049 = vmatmul.f32.gmra.mxu0 %v867
        %v1050 = vpop.f32.mrf.mxu0
        %v1051 = vadd.f32 %v795, %v1050
        %1052 = vmatmul.f32.gmra.mxu0 %v870
        %v1053 = vpop.f32.mrf.mxu0
        %v1054 = vadd.f32 %v798, %v1053
        %1055 = vmatmul.f32.gmra.mxu0 %v873
        %v1056 = vpop.f32.mrf.mxu0
        %v1057 = vadd.f32 %v801, %v1056
        %1058 = vmatmul.f32.gmra.mxu0 %v876
        %v1059 = vpop.f32.mrf.mxu0
        %v1060 = vadd.f32 %v804, %v1059
        %1061 = vmatmul.f32.gmra.mxu0 %v879
        %v1062 = vpop.f32.mrf.mxu0
        %v1063 = vadd.f32 %v807, %v1062
        %1064 = vmatmul.f32.gmra.mxu0 %v882
        %v1065 = vpop.f32.mrf.mxu0
        %v1066 = vadd.f32 %v810, %v1065
        %1067 = vmatmul.f32.gmra.mxu0 %v885
        %v1068 = vpop.f32.mrf.mxu0
        %v1069 = vadd.f32 %v813, %v1068
        %1070 = vdwg.mxu0
        %s1071 = scalar_lea.vmem %s450, 16 [#allocation6]
        %v1072 = vld [vmem:[%s1071] sm:$0xff]
        %v1073 = vld [vmem:[%s1071 + $0x8] sm:$0xff]
        %v1074 = vld [vmem:[%s1071 + $0x10] sm:$0xff]
        %v1075 = vld [vmem:[%s1071 + $0x18] sm:$0xff]
        %v1076 = vld [vmem:[%s1071 + $0x20] sm:$0xff]
        %v1077 = vld [vmem:[%s1071 + $0x28] sm:$0xff]
        %v1078 = vld [vmem:[%s1071 + $0x30] sm:$0xff]
        %v1079 = vld [vmem:[%s1071 + $0x38] sm:$0xff]
        %v1080 = vld [vmem:[%s1071 + $0x40] sm:$0xff]
        %v1081 = vld [vmem:[%s1071 + $0x48] sm:$0xff]
        %v1082 = vld [vmem:[%s1071 + $0x50] sm:$0xff]
        %v1083 = vld [vmem:[%s1071 + $0x58] sm:$0xff]
        %v1084 = vld [vmem:[%s1071 + $0x60] sm:$0xff]
        %v1085 = vld [vmem:[%s1071 + $0x68] sm:$0xff]
        %v1086 = vld [vmem:[%s1071 + $0x70] sm:$0xff]
        %v1087 = vld [vmem:[%s1071 + $0x78] sm:$0xff]
        %v1088 = vld [vmem:[%s1071 + $0x80] sm:$0xff]
        %v1089 = vld [vmem:[%s1071 + $0x88] sm:$0xff]
        %v1090 = vld [vmem:[%s1071 + $0x90] sm:$0xff]
        %v1091 = vld [vmem:[%s1071 + $0x98] sm:$0xff]
        %v1092 = vld [vmem:[%s1071 + $0xa0] sm:$0xff]
        %v1093 = vld [vmem:[%s1071 + $0xa8] sm:$0xff]
        %v1094 = vld [vmem:[%s1071 + $0xb0] sm:$0xff]
        %v1095 = vld [vmem:[%s1071 + $0xb8] sm:$0xff]
        %s1096 = scalar_lea.vmem %s1, 128
        %v1097 = vld [vmem:[%s1096] sm:$0xff]
        %v1098 = vld [vmem:[%s1096 + $0x8] sm:$0xff]
        %v1099 = vld [vmem:[%s1096 + $0x10] sm:$0xff]
        %v1100 = vld [vmem:[%s1096 + $0x18] sm:$0xff]
        %v1101 = vld [vmem:[%s1096 + $0x20] sm:$0xff]
        %v1102 = vld [vmem:[%s1096 + $0x28] sm:$0xff]
        %v1103 = vld [vmem:[%s1096 + $0x30] sm:$0xf]
        %v1104 = vld [vmem:[%s1096 + $0x38] sm:$0xf]
        %v1106 = vsel %vm557, %v1072, 0
        %v1109 = vsel %vm557, %v1073, 0
        %v1112 = vsel %vm557, %v1074, 0
        %v1115 = vsel %vm557, %v1075, 0
        %v1118 = vsel %vm557, %v1076, 0
        %v1121 = vsel %vm557, %v1077, 0
        %v1124 = vsel %vm557, %v1078, 0
        %v1127 = vsel %vm557, %v1079, 0
        %v1130 = vsel %vm557, %v1080, 0
        %v1133 = vsel %vm557, %v1081, 0
        %v1136 = vsel %vm557, %v1082, 0
        %v1139 = vsel %vm557, %v1083, 0
        %v1142 = vsel %vm557, %v1084, 0
        %v1145 = vsel %vm557, %v1085, 0
        %v1148 = vsel %vm557, %v1086, 0
        %v1151 = vsel %vm557, %v1087, 0
        %v1154 = vsel %vm557, %v1088, 0
        %v1157 = vsel %vm557, %v1089, 0
        %v1160 = vsel %vm557, %v1090, 0
        %v1163 = vsel %vm557, %v1091, 0
        %v1166 = vsel %vm557, %v1092, 0
        %v1169 = vsel %vm557, %v1093, 0
        %v1172 = vsel %vm557, %v1094, 0
        %v1175 = vsel %vm557, %v1095, 0
        %v1178 = vsel %vm630, %v1103, 0
        %v1181 = vsel %vm630, %v1104, 0
        %1183 = vmatpush.msra.mxu0 0.0
        %1184 = vmatpush.msra.mxu0 0.0
        %1185 = vmatpush.msra.mxu0 0.0
        %1186 = vmatpush.msra.mxu0 0.0
        %1187 = vmatpush.msra.mxu0 0.0
        %1188 = vmatpush.msra.mxu0 0.0
        %1189 = vmatpush.msra.mxu0 0.0
        %1190 = vmatpush.msra.mxu0 0.0
        %1191 = vmatpush.msra.mxu0 0.0
        %1192 = vmatpush.msra.mxu0 0.0
        %1193 = vmatpush.msra.mxu0 0.0
        %1194 = vmatpush.msra.mxu0 0.0
        %1195 = vmatpush.msra.mxu0 %v1178
        %1196 = vmatpush.msra.mxu0 %v1101
        %1197 = vmatpush.msra.mxu0 %v1099
        %1198 = vmatpush.msra.mxu0 %v1097
        %1199 = vmatmul.f32.gmra.mxu0 %v1106
        %v1200 = vpop.f32.mrf.mxu0
        %v1201 = vadd.f32 0.0, %v1200
        %1202 = vmatmul.f32.gmra.mxu0 %v1109
        %v1203 = vpop.f32.mrf.mxu0
        %v1204 = vadd.f32 0.0, %v1203
        %1205 = vmatmul.f32.gmra.mxu0 %v1112
        %v1206 = vpop.f32.mrf.mxu0
        %v1207 = vadd.f32 0.0, %v1206
        %1208 = vmatmul.f32.gmra.mxu0 %v1115
        %v1209 = vpop.f32.mrf.mxu0
        %v1210 = vadd.f32 0.0, %v1209
        %1211 = vmatmul.f32.gmra.mxu0 %v1118
        %v1212 = vpop.f32.mrf.mxu0
        %v1213 = vadd.f32 0.0, %v1212
        %1214 = vmatmul.f32.gmra.mxu0 %v1121
        %v1215 = vpop.f32.mrf.mxu0
        %v1216 = vadd.f32 0.0, %v1215
        %1217 = vmatmul.f32.gmra.mxu0 %v1124
        %v1218 = vpop.f32.mrf.mxu0
        %v1219 = vadd.f32 0.0, %v1218
        %1220 = vmatmul.f32.gmra.mxu0 %v1127
        %v1221 = vpop.f32.mrf.mxu0
        %v1222 = vadd.f32 0.0, %v1221
        %1223 = vmatmul.f32.gmra.mxu0 %v1130
        %v1224 = vpop.f32.mrf.mxu0
        %v1225 = vadd.f32 0.0, %v1224
        %1226 = vmatmul.f32.gmra.mxu0 %v1133
        %v1227 = vpop.f32.mrf.mxu0
        %v1228 = vadd.f32 0.0, %v1227
        %1229 = vmatmul.f32.gmra.mxu0 %v1136
        %v1230 = vpop.f32.mrf.mxu0
        %v1231 = vadd.f32 0.0, %v1230
        %1232 = vmatmul.f32.gmra.mxu0 %v1139
        %v1233 = vpop.f32.mrf.mxu0
        %v1234 = vadd.f32 0.0, %v1233
        %1235 = vmatmul.f32.gmra.mxu0 %v1142
        %v1236 = vpop.f32.mrf.mxu0
        %v1237 = vadd.f32 0.0, %v1236
        %1238 = vmatmul.f32.gmra.mxu0 %v1145
        %v1239 = vpop.f32.mrf.mxu0
        %v1240 = vadd.f32 0.0, %v1239
        %1241 = vmatmul.f32.gmra.mxu0 %v1148
        %v1242 = vpop.f32.mrf.mxu0
        %v1243 = vadd.f32 0.0, %v1242
        %1244 = vmatmul.f32.gmra.mxu0 %v1151
        %v1245 = vpop.f32.mrf.mxu0
        %v1246 = vadd.f32 0.0, %v1245
        %1247 = vmatmul.f32.gmra.mxu0 %v1154
        %v1248 = vpop.f32.mrf.mxu0
        %v1249 = vadd.f32 0.0, %v1248
        %1250 = vmatmul.f32.gmra.mxu0 %v1157
        %v1251 = vpop.f32.mrf.mxu0
        %v1252 = vadd.f32 0.0, %v1251
        %1253 = vmatmul.f32.gmra.mxu0 %v1160
        %v1254 = vpop.f32.mrf.mxu0
        %v1255 = vadd.f32 0.0, %v1254
        %1256 = vmatmul.f32.gmra.mxu0 %v1163
        %v1257 = vpop.f32.mrf.mxu0
        %v1258 = vadd.f32 0.0, %v1257
        %1259 = vmatmul.f32.gmra.mxu0 %v1166
        %v1260 = vpop.f32.mrf.mxu0
        %v1261 = vadd.f32 0.0, %v1260
        %1262 = vmatmul.f32.gmra.mxu0 %v1169
        %v1263 = vpop.f32.mrf.mxu0
        %v1264 = vadd.f32 0.0, %v1263
        %1265 = vmatmul.f32.gmra.mxu0 %v1172
        %v1266 = vpop.f32.mrf.mxu0
        %v1267 = vadd.f32 0.0, %v1266
        %1268 = vmatmul.f32.gmra.mxu0 %v1175
        %v1269 = vpop.f32.mrf.mxu0
        %v1270 = vadd.f32 0.0, %v1269
        %1271 = vdwg.mxu0
        %1272 = vmatpush.msra.mxu0 0.0
        %1273 = vmatpush.msra.mxu0 0.0
        %1274 = vmatpush.msra.mxu0 0.0
        %1275 = vmatpush.msra.mxu0 0.0
        %1276 = vmatpush.msra.mxu0 0.0
        %1277 = vmatpush.msra.mxu0 0.0
        %1278 = vmatpush.msra.mxu0 0.0
        %1279 = vmatpush.msra.mxu0 0.0
        %1280 = vmatpush.msra.mxu0 0.0
        %1281 = vmatpush.msra.mxu0 0.0
        %1282 = vmatpush.msra.mxu0 0.0
        %1283 = vmatpush.msra.mxu0 0.0
        %1284 = vmatpush.msra.mxu0 %v1181
        %1285 = vmatpush.msra.mxu0 %v1102
        %1286 = vmatpush.msra.mxu0 %v1100
        %1287 = vmatpush.msra.mxu0 %v1098
        %1288 = vmatmul.f32.gmra.mxu0 %v1106
        %v1289 = vpop.f32.mrf.mxu0
        %v1290 = vadd.f32 0.0, %v1289
        %1291 = vmatmul.f32.gmra.mxu0 %v1109
        %v1292 = vpop.f32.mrf.mxu0
        %v1293 = vadd.f32 0.0, %v1292
        %1294 = vmatmul.f32.gmra.mxu0 %v1112
        %v1295 = vpop.f32.mrf.mxu0
        %v1296 = vadd.f32 0.0, %v1295
        %1297 = vmatmul.f32.gmra.mxu0 %v1115
        %v1298 = vpop.f32.mrf.mxu0
        %v1299 = vadd.f32 0.0, %v1298
        %1300 = vmatmul.f32.gmra.mxu0 %v1118
        %v1301 = vpop.f32.mrf.mxu0
        %v1302 = vadd.f32 0.0, %v1301
        %1303 = vmatmul.f32.gmra.mxu0 %v1121
        %v1304 = vpop.f32.mrf.mxu0
        %v1305 = vadd.f32 0.0, %v1304
        %1306 = vmatmul.f32.gmra.mxu0 %v1124
        %v1307 = vpop.f32.mrf.mxu0
        %v1308 = vadd.f32 0.0, %v1307
        %1309 = vmatmul.f32.gmra.mxu0 %v1127
        %v1310 = vpop.f32.mrf.mxu0
        %v1311 = vadd.f32 0.0, %v1310
        %1312 = vmatmul.f32.gmra.mxu0 %v1130
        %v1313 = vpop.f32.mrf.mxu0
        %v1314 = vadd.f32 0.0, %v1313
        %1315 = vmatmul.f32.gmra.mxu0 %v1133
        %v1316 = vpop.f32.mrf.mxu0
        %v1317 = vadd.f32 0.0, %v1316
        %1318 = vmatmul.f32.gmra.mxu0 %v1136
        %v1319 = vpop.f32.mrf.mxu0
        %v1320 = vadd.f32 0.0, %v1319
        %1321 = vmatmul.f32.gmra.mxu0 %v1139
        %v1322 = vpop.f32.mrf.mxu0
        %v1323 = vadd.f32 0.0, %v1322
        %1324 = vmatmul.f32.gmra.mxu0 %v1142
        %v1325 = vpop.f32.mrf.mxu0
        %v1326 = vadd.f32 0.0, %v1325
        %1327 = vmatmul.f32.gmra.mxu0 %v1145
        %v1328 = vpop.f32.mrf.mxu0
        %v1329 = vadd.f32 0.0, %v1328
        %1330 = vmatmul.f32.gmra.mxu0 %v1148
        %v1331 = vpop.f32.mrf.mxu0
        %v1332 = vadd.f32 0.0, %v1331
        %1333 = vmatmul.f32.gmra.mxu0 %v1151
        %v1334 = vpop.f32.mrf.mxu0
        %v1335 = vadd.f32 0.0, %v1334
        %1336 = vmatmul.f32.gmra.mxu0 %v1154
        %v1337 = vpop.f32.mrf.mxu0
        %v1338 = vadd.f32 0.0, %v1337
        %1339 = vmatmul.f32.gmra.mxu0 %v1157
        %v1340 = vpop.f32.mrf.mxu0
        %v1341 = vadd.f32 0.0, %v1340
        %1342 = vmatmul.f32.gmra.mxu0 %v1160
        %v1343 = vpop.f32.mrf.mxu0
        %v1344 = vadd.f32 0.0, %v1343
        %1345 = vmatmul.f32.gmra.mxu0 %v1163
        %v1346 = vpop.f32.mrf.mxu0
        %v1347 = vadd.f32 0.0, %v1346
        %1348 = vmatmul.f32.gmra.mxu0 %v1166
        %v1349 = vpop.f32.mrf.mxu0
        %v1350 = vadd.f32 0.0, %v1349
        %1351 = vmatmul.f32.gmra.mxu0 %v1169
        %v1352 = vpop.f32.mrf.mxu0
        %v1353 = vadd.f32 0.0, %v1352
        %1354 = vmatmul.f32.gmra.mxu0 %v1172
        %v1355 = vpop.f32.mrf.mxu0
        %v1356 = vadd.f32 0.0, %v1355
        %1357 = vmatmul.f32.gmra.mxu0 %v1175
        %v1358 = vpop.f32.mrf.mxu0
        %v1359 = vadd.f32 0.0, %v1358
        %1360 = vdwg.mxu0
        %v1361 = vadd.f32 %v911, %v1201
        %v1362 = vadd.f32 %v1000, %v1290
        %v1363 = vadd.f32 %v914, %v1204
        %v1364 = vadd.f32 %v1003, %v1293
        %v1365 = vadd.f32 %v917, %v1207
        %v1366 = vadd.f32 %v1006, %v1296
        %v1367 = vadd.f32 %v920, %v1210
        %v1368 = vadd.f32 %v1009, %v1299
        %v1369 = vadd.f32 %v923, %v1213
        %v1370 = vadd.f32 %v1012, %v1302
        %v1371 = vadd.f32 %v926, %v1216
        %v1372 = vadd.f32 %v1015, %v1305
        %v1373 = vadd.f32 %v929, %v1219
        %v1374 = vadd.f32 %v1018, %v1308
        %v1375 = vadd.f32 %v932, %v1222
        %v1376 = vadd.f32 %v1021, %v1311
        %v1377 = vadd.f32 %v935, %v1225
        %v1378 = vadd.f32 %v1024, %v1314
        %v1379 = vadd.f32 %v938, %v1228
        %v1380 = vadd.f32 %v1027, %v1317
        %v1381 = vadd.f32 %v941, %v1231
        %v1382 = vadd.f32 %v1030, %v1320
        %v1383 = vadd.f32 %v944, %v1234
        %v1384 = vadd.f32 %v1033, %v1323
        %v1385 = vadd.f32 %v947, %v1237
        %v1386 = vadd.f32 %v1036, %v1326
        %v1387 = vadd.f32 %v950, %v1240
        %v1388 = vadd.f32 %v1039, %v1329
        %v1389 = vadd.f32 %v953, %v1243
        %v1390 = vadd.f32 %v1042, %v1332
        %v1391 = vadd.f32 %v956, %v1246
        %v1392 = vadd.f32 %v1045, %v1335
        %v1393 = vadd.f32 %v959, %v1249
        %v1394 = vadd.f32 %v1048, %v1338
        %v1395 = vadd.f32 %v962, %v1252
        %v1396 = vadd.f32 %v1051, %v1341
        %v1397 = vadd.f32 %v965, %v1255
        %v1398 = vadd.f32 %v1054, %v1344
        %v1399 = vadd.f32 %v968, %v1258
        %v1400 = vadd.f32 %v1057, %v1347
        %v1401 = vadd.f32 %v971, %v1261
        %v1402 = vadd.f32 %v1060, %v1350
        %v1403 = vadd.f32 %v974, %v1264
        %v1404 = vadd.f32 %v1063, %v1353
        %v1405 = vadd.f32 %v977, %v1267
        %v1406 = vadd.f32 %v1066, %v1356
        %v1407 = vadd.f32 %v980, %v1270
        %v1408 = vadd.f32 %v1069, %v1359
        %s1409 = scalar_lea.vmem %s450, 24 [#allocation6]
        %v1410 = vld [vmem:[%s1409] sm:$0xff]
        %v1411 = vld [vmem:[%s1409 + $0x8] sm:$0xff]
        %v1412 = vld [vmem:[%s1409 + $0x10] sm:$0xff]
        %v1413 = vld [vmem:[%s1409 + $0x18] sm:$0xff]
        %v1414 = vld [vmem:[%s1409 + $0x20] sm:$0xff]
        %v1415 = vld [vmem:[%s1409 + $0x28] sm:$0xff]
        %v1416 = vld [vmem:[%s1409 + $0x30] sm:$0xff]
        %v1417 = vld [vmem:[%s1409 + $0x38] sm:$0xff]
        %v1418 = vld [vmem:[%s1409 + $0x40] sm:$0xff]
        %v1419 = vld [vmem:[%s1409 + $0x48] sm:$0xff]
        %v1420 = vld [vmem:[%s1409 + $0x50] sm:$0xff]
        %v1421 = vld [vmem:[%s1409 + $0x58] sm:$0xff]
        %v1422 = vld [vmem:[%s1409 + $0x60] sm:$0xff]
        %v1423 = vld [vmem:[%s1409 + $0x68] sm:$0xff]
        %v1424 = vld [vmem:[%s1409 + $0x70] sm:$0xff]
        %v1425 = vld [vmem:[%s1409 + $0x78] sm:$0xff]
        %v1426 = vld [vmem:[%s1409 + $0x80] sm:$0xff]
        %v1427 = vld [vmem:[%s1409 + $0x88] sm:$0xff]
        %v1428 = vld [vmem:[%s1409 + $0x90] sm:$0xff]
        %v1429 = vld [vmem:[%s1409 + $0x98] sm:$0xff]
        %v1430 = vld [vmem:[%s1409 + $0xa0] sm:$0xff]
        %v1431 = vld [vmem:[%s1409 + $0xa8] sm:$0xff]
        %v1432 = vld [vmem:[%s1409 + $0xb0] sm:$0xff]
        %v1433 = vld [vmem:[%s1409 + $0xb8] sm:$0xff]
        %s1434 = scalar_lea.vmem %s1, 192
        %v1435 = vld [vmem:[%s1434] sm:$0xff]
        %v1436 = vld [vmem:[%s1434 + $0x8] sm:$0xff]
        %v1437 = vld [vmem:[%s1434 + $0x10] sm:$0xff]
        %v1438 = vld [vmem:[%s1434 + $0x18] sm:$0xff]
        %v1439 = vld [vmem:[%s1434 + $0x20] sm:$0xff]
        %v1440 = vld [vmem:[%s1434 + $0x28] sm:$0xff]
        %v1441 = vld [vmem:[%s1434 + $0x30] sm:$0xf]
        %v1442 = vld [vmem:[%s1434 + $0x38] sm:$0xf]
        %v1444 = vsel %vm557, %v1410, 0
        %v1447 = vsel %vm557, %v1411, 0
        %v1450 = vsel %vm557, %v1412, 0
        %v1453 = vsel %vm557, %v1413, 0
        %v1456 = vsel %vm557, %v1414, 0
        %v1459 = vsel %vm557, %v1415, 0
        %v1462 = vsel %vm557, %v1416, 0
        %v1465 = vsel %vm557, %v1417, 0
        %v1468 = vsel %vm557, %v1418, 0
        %v1471 = vsel %vm557, %v1419, 0
        %v1474 = vsel %vm557, %v1420, 0
        %v1477 = vsel %vm557, %v1421, 0
        %v1480 = vsel %vm557, %v1422, 0
        %v1483 = vsel %vm557, %v1423, 0
        %v1486 = vsel %vm557, %v1424, 0
        %v1489 = vsel %vm557, %v1425, 0
        %v1492 = vsel %vm557, %v1426, 0
        %v1495 = vsel %vm557, %v1427, 0
        %v1498 = vsel %vm557, %v1428, 0
        %v1501 = vsel %vm557, %v1429, 0
        %v1504 = vsel %vm557, %v1430, 0
        %v1507 = vsel %vm557, %v1431, 0
        %v1510 = vsel %vm557, %v1432, 0
        %v1513 = vsel %vm557, %v1433, 0
        %v1516 = vsel %vm630, %v1441, 0
        %v1519 = vsel %vm630, %v1442, 0
        %1521 = vmatpush.msra.mxu0 0.0
        %1522 = vmatpush.msra.mxu0 0.0
        %1523 = vmatpush.msra.mxu0 0.0
        %1524 = vmatpush.msra.mxu0 0.0
        %1525 = vmatpush.msra.mxu0 0.0
        %1526 = vmatpush.msra.mxu0 0.0
        %1527 = vmatpush.msra.mxu0 0.0
        %1528 = vmatpush.msra.mxu0 0.0
        %1529 = vmatpush.msra.mxu0 0.0
        %1530 = vmatpush.msra.mxu0 0.0
        %1531 = vmatpush.msra.mxu0 0.0
        %1532 = vmatpush.msra.mxu0 0.0
        %1533 = vmatpush.msra.mxu0 %v1516
        %1534 = vmatpush.msra.mxu0 %v1439
        %1535 = vmatpush.msra.mxu0 %v1437
        %1536 = vmatpush.msra.mxu0 %v1435
        %1537 = vmatmul.f32.gmra.mxu0 %v1444
        %v1538 = vpop.f32.mrf.mxu0
        %v1539 = vadd.f32 0.0, %v1538
        %1540 = vmatmul.f32.gmra.mxu0 %v1447
        %v1541 = vpop.f32.mrf.mxu0
        %v1542 = vadd.f32 0.0, %v1541
        %1543 = vmatmul.f32.gmra.mxu0 %v1450
        %v1544 = vpop.f32.mrf.mxu0
        %v1545 = vadd.f32 0.0, %v1544
        %1546 = vmatmul.f32.gmra.mxu0 %v1453
        %v1547 = vpop.f32.mrf.mxu0
        %v1548 = vadd.f32 0.0, %v1547
        %1549 = vmatmul.f32.gmra.mxu0 %v1456
        %v1550 = vpop.f32.mrf.mxu0
        %v1551 = vadd.f32 0.0, %v1550
        %1552 = vmatmul.f32.gmra.mxu0 %v1459
        %v1553 = vpop.f32.mrf.mxu0
        %v1554 = vadd.f32 0.0, %v1553
        %1555 = vmatmul.f32.gmra.mxu0 %v1462
        %v1556 = vpop.f32.mrf.mxu0
        %v1557 = vadd.f32 0.0, %v1556
        %1558 = vmatmul.f32.gmra.mxu0 %v1465
        %v1559 = vpop.f32.mrf.mxu0
        %v1560 = vadd.f32 0.0, %v1559
        %1561 = vmatmul.f32.gmra.mxu0 %v1468
        %v1562 = vpop.f32.mrf.mxu0
        %v1563 = vadd.f32 0.0, %v1562
        %1564 = vmatmul.f32.gmra.mxu0 %v1471
        %v1565 = vpop.f32.mrf.mxu0
        %v1566 = vadd.f32 0.0, %v1565
        %1567 = vmatmul.f32.gmra.mxu0 %v1474
        %v1568 = vpop.f32.mrf.mxu0
        %v1569 = vadd.f32 0.0, %v1568
        %1570 = vmatmul.f32.gmra.mxu0 %v1477
        %v1571 = vpop.f32.mrf.mxu0
        %v1572 = vadd.f32 0.0, %v1571
        %1573 = vmatmul.f32.gmra.mxu0 %v1480
        %v1574 = vpop.f32.mrf.mxu0
        %v1575 = vadd.f32 0.0, %v1574
        %1576 = vmatmul.f32.gmra.mxu0 %v1483
        %v1577 = vpop.f32.mrf.mxu0
        %v1578 = vadd.f32 0.0, %v1577
        %1579 = vmatmul.f32.gmra.mxu0 %v1486
        %v1580 = vpop.f32.mrf.mxu0
        %v1581 = vadd.f32 0.0, %v1580
        %1582 = vmatmul.f32.gmra.mxu0 %v1489
        %v1583 = vpop.f32.mrf.mxu0
        %v1584 = vadd.f32 0.0, %v1583
        %1585 = vmatmul.f32.gmra.mxu0 %v1492
        %v1586 = vpop.f32.mrf.mxu0
        %v1587 = vadd.f32 0.0, %v1586
        %1588 = vmatmul.f32.gmra.mxu0 %v1495
        %v1589 = vpop.f32.mrf.mxu0
        %v1590 = vadd.f32 0.0, %v1589
        %1591 = vmatmul.f32.gmra.mxu0 %v1498
        %v1592 = vpop.f32.mrf.mxu0
        %v1593 = vadd.f32 0.0, %v1592
        %1594 = vmatmul.f32.gmra.mxu0 %v1501
        %v1595 = vpop.f32.mrf.mxu0
        %v1596 = vadd.f32 0.0, %v1595
        %1597 = vmatmul.f32.gmra.mxu0 %v1504
        %v1598 = vpop.f32.mrf.mxu0
        %v1599 = vadd.f32 0.0, %v1598
        %1600 = vmatmul.f32.gmra.mxu0 %v1507
        %v1601 = vpop.f32.mrf.mxu0
        %v1602 = vadd.f32 0.0, %v1601
        %1603 = vmatmul.f32.gmra.mxu0 %v1510
        %v1604 = vpop.f32.mrf.mxu0
        %v1605 = vadd.f32 0.0, %v1604
        %1606 = vmatmul.f32.gmra.mxu0 %v1513
        %v1607 = vpop.f32.mrf.mxu0
        %v1608 = vadd.f32 0.0, %v1607
        %1609 = vdwg.mxu0
        %1610 = vmatpush.msra.mxu0 0.0
        %1611 = vmatpush.msra.mxu0 0.0
        %1612 = vmatpush.msra.mxu0 0.0
        %1613 = vmatpush.msra.mxu0 0.0
        %1614 = vmatpush.msra.mxu0 0.0
        %1615 = vmatpush.msra.mxu0 0.0
        %1616 = vmatpush.msra.mxu0 0.0
        %1617 = vmatpush.msra.mxu0 0.0
        %1618 = vmatpush.msra.mxu0 0.0
        %1619 = vmatpush.msra.mxu0 0.0
        %1620 = vmatpush.msra.mxu0 0.0
        %1621 = vmatpush.msra.mxu0 0.0
        %1622 = vmatpush.msra.mxu0 %v1519
        %1623 = vmatpush.msra.mxu0 %v1440
        %1624 = vmatpush.msra.mxu0 %v1438
        %1625 = vmatpush.msra.mxu0 %v1436
        %1626 = vmatmul.f32.gmra.mxu0 %v1444
        %v1627 = vpop.f32.mrf.mxu0
        %v1628 = vadd.f32 0.0, %v1627
        %1629 = vmatmul.f32.gmra.mxu0 %v1447
        %v1630 = vpop.f32.mrf.mxu0
        %v1631 = vadd.f32 0.0, %v1630
        %1632 = vmatmul.f32.gmra.mxu0 %v1450
        %v1633 = vpop.f32.mrf.mxu0
        %v1634 = vadd.f32 0.0, %v1633
        %1635 = vmatmul.f32.gmra.mxu0 %v1453
        %v1636 = vpop.f32.mrf.mxu0
        %v1637 = vadd.f32 0.0, %v1636
        %1638 = vmatmul.f32.gmra.mxu0 %v1456
        %v1639 = vpop.f32.mrf.mxu0
        %v1640 = vadd.f32 0.0, %v1639
        %1641 = vmatmul.f32.gmra.mxu0 %v1459
        %v1642 = vpop.f32.mrf.mxu0
        %v1643 = vadd.f32 0.0, %v1642
        %1644 = vmatmul.f32.gmra.mxu0 %v1462
        %v1645 = vpop.f32.mrf.mxu0
        %v1646 = vadd.f32 0.0, %v1645
        %1647 = vmatmul.f32.gmra.mxu0 %v1465
        %v1648 = vpop.f32.mrf.mxu0
        %v1649 = vadd.f32 0.0, %v1648
        %1650 = vmatmul.f32.gmra.mxu0 %v1468
        %v1651 = vpop.f32.mrf.mxu0
        %v1652 = vadd.f32 0.0, %v1651
        %1653 = vmatmul.f32.gmra.mxu0 %v1471
        %v1654 = vpop.f32.mrf.mxu0
        %v1655 = vadd.f32 0.0, %v1654
        %1656 = vmatmul.f32.gmra.mxu0 %v1474
        %v1657 = vpop.f32.mrf.mxu0
        %v1658 = vadd.f32 0.0, %v1657
        %1659 = vmatmul.f32.gmra.mxu0 %v1477
        %v1660 = vpop.f32.mrf.mxu0
        %v1661 = vadd.f32 0.0, %v1660
        %1662 = vmatmul.f32.gmra.mxu0 %v1480
        %v1663 = vpop.f32.mrf.mxu0
        %v1664 = vadd.f32 0.0, %v1663
        %1665 = vmatmul.f32.gmra.mxu0 %v1483
        %v1666 = vpop.f32.mrf.mxu0
        %v1667 = vadd.f32 0.0, %v1666
        %1668 = vmatmul.f32.gmra.mxu0 %v1486
        %v1669 = vpop.f32.mrf.mxu0
        %v1670 = vadd.f32 0.0, %v1669
        %1671 = vmatmul.f32.gmra.mxu0 %v1489
        %v1672 = vpop.f32.mrf.mxu0
        %v1673 = vadd.f32 0.0, %v1672
        %1674 = vmatmul.f32.gmra.mxu0 %v1492
        %v1675 = vpop.f32.mrf.mxu0
        %v1676 = vadd.f32 0.0, %v1675
        %1677 = vmatmul.f32.gmra.mxu0 %v1495
        %v1678 = vpop.f32.mrf.mxu0
        %v1679 = vadd.f32 0.0, %v1678
        %1680 = vmatmul.f32.gmra.mxu0 %v1498
        %v1681 = vpop.f32.mrf.mxu0
        %v1682 = vadd.f32 0.0, %v1681
        %1683 = vmatmul.f32.gmra.mxu0 %v1501
        %v1684 = vpop.f32.mrf.mxu0
        %v1685 = vadd.f32 0.0, %v1684
        %1686 = vmatmul.f32.gmra.mxu0 %v1504
        %v1687 = vpop.f32.mrf.mxu0
        %v1688 = vadd.f32 0.0, %v1687
        %1689 = vmatmul.f32.gmra.mxu0 %v1507
        %v1690 = vpop.f32.mrf.mxu0
        %v1691 = vadd.f32 0.0, %v1690
        %1692 = vmatmul.f32.gmra.mxu0 %v1510
        %v1693 = vpop.f32.mrf.mxu0
        %v1694 = vadd.f32 0.0, %v1693
        %1695 = vmatmul.f32.gmra.mxu0 %v1513
        %v1696 = vpop.f32.mrf.mxu0
        %v1697 = vadd.f32 0.0, %v1696
        %1698 = vdwg.mxu0
        %v1699 = vadd.f32 %v1361, %v1539
        %v1700 = vadd.f32 %v1362, %v1628
        %v1701 = vadd.f32 %v1363, %v1542
        %v1702 = vadd.f32 %v1364, %v1631
        %v1703 = vadd.f32 %v1365, %v1545
        %v1704 = vadd.f32 %v1366, %v1634
        %v1705 = vadd.f32 %v1367, %v1548
        %v1706 = vadd.f32 %v1368, %v1637
        %v1707 = vadd.f32 %v1369, %v1551
        %v1708 = vadd.f32 %v1370, %v1640
        %v1709 = vadd.f32 %v1371, %v1554
        %v1710 = vadd.f32 %v1372, %v1643
        %v1711 = vadd.f32 %v1373, %v1557
        %v1712 = vadd.f32 %v1374, %v1646
        %v1713 = vadd.f32 %v1375, %v1560
        %v1714 = vadd.f32 %v1376, %v1649
        %v1715 = vadd.f32 %v1377, %v1563
        %v1716 = vadd.f32 %v1378, %v1652
        %v1717 = vadd.f32 %v1379, %v1566
        %v1718 = vadd.f32 %v1380, %v1655
        %v1719 = vadd.f32 %v1381, %v1569
        %v1720 = vadd.f32 %v1382, %v1658
        %v1721 = vadd.f32 %v1383, %v1572
        %v1722 = vadd.f32 %v1384, %v1661
        %v1723 = vadd.f32 %v1385, %v1575
        %v1724 = vadd.f32 %v1386, %v1664
        %v1725 = vadd.f32 %v1387, %v1578
        %v1726 = vadd.f32 %v1388, %v1667
        %v1727 = vadd.f32 %v1389, %v1581
        %v1728 = vadd.f32 %v1390, %v1670
        %v1729 = vadd.f32 %v1391, %v1584
        %v1730 = vadd.f32 %v1392, %v1673
        %v1731 = vadd.f32 %v1393, %v1587
        %v1732 = vadd.f32 %v1394, %v1676
        %v1733 = vadd.f32 %v1395, %v1590
        %v1734 = vadd.f32 %v1396, %v1679
        %v1735 = vadd.f32 %v1397, %v1593
        %v1736 = vadd.f32 %v1398, %v1682
        %v1737 = vadd.f32 %v1399, %v1596
        %v1738 = vadd.f32 %v1400, %v1685
        %v1739 = vadd.f32 %v1401, %v1599
        %v1740 = vadd.f32 %v1402, %v1688
        %v1741 = vadd.f32 %v1403, %v1602
        %v1742 = vadd.f32 %v1404, %v1691
        %v1743 = vadd.f32 %v1405, %v1605
        %v1744 = vadd.f32 %v1406, %v1694
        %v1745 = vadd.f32 %v1407, %v1608
        %v1746 = vadd.f32 %v1408, %v1697
        %s1747 = scalar_lea.vmem %s450, 32 [#allocation6]
        %v1748 = vld [vmem:[%s1747] sm:$0xff]
        %v1749 = vld [vmem:[%s1747 + $0x8] sm:$0xff]
        %v1750 = vld [vmem:[%s1747 + $0x10] sm:$0xff]
        %v1751 = vld [vmem:[%s1747 + $0x18] sm:$0xff]
        %v1752 = vld [vmem:[%s1747 + $0x20] sm:$0xff]
        %v1753 = vld [vmem:[%s1747 + $0x28] sm:$0xff]
        %v1754 = vld [vmem:[%s1747 + $0x30] sm:$0xff]
        %v1755 = vld [vmem:[%s1747 + $0x38] sm:$0xff]
        %v1756 = vld [vmem:[%s1747 + $0x40] sm:$0xff]
        %v1757 = vld [vmem:[%s1747 + $0x48] sm:$0xff]
        %v1758 = vld [vmem:[%s1747 + $0x50] sm:$0xff]
        %v1759 = vld [vmem:[%s1747 + $0x58] sm:$0xff]
        %v1760 = vld [vmem:[%s1747 + $0x60] sm:$0xff]
        %v1761 = vld [vmem:[%s1747 + $0x68] sm:$0xff]
        %v1762 = vld [vmem:[%s1747 + $0x70] sm:$0xff]
        %v1763 = vld [vmem:[%s1747 + $0x78] sm:$0xff]
        %v1764 = vld [vmem:[%s1747 + $0x80] sm:$0xff]
        %v1765 = vld [vmem:[%s1747 + $0x88] sm:$0xff]
        %v1766 = vld [vmem:[%s1747 + $0x90] sm:$0xff]
        %v1767 = vld [vmem:[%s1747 + $0x98] sm:$0xff]
        %v1768 = vld [vmem:[%s1747 + $0xa0] sm:$0xff]
        %v1769 = vld [vmem:[%s1747 + $0xa8] sm:$0xff]
        %v1770 = vld [vmem:[%s1747 + $0xb0] sm:$0xff]
        %v1771 = vld [vmem:[%s1747 + $0xb8] sm:$0xff]
        %s1772 = scalar_lea.vmem %s1, 256
        %v1773 = vld [vmem:[%s1772] sm:$0xff]
        %v1774 = vld [vmem:[%s1772 + $0x8] sm:$0xff]
        %v1775 = vld [vmem:[%s1772 + $0x10] sm:$0xff]
        %v1776 = vld [vmem:[%s1772 + $0x18] sm:$0xff]
        %v1777 = vld [vmem:[%s1772 + $0x20] sm:$0xff]
        %v1778 = vld [vmem:[%s1772 + $0x28] sm:$0xff]
        %v1779 = vld [vmem:[%s1772 + $0x30] sm:$0xf]
        %v1780 = vld [vmem:[%s1772 + $0x38] sm:$0xf]
        %v1782 = vsel %vm557, %v1748, 0
        %v1785 = vsel %vm557, %v1749, 0
        %v1788 = vsel %vm557, %v1750, 0
        %v1791 = vsel %vm557, %v1751, 0
        %v1794 = vsel %vm557, %v1752, 0
        %v1797 = vsel %vm557, %v1753, 0
        %v1800 = vsel %vm557, %v1754, 0
        %v1803 = vsel %vm557, %v1755, 0
        %v1806 = vsel %vm557, %v1756, 0
        %v1809 = vsel %vm557, %v1757, 0
        %v1812 = vsel %vm557, %v1758, 0
        %v1815 = vsel %vm557, %v1759, 0
        %v1818 = vsel %vm557, %v1760, 0
        %v1821 = vsel %vm557, %v1761, 0
        %v1824 = vsel %vm557, %v1762, 0
        %v1827 = vsel %vm557, %v1763, 0
        %v1830 = vsel %vm557, %v1764, 0
        %v1833 = vsel %vm557, %v1765, 0
        %v1836 = vsel %vm557, %v1766, 0
        %v1839 = vsel %vm557, %v1767, 0
        %v1842 = vsel %vm557, %v1768, 0
        %v1845 = vsel %vm557, %v1769, 0
        %v1848 = vsel %vm557, %v1770, 0
        %v1851 = vsel %vm557, %v1771, 0
        %v1854 = vsel %vm630, %v1779, 0
        %v1857 = vsel %vm630, %v1780, 0
        %1859 = vmatpush.msra.mxu0 0.0
        %1860 = vmatpush.msra.mxu0 0.0
        %1861 = vmatpush.msra.mxu0 0.0
        %1862 = vmatpush.msra.mxu0 0.0
        %1863 = vmatpush.msra.mxu0 0.0
        %1864 = vmatpush.msra.mxu0 0.0
        %1865 = vmatpush.msra.mxu0 0.0
        %1866 = vmatpush.msra.mxu0 0.0
        %1867 = vmatpush.msra.mxu0 0.0
        %1868 = vmatpush.msra.mxu0 0.0
        %1869 = vmatpush.msra.mxu0 0.0
        %1870 = vmatpush.msra.mxu0 0.0
        %1871 = vmatpush.msra.mxu0 %v1854
        %1872 = vmatpush.msra.mxu0 %v1777
        %1873 = vmatpush.msra.mxu0 %v1775
        %1874 = vmatpush.msra.mxu0 %v1773
        %1875 = vmatmul.f32.gmra.mxu0 %v1782
        %v1876 = vpop.f32.mrf.mxu0
        %v1877 = vadd.f32 0.0, %v1876
        %1878 = vmatmul.f32.gmra.mxu0 %v1785
        %v1879 = vpop.f32.mrf.mxu0
        %v1880 = vadd.f32 0.0, %v1879
        %1881 = vmatmul.f32.gmra.mxu0 %v1788
        %v1882 = vpop.f32.mrf.mxu0
        %v1883 = vadd.f32 0.0, %v1882
        %1884 = vmatmul.f32.gmra.mxu0 %v1791
        %v1885 = vpop.f32.mrf.mxu0
        %v1886 = vadd.f32 0.0, %v1885
        %1887 = vmatmul.f32.gmra.mxu0 %v1794
        %v1888 = vpop.f32.mrf.mxu0
        %v1889 = vadd.f32 0.0, %v1888
        %1890 = vmatmul.f32.gmra.mxu0 %v1797
        %v1891 = vpop.f32.mrf.mxu0
        %v1892 = vadd.f32 0.0, %v1891
        %1893 = vmatmul.f32.gmra.mxu0 %v1800
        %v1894 = vpop.f32.mrf.mxu0
        %v1895 = vadd.f32 0.0, %v1894
        %1896 = vmatmul.f32.gmra.mxu0 %v1803
        %v1897 = vpop.f32.mrf.mxu0
        %v1898 = vadd.f32 0.0, %v1897
        %1899 = vmatmul.f32.gmra.mxu0 %v1806
        %v1900 = vpop.f32.mrf.mxu0
        %v1901 = vadd.f32 0.0, %v1900
        %1902 = vmatmul.f32.gmra.mxu0 %v1809
        %v1903 = vpop.f32.mrf.mxu0
        %v1904 = vadd.f32 0.0, %v1903
        %1905 = vmatmul.f32.gmra.mxu0 %v1812
        %v1906 = vpop.f32.mrf.mxu0
        %v1907 = vadd.f32 0.0, %v1906
        %1908 = vmatmul.f32.gmra.mxu0 %v1815
        %v1909 = vpop.f32.mrf.mxu0
        %v1910 = vadd.f32 0.0, %v1909
        %1911 = vmatmul.f32.gmra.mxu0 %v1818
        %v1912 = vpop.f32.mrf.mxu0
        %v1913 = vadd.f32 0.0, %v1912
        %1914 = vmatmul.f32.gmra.mxu0 %v1821
        %v1915 = vpop.f32.mrf.mxu0
        %v1916 = vadd.f32 0.0, %v1915
        %1917 = vmatmul.f32.gmra.mxu0 %v1824
        %v1918 = vpop.f32.mrf.mxu0
        %v1919 = vadd.f32 0.0, %v1918
        %1920 = vmatmul.f32.gmra.mxu0 %v1827
        %v1921 = vpop.f32.mrf.mxu0
        %v1922 = vadd.f32 0.0, %v1921
        %1923 = vmatmul.f32.gmra.mxu0 %v1830
        %v1924 = vpop.f32.mrf.mxu0
        %v1925 = vadd.f32 0.0, %v1924
        %1926 = vmatmul.f32.gmra.mxu0 %v1833
        %v1927 = vpop.f32.mrf.mxu0
        %v1928 = vadd.f32 0.0, %v1927
        %1929 = vmatmul.f32.gmra.mxu0 %v1836
        %v1930 = vpop.f32.mrf.mxu0
        %v1931 = vadd.f32 0.0, %v1930
        %1932 = vmatmul.f32.gmra.mxu0 %v1839
        %v1933 = vpop.f32.mrf.mxu0
        %v1934 = vadd.f32 0.0, %v1933
        %1935 = vmatmul.f32.gmra.mxu0 %v1842
        %v1936 = vpop.f32.mrf.mxu0
        %v1937 = vadd.f32 0.0, %v1936
        %1938 = vmatmul.f32.gmra.mxu0 %v1845
        %v1939 = vpop.f32.mrf.mxu0
        %v1940 = vadd.f32 0.0, %v1939
        %1941 = vmatmul.f32.gmra.mxu0 %v1848
        %v1942 = vpop.f32.mrf.mxu0
        %v1943 = vadd.f32 0.0, %v1942
        %1944 = vmatmul.f32.gmra.mxu0 %v1851
        %v1945 = vpop.f32.mrf.mxu0
        %v1946 = vadd.f32 0.0, %v1945
        %1947 = vdwg.mxu0
        %1948 = vmatpush.msra.mxu0 0.0
        %1949 = vmatpush.msra.mxu0 0.0
        %1950 = vmatpush.msra.mxu0 0.0
        %1951 = vmatpush.msra.mxu0 0.0
        %1952 = vmatpush.msra.mxu0 0.0
        %1953 = vmatpush.msra.mxu0 0.0
        %1954 = vmatpush.msra.mxu0 0.0
        %1955 = vmatpush.msra.mxu0 0.0
        %1956 = vmatpush.msra.mxu0 0.0
        %1957 = vmatpush.msra.mxu0 0.0
        %1958 = vmatpush.msra.mxu0 0.0
        %1959 = vmatpush.msra.mxu0 0.0
        %1960 = vmatpush.msra.mxu0 %v1857
        %1961 = vmatpush.msra.mxu0 %v1778
        %1962 = vmatpush.msra.mxu0 %v1776
        %1963 = vmatpush.msra.mxu0 %v1774
        %1964 = vmatmul.f32.gmra.mxu0 %v1782
        %v1965 = vpop.f32.mrf.mxu0
        %v1966 = vadd.f32 0.0, %v1965
        %1967 = vmatmul.f32.gmra.mxu0 %v1785
        %v1968 = vpop.f32.mrf.mxu0
        %v1969 = vadd.f32 0.0, %v1968
        %1970 = vmatmul.f32.gmra.mxu0 %v1788
        %v1971 = vpop.f32.mrf.mxu0
        %v1972 = vadd.f32 0.0, %v1971
        %1973 = vmatmul.f32.gmra.mxu0 %v1791
        %v1974 = vpop.f32.mrf.mxu0
        %v1975 = vadd.f32 0.0, %v1974
        %1976 = vmatmul.f32.gmra.mxu0 %v1794
        %v1977 = vpop.f32.mrf.mxu0
        %v1978 = vadd.f32 0.0, %v1977
        %1979 = vmatmul.f32.gmra.mxu0 %v1797
        %v1980 = vpop.f32.mrf.mxu0
        %v1981 = vadd.f32 0.0, %v1980
        %1982 = vmatmul.f32.gmra.mxu0 %v1800
        %v1983 = vpop.f32.mrf.mxu0
        %v1984 = vadd.f32 0.0, %v1983
        %1985 = vmatmul.f32.gmra.mxu0 %v1803
        %v1986 = vpop.f32.mrf.mxu0
        %v1987 = vadd.f32 0.0, %v1986
        %1988 = vmatmul.f32.gmra.mxu0 %v1806
        %v1989 = vpop.f32.mrf.mxu0
        %v1990 = vadd.f32 0.0, %v1989
        %1991 = vmatmul.f32.gmra.mxu0 %v1809
        %v1992 = vpop.f32.mrf.mxu0
        %v1993 = vadd.f32 0.0, %v1992
        %1994 = vmatmul.f32.gmra.mxu0 %v1812
        %v1995 = vpop.f32.mrf.mxu0
        %v1996 = vadd.f32 0.0, %v1995
        %1997 = vmatmul.f32.gmra.mxu0 %v1815
        %v1998 = vpop.f32.mrf.mxu0
        %v1999 = vadd.f32 0.0, %v1998
        %2000 = vmatmul.f32.gmra.mxu0 %v1818
        %v2001 = vpop.f32.mrf.mxu0
        %v2002 = vadd.f32 0.0, %v2001
        %2003 = vmatmul.f32.gmra.mxu0 %v1821
        %v2004 = vpop.f32.mrf.mxu0
        %v2005 = vadd.f32 0.0, %v2004
        %2006 = vmatmul.f32.gmra.mxu0 %v1824
        %v2007 = vpop.f32.mrf.mxu0
        %v2008 = vadd.f32 0.0, %v2007
        %2009 = vmatmul.f32.gmra.mxu0 %v1827
        %v2010 = vpop.f32.mrf.mxu0
        %v2011 = vadd.f32 0.0, %v2010
        %2012 = vmatmul.f32.gmra.mxu0 %v1830
        %v2013 = vpop.f32.mrf.mxu0
        %v2014 = vadd.f32 0.0, %v2013
        %2015 = vmatmul.f32.gmra.mxu0 %v1833
        %v2016 = vpop.f32.mrf.mxu0
        %v2017 = vadd.f32 0.0, %v2016
        %2018 = vmatmul.f32.gmra.mxu0 %v1836
        %v2019 = vpop.f32.mrf.mxu0
        %v2020 = vadd.f32 0.0, %v2019
        %2021 = vmatmul.f32.gmra.mxu0 %v1839
        %v2022 = vpop.f32.mrf.mxu0
        %v2023 = vadd.f32 0.0, %v2022
        %2024 = vmatmul.f32.gmra.mxu0 %v1842
        %v2025 = vpop.f32.mrf.mxu0
        %v2026 = vadd.f32 0.0, %v2025
        %2027 = vmatmul.f32.gmra.mxu0 %v1845
        %v2028 = vpop.f32.mrf.mxu0
        %v2029 = vadd.f32 0.0, %v2028
        %2030 = vmatmul.f32.gmra.mxu0 %v1848
        %v2031 = vpop.f32.mrf.mxu0
        %v2032 = vadd.f32 0.0, %v2031
        %2033 = vmatmul.f32.gmra.mxu0 %v1851
        %v2034 = vpop.f32.mrf.mxu0
        %v2035 = vadd.f32 0.0, %v2034
        %2036 = vdwg.mxu0
        %v2037 = vadd.f32 %v1699, %v1877
        %v2038 = vadd.f32 %v1700, %v1966
        %v2039 = vadd.f32 %v1701, %v1880
        %v2040 = vadd.f32 %v1702, %v1969
        %v2041 = vadd.f32 %v1703, %v1883
        %v2042 = vadd.f32 %v1704, %v1972
        %v2043 = vadd.f32 %v1705, %v1886
        %v2044 = vadd.f32 %v1706, %v1975
        %v2045 = vadd.f32 %v1707, %v1889
        %v2046 = vadd.f32 %v1708, %v1978
        %v2047 = vadd.f32 %v1709, %v1892
        %v2048 = vadd.f32 %v1710, %v1981
        %v2049 = vadd.f32 %v1711, %v1895
        %v2050 = vadd.f32 %v1712, %v1984
        %v2051 = vadd.f32 %v1713, %v1898
        %v2052 = vadd.f32 %v1714, %v1987
        %v2053 = vadd.f32 %v1715, %v1901
        %v2054 = vadd.f32 %v1716, %v1990
        %v2055 = vadd.f32 %v1717, %v1904
        %v2056 = vadd.f32 %v1718, %v1993
        %v2057 = vadd.f32 %v1719, %v1907
        %v2058 = vadd.f32 %v1720, %v1996
        %v2059 = vadd.f32 %v1721, %v1910
        %v2060 = vadd.f32 %v1722, %v1999
        %v2061 = vadd.f32 %v1723, %v1913
        %v2062 = vadd.f32 %v1724, %v2002
        %v2063 = vadd.f32 %v1725, %v1916
        %v2064 = vadd.f32 %v1726, %v2005
        %v2065 = vadd.f32 %v1727, %v1919
        %v2066 = vadd.f32 %v1728, %v2008
        %v2067 = vadd.f32 %v1729, %v1922
        %v2068 = vadd.f32 %v1730, %v2011
        %v2069 = vadd.f32 %v1731, %v1925
        %v2070 = vadd.f32 %v1732, %v2014
        %v2071 = vadd.f32 %v1733, %v1928
        %v2072 = vadd.f32 %v1734, %v2017
        %v2073 = vadd.f32 %v1735, %v1931
        %v2074 = vadd.f32 %v1736, %v2020
        %v2075 = vadd.f32 %v1737, %v1934
        %v2076 = vadd.f32 %v1738, %v2023
        %v2077 = vadd.f32 %v1739, %v1937
        %v2078 = vadd.f32 %v1740, %v2026
        %v2079 = vadd.f32 %v1741, %v1940
        %v2080 = vadd.f32 %v1742, %v2029
        %v2081 = vadd.f32 %v1743, %v1943
        %v2082 = vadd.f32 %v1744, %v2032
        %v2083 = vadd.f32 %v1745, %v1946
        %v2084 = vadd.f32 %v1746, %v2035
        %v2085 = vmax.f32 %v2037, %v2038
        %v2086 = vmax.f32 %v2039, %v2040
        %v2087 = vmax.f32 %v2041, %v2042
        %v2088 = vmax.f32 %v2043, %v2044
        %v2089 = vmax.f32 %v2045, %v2046
        %v2090 = vmax.f32 %v2047, %v2048
        %v2091 = vmax.f32 %v2049, %v2050
        %v2092 = vmax.f32 %v2051, %v2052
        %v2093 = vmax.f32 %v2053, %v2054
        %v2094 = vmax.f32 %v2055, %v2056
        %v2095 = vmax.f32 %v2057, %v2058
        %v2096 = vmax.f32 %v2059, %v2060
        %v2097 = vmax.f32 %v2061, %v2062
        %v2098 = vmax.f32 %v2063, %v2064
        %v2099 = vmax.f32 %v2065, %v2066
        %v2100 = vmax.f32 %v2067, %v2068
        %v2101 = vmax.f32 %v2069, %v2070
        %v2102 = vmax.f32 %v2071, %v2072
        %v2103 = vmax.f32 %v2073, %v2074
        %v2104 = vmax.f32 %v2075, %v2076
        %v2105 = vmax.f32 %v2077, %v2078
        %v2106 = vmax.f32 %v2079, %v2080
        %v2107 = vmax.f32 %v2081, %v2082
        %v2108 = vmax.f32 %v2083, %v2084
        %2109 = vst [vmem:[#allocation2] sm:$0xff] %v2085
        %2110 = vst [vmem:[#allocation2 + $0x8] sm:$0xff] %v2086
        %2111 = vst [vmem:[#allocation2 + $0x10] sm:$0xff] %v2087
        %2112 = vst [vmem:[#allocation2 + $0x18] sm:$0xff] %v2088
        %2113 = vst [vmem:[#allocation2 + $0x20] sm:$0xff] %v2089
        %2114 = vst [vmem:[#allocation2 + $0x28] sm:$0xff] %v2090
        %2115 = vst [vmem:[#allocation2 + $0x30] sm:$0xff] %v2091
        %2116 = vst [vmem:[#allocation2 + $0x38] sm:$0xff] %v2092
        %2117 = vst [vmem:[#allocation2 + $0x40] sm:$0xff] %v2093
        %2118 = vst [vmem:[#allocation2 + $0x48] sm:$0xff] %v2094
        %2119 = vst [vmem:[#allocation2 + $0x50] sm:$0xff] %v2095
        %2120 = vst [vmem:[#allocation2 + $0x58] sm:$0xff] %v2096
        %2121 = vst [vmem:[#allocation2 + $0x60] sm:$0xff] %v2097
        %2122 = vst [vmem:[#allocation2 + $0x68] sm:$0xff] %v2098
        %2123 = vst [vmem:[#allocation2 + $0x70] sm:$0xff] %v2099
        %2124 = vst [vmem:[#allocation2 + $0x78] sm:$0xff] %v2100
        %2125 = vst [vmem:[#allocation2 + $0x80] sm:$0xff] %v2101
        %2126 = vst [vmem:[#allocation2 + $0x88] sm:$0xff] %v2102
        %2127 = vst [vmem:[#allocation2 + $0x90] sm:$0xff] %v2103
        %2128 = vst [vmem:[#allocation2 + $0x98] sm:$0xff] %v2104
        %2129 = vst [vmem:[#allocation2 + $0xa0] sm:$0xff] %v2105
        %2130 = vst [vmem:[#allocation2 + $0xa8] sm:$0xff] %v2106
        %2131 = vst [vmem:[#allocation2 + $0xb0] sm:$0xff] %v2107
        %2132 = vst [vmem:[#allocation2 + $0xb8] sm:$0xff] %v2108
        %v2133 = vld [vmem:[%s2] sm:$0x1]
        %v2134 = vld [vmem:[#allocation2] sm:$0xff]
        %s2135 = scalar_lea.vmem [#allocation2], 8
        %v2136 = vld [vmem:[%s2135] sm:$0xff]
        %v2137 = vmax.f32 %v2134, %v2136
        %v2139 = vperm.slane %v2133, 0
        %v2141 = vadd.f32 %v2137, %v2139
        %v2142 = vmax.f32 %v2141, 0.0
        %2143 = vst [vmem:[#allocation3] sm:$0xff] %v2142
        %s2144 = scalar_lea.vmem [#allocation2], 16
        %v2145 = vld [vmem:[%s2144] sm:$0xff]
        %s2146 = scalar_lea.vmem [#allocation2], 24
        %v2147 = vld [vmem:[%s2146] sm:$0xff]
        %v2148 = vmax.f32 %v2145, %v2147
        %v2149 = vadd.f32 %v2148, %v2139
        %v2150 = vmax.f32 %v2149, 0.0
        %s2151 = scalar_lea.vmem [#allocation3], 8
        %2152 = vst [vmem:[%s2151] sm:$0xff] %v2150
        %s2153 = scalar_lea.vmem [#allocation2], 32
        %v2154 = vld [vmem:[%s2153] sm:$0xff]
        %s2155 = scalar_lea.vmem [#allocation2], 40
        %v2156 = vld [vmem:[%s2155] sm:$0xff]
        %v2157 = vmax.f32 %v2154, %v2156
        %v2158 = vadd.f32 %v2157, %v2139
        %v2159 = vmax.f32 %v2158, 0.0
        %s2160 = scalar_lea.vmem [#allocation3], 16
        %2161 = vst [vmem:[%s2160] sm:$0xff] %v2159
        %s2162 = scalar_lea.vmem [#allocation2], 48
        %v2163 = vld [vmem:[%s2162] sm:$0xff]
        %s2164 = scalar_lea.vmem [#allocation2], 56
        %v2165 = vld [vmem:[%s2164] sm:$0xff]
        %v2166 = vmax.f32 %v2163, %v2165
        %v2167 = vadd.f32 %v2166, %v2139
        %v2168 = vmax.f32 %v2167, 0.0
        %s2169 = scalar_lea.vmem [#allocation3], 24
        %2170 = vst [vmem:[%s2169] sm:$0xff] %v2168
        %s2171 = scalar_lea.vmem [#allocation2], 64
        %v2172 = vld [vmem:[%s2171] sm:$0xff]
        %s2173 = scalar_lea.vmem [#allocation2], 72
        %v2174 = vld [vmem:[%s2173] sm:$0xff]
        %v2175 = vmax.f32 %v2172, %v2174
        %v2176 = vadd.f32 %v2175, %v2139
        %v2177 = vmax.f32 %v2176, 0.0
        %s2178 = scalar_lea.vmem [#allocation3], 32
        %2179 = vst [vmem:[%s2178] sm:$0xff] %v2177
        %s2180 = scalar_lea.vmem [#allocation2], 80
        %v2181 = vld [vmem:[%s2180] sm:$0xff]
        %s2182 = scalar_lea.vmem [#allocation2], 88
        %v2183 = vld [vmem:[%s2182] sm:$0xff]
        %v2184 = vmax.f32 %v2181, %v2183
        %v2185 = vadd.f32 %v2184, %v2139
        %v2186 = vmax.f32 %v2185, 0.0
        %s2187 = scalar_lea.vmem [#allocation3], 40
        %2188 = vst [vmem:[%s2187] sm:$0xff] %v2186
        %s2189 = scalar_lea.vmem [#allocation2], 96
        %v2190 = vld [vmem:[%s2189] sm:$0xff]
        %s2191 = scalar_lea.vmem [#allocation2], 104
        %v2192 = vld [vmem:[%s2191] sm:$0xff]
        %v2193 = vmax.f32 %v2190, %v2192
        %v2194 = vadd.f32 %v2193, %v2139
        %v2195 = vmax.f32 %v2194, 0.0
        %s2196 = scalar_lea.vmem [#allocation3], 48
        %2197 = vst [vmem:[%s2196] sm:$0xff] %v2195
        %s2198 = scalar_lea.vmem [#allocation2], 112
        %v2199 = vld [vmem:[%s2198] sm:$0xff]
        %s2200 = scalar_lea.vmem [#allocation2], 120
        %v2201 = vld [vmem:[%s2200] sm:$0xff]
        %v2202 = vmax.f32 %v2199, %v2201
        %v2203 = vadd.f32 %v2202, %v2139
        %v2204 = vmax.f32 %v2203, 0.0
        %s2205 = scalar_lea.vmem [#allocation3], 56
        %2206 = vst [vmem:[%s2205] sm:$0xff] %v2204
        %s2207 = scalar_lea.vmem [#allocation2], 128
        %v2208 = vld [vmem:[%s2207] sm:$0xff]
        %s2209 = scalar_lea.vmem [#allocation2], 136
        %v2210 = vld [vmem:[%s2209] sm:$0xff]
        %v2211 = vmax.f32 %v2208, %v2210
        %v2212 = vadd.f32 %v2211, %v2139
        %v2213 = vmax.f32 %v2212, 0.0
        %s2214 = scalar_lea.vmem [#allocation3], 64
        %2215 = vst [vmem:[%s2214] sm:$0xff] %v2213
        %s2216 = scalar_lea.vmem [#allocation2], 144
        %v2217 = vld [vmem:[%s2216] sm:$0xff]
        %s2218 = scalar_lea.vmem [#allocation2], 152
        %v2219 = vld [vmem:[%s2218] sm:$0xff]
        %v2220 = vmax.f32 %v2217, %v2219
        %v2221 = vadd.f32 %v2220, %v2139
        %v2222 = vmax.f32 %v2221, 0.0
        %s2223 = scalar_lea.vmem [#allocation3], 72
        %2224 = vst [vmem:[%s2223] sm:$0xff] %v2222
        %s2225 = scalar_lea.vmem [#allocation2], 160
        %v2226 = vld [vmem:[%s2225] sm:$0xff]
        %s2227 = scalar_lea.vmem [#allocation2], 168
        %v2228 = vld [vmem:[%s2227] sm:$0xff]
        %v2229 = vmax.f32 %v2226, %v2228
        %v2230 = vadd.f32 %v2229, %v2139
        %v2231 = vmax.f32 %v2230, 0.0
        %s2232 = scalar_lea.vmem [#allocation3], 80
        %2233 = vst [vmem:[%s2232] sm:$0xff] %v2231
        %s2234 = scalar_lea.vmem [#allocation2], 176
        %v2235 = vld [vmem:[%s2234] sm:$0xff]
        %s2236 = scalar_lea.vmem [#allocation2], 184
        %v2237 = vld [vmem:[%s2236] sm:$0xff]
        %v2238 = vmax.f32 %v2235, %v2237
        %v2239 = vadd.f32 %v2238, %v2139
        %v2240 = vmax.f32 %v2239, 0.0
        %s2241 = scalar_lea.vmem [#allocation3], 88
        %2242 = vst [vmem:[%s2241] sm:$0xff] %v2240
        %v2243 = vld [vmem:[#allocation3] sm:$0xff]
        %v2244 = vld [vmem:[#allocation3 + $0x8] sm:$0xff]
        %v2245 = vld [vmem:[#allocation3 + $0x10] sm:$0xff]
        %v2246 = vld [vmem:[#allocation3 + $0x18] sm:$0xff]
        %v2247 = vld [vmem:[#allocation3 + $0x20] sm:$0xff]
        %v2248 = vld [vmem:[#allocation3 + $0x28] sm:$0xff]
        %v2249 = vld [vmem:[#allocation3 + $0x30] sm:$0xff]
        %v2250 = vld [vmem:[#allocation3 + $0x38] sm:$0xff]
        %v2251 = vld [vmem:[#allocation7] sm:$0xff]
        %v2252 = vld [vmem:[#allocation7 + $0x8] sm:$0xff]
        %v2253 = vld [vmem:[#allocation7 + $0x10] sm:$0xff]
        %v2254 = vld [vmem:[#allocation7 + $0x18] sm:$0xff]
        %v2255 = vld [vmem:[#allocation7 + $0x20] sm:$0xff]
        %v2256 = vld [vmem:[#allocation7 + $0x28] sm:$0xff]
        %v2257 = vld [vmem:[#allocation7 + $0x30] sm:$0xff]
        %v2258 = vld [vmem:[#allocation7 + $0x38] sm:$0xff]
        %v2259 = vld [vmem:[#allocation7 + $0x40] sm:$0xff]
        %v2260 = vld [vmem:[#allocation7 + $0x48] sm:$0xff]
        %v2261 = vld [vmem:[#allocation7 + $0x50] sm:$0xff]
        %v2262 = vld [vmem:[#allocation7 + $0x58] sm:$0xff]
        %v2263 = vld [vmem:[#allocation7 + $0x60] sm:$0xff]
        %v2264 = vld [vmem:[#allocation7 + $0x68] sm:$0xff]
        %v2265 = vld [vmem:[#allocation7 + $0x70] sm:$0xff]
        %v2266 = vld [vmem:[#allocation7 + $0x78] sm:$0xff]
        %v2267 = vld [vmem:[#allocation7 + $0x80] sm:$0xff]
        %v2268 = vld [vmem:[#allocation7 + $0x88] sm:$0xff]
        %v2269 = vld [vmem:[#allocation7 + $0x90] sm:$0xff]
        %v2270 = vld [vmem:[#allocation7 + $0x98] sm:$0xff]
        %v2271 = vld [vmem:[#allocation7 + $0xa0] sm:$0xff]
        %v2272 = vld [vmem:[#allocation7 + $0xa8] sm:$0xff]
        %v2273 = vld [vmem:[#allocation7 + $0xb0] sm:$0xff]
        %v2274 = vld [vmem:[#allocation7 + $0xb8] sm:$0xff]
        %v2275 = vld [vmem:[#allocation7 + $0xc0] sm:$0xff]
        %v2276 = vld [vmem:[#allocation7 + $0xc8] sm:$0xff]
        %v2277 = vld [vmem:[#allocation7 + $0xd0] sm:$0xff]
        %v2278 = vld [vmem:[#allocation7 + $0xd8] sm:$0xff]
        %v2279 = vld [vmem:[#allocation7 + $0xe0] sm:$0xff]
        %v2280 = vld [vmem:[#allocation7 + $0xe8] sm:$0xff]
        %v2281 = vld [vmem:[#allocation7 + $0xf0] sm:$0xff]
        %v2282 = vld [vmem:[#allocation7 + $0xf8] sm:$0xff]
        %v2283 = vld [vmem:[%s2151] sm:$0xff]
        %v2284 = vld [vmem:[%s2151 + $0x8] sm:$0xff]
        %v2285 = vld [vmem:[%s2151 + $0x10] sm:$0xff]
        %v2286 = vld [vmem:[%s2151 + $0x18] sm:$0xff]
        %v2287 = vld [vmem:[%s2151 + $0x20] sm:$0xff]
        %v2288 = vld [vmem:[%s2151 + $0x28] sm:$0xff]
        %v2289 = vld [vmem:[%s2151 + $0x30] sm:$0xff]
        %v2290 = vld [vmem:[%s2151 + $0x38] sm:$0xff]
        %s2291 = scalar_lea.vmem [#allocation7], 256
        %v2292 = vld [vmem:[%s2291] sm:$0xff]
        %v2293 = vld [vmem:[%s2291 + $0x8] sm:$0xff]
        %v2294 = vld [vmem:[%s2291 + $0x10] sm:$0xff]
        %v2295 = vld [vmem:[%s2291 + $0x18] sm:$0xff]
        %v2296 = vld [vmem:[%s2291 + $0x20] sm:$0xff]
        %v2297 = vld [vmem:[%s2291 + $0x28] sm:$0xff]
        %v2298 = vld [vmem:[%s2291 + $0x30] sm:$0xff]
        %v2299 = vld [vmem:[%s2291 + $0x38] sm:$0xff]
        %v2300 = vld [vmem:[%s2291 + $0x40] sm:$0xff]
        %v2301 = vld [vmem:[%s2291 + $0x48] sm:$0xff]
        %v2302 = vld [vmem:[%s2291 + $0x50] sm:$0xff]
        %v2303 = vld [vmem:[%s2291 + $0x58] sm:$0xff]
        %v2304 = vld [vmem:[%s2291 + $0x60] sm:$0xff]
        %v2305 = vld [vmem:[%s2291 + $0x68] sm:$0xff]
        %v2306 = vld [vmem:[%s2291 + $0x70] sm:$0xff]
        %v2307 = vld [vmem:[%s2291 + $0x78] sm:$0xff]
        %v2308 = vld [vmem:[%s2291 + $0x80] sm:$0xff]
        %v2309 = vld [vmem:[%s2291 + $0x88] sm:$0xff]
        %v2310 = vld [vmem:[%s2291 + $0x90] sm:$0xff]
        %v2311 = vld [vmem:[%s2291 + $0x98] sm:$0xff]
        %v2312 = vld [vmem:[%s2291 + $0xa0] sm:$0xff]
        %v2313 = vld [vmem:[%s2291 + $0xa8] sm:$0xff]
        %v2314 = vld [vmem:[%s2291 + $0xb0] sm:$0xff]
        %v2315 = vld [vmem:[%s2291 + $0xb8] sm:$0xff]
        %v2316 = vld [vmem:[%s2291 + $0xc0] sm:$0xff]
        %v2317 = vld [vmem:[%s2291 + $0xc8] sm:$0xff]
        %v2318 = vld [vmem:[%s2291 + $0xd0] sm:$0xff]
        %v2319 = vld [vmem:[%s2291 + $0xd8] sm:$0xff]
        %v2320 = vld [vmem:[%s2291 + $0xe0] sm:$0xff]
        %v2321 = vld [vmem:[%s2291 + $0xe8] sm:$0xff]
        %v2322 = vld [vmem:[%s2291 + $0xf0] sm:$0xff]
        %v2323 = vld [vmem:[%s2291 + $0xf8] sm:$0xff]
        %2324 = vmatpush.msra.mxu0 %v2322
        %2325 = vmatpush.msra.mxu0 %v2320
        %2326 = vmatpush.msra.mxu0 %v2318
        %2327 = vmatpush.msra.mxu0 %v2316
        %2328 = vmatpush.msra.mxu0 %v2314
        %2329 = vmatpush.msra.mxu0 %v2312
        %2330 = vmatpush.msra.mxu0 %v2310
        %2331 = vmatpush.msra.mxu0 %v2308
        %2332 = vmatpush.msra.mxu0 %v2306
        %2333 = vmatpush.msra.mxu0 %v2304
        %2334 = vmatpush.msra.mxu0 %v2302
        %2335 = vmatpush.msra.mxu0 %v2300
        %2336 = vmatpush.msra.mxu0 %v2298
        %2337 = vmatpush.msra.mxu0 %v2296
        %2338 = vmatpush.msra.mxu0 %v2294
        %2339 = vmatpush.msra.mxu0 %v2292
        %2340 = vmatmul.f32.gmra.mxu0 %v2283
        %v2341 = vpop.f32.mrf.mxu0
        %v2342 = vadd.f32 0.0, %v2341
        %2343 = vmatmul.f32.gmra.mxu0 %v2284
        %v2344 = vpop.f32.mrf.mxu0
        %v2345 = vadd.f32 0.0, %v2344
        %2346 = vmatmul.f32.gmra.mxu0 %v2285
        %v2347 = vpop.f32.mrf.mxu0
        %v2348 = vadd.f32 0.0, %v2347
        %2349 = vmatmul.f32.gmra.mxu0 %v2286
        %v2350 = vpop.f32.mrf.mxu0
        %v2351 = vadd.f32 0.0, %v2350
        %2352 = vmatmul.f32.gmra.mxu0 %v2287
        %v2353 = vpop.f32.mrf.mxu0
        %v2354 = vadd.f32 0.0, %v2353
        %2355 = vmatmul.f32.gmra.mxu0 %v2288
        %v2356 = vpop.f32.mrf.mxu0
        %v2357 = vadd.f32 0.0, %v2356
        %2358 = vmatmul.f32.gmra.mxu0 %v2289
        %v2359 = vpop.f32.mrf.mxu0
        %v2360 = vadd.f32 0.0, %v2359
        %2361 = vmatmul.f32.gmra.mxu0 %v2290
        %v2362 = vpop.f32.mrf.mxu0
        %v2363 = vadd.f32 0.0, %v2362
        %2364 = vdwg.mxu0
        %2365 = vmatpush.msra.mxu0 %v2323
        %2366 = vmatpush.msra.mxu0 %v2321
        %2367 = vmatpush.msra.mxu0 %v2319
        %2368 = vmatpush.msra.mxu0 %v2317
        %2369 = vmatpush.msra.mxu0 %v2315
        %2370 = vmatpush.msra.mxu0 %v2313
        %2371 = vmatpush.msra.mxu0 %v2311
        %2372 = vmatpush.msra.mxu0 %v2309
        %2373 = vmatpush.msra.mxu0 %v2307
        %2374 = vmatpush.msra.mxu0 %v2305
        %2375 = vmatpush.msra.mxu0 %v2303
        %2376 = vmatpush.msra.mxu0 %v2301
        %2377 = vmatpush.msra.mxu0 %v2299
        %2378 = vmatpush.msra.mxu0 %v2297
        %2379 = vmatpush.msra.mxu0 %v2295
        %2380 = vmatpush.msra.mxu0 %v2293
        %2381 = vmatmul.f32.gmra.mxu0 %v2283
        %v2382 = vpop.f32.mrf.mxu0
        %v2383 = vadd.f32 0.0, %v2382
        %2384 = vmatmul.f32.gmra.mxu0 %v2284
        %v2385 = vpop.f32.mrf.mxu0
        %v2386 = vadd.f32 0.0, %v2385
        %2387 = vmatmul.f32.gmra.mxu0 %v2285
        %v2388 = vpop.f32.mrf.mxu0
        %v2389 = vadd.f32 0.0, %v2388
        %2390 = vmatmul.f32.gmra.mxu0 %v2286
        %v2391 = vpop.f32.mrf.mxu0
        %v2392 = vadd.f32 0.0, %v2391
        %2393 = vmatmul.f32.gmra.mxu0 %v2287
        %v2394 = vpop.f32.mrf.mxu0
        %v2395 = vadd.f32 0.0, %v2394
        %2396 = vmatmul.f32.gmra.mxu0 %v2288
        %v2397 = vpop.f32.mrf.mxu0
        %v2398 = vadd.f32 0.0, %v2397
        %2399 = vmatmul.f32.gmra.mxu0 %v2289
        %v2400 = vpop.f32.mrf.mxu0
        %v2401 = vadd.f32 0.0, %v2400
        %2402 = vmatmul.f32.gmra.mxu0 %v2290
        %v2403 = vpop.f32.mrf.mxu0
        %v2404 = vadd.f32 0.0, %v2403
        %2405 = vdwg.mxu0
        %2406 = vmatpush.msra.mxu0 %v2281
        %2407 = vmatpush.msra.mxu0 %v2279
        %2408 = vmatpush.msra.mxu0 %v2277
        %2409 = vmatpush.msra.mxu0 %v2275
        %2410 = vmatpush.msra.mxu0 %v2273
        %2411 = vmatpush.msra.mxu0 %v2271
        %2412 = vmatpush.msra.mxu0 %v2269
        %2413 = vmatpush.msra.mxu0 %v2267
        %2414 = vmatpush.msra.mxu0 %v2265
        %2415 = vmatpush.msra.mxu0 %v2263
        %2416 = vmatpush.msra.mxu0 %v2261
        %2417 = vmatpush.msra.mxu0 %v2259
        %2418 = vmatpush.msra.mxu0 %v2257
        %2419 = vmatpush.msra.mxu0 %v2255
        %2420 = vmatpush.msra.mxu0 %v2253
        %2421 = vmatpush.msra.mxu0 %v2251
        %2422 = vmatmul.f32.gmra.mxu0 %v2243
        %v2423 = vpop.f32.mrf.mxu0
        %v2424 = vadd.f32 %v2342, %v2423
        %2425 = vmatmul.f32.gmra.mxu0 %v2244
        %v2426 = vpop.f32.mrf.mxu0
        %v2427 = vadd.f32 %v2345, %v2426
        %2428 = vmatmul.f32.gmra.mxu0 %v2245
        %v2429 = vpop.f32.mrf.mxu0
        %v2430 = vadd.f32 %v2348, %v2429
        %2431 = vmatmul.f32.gmra.mxu0 %v2246
        %v2432 = vpop.f32.mrf.mxu0
        %v2433 = vadd.f32 %v2351, %v2432
        %2434 = vmatmul.f32.gmra.mxu0 %v2247
        %v2435 = vpop.f32.mrf.mxu0
        %v2436 = vadd.f32 %v2354, %v2435
        %2437 = vmatmul.f32.gmra.mxu0 %v2248
        %v2438 = vpop.f32.mrf.mxu0
        %v2439 = vadd.f32 %v2357, %v2438
        %2440 = vmatmul.f32.gmra.mxu0 %v2249
        %v2441 = vpop.f32.mrf.mxu0
        %v2442 = vadd.f32 %v2360, %v2441
        %2443 = vmatmul.f32.gmra.mxu0 %v2250
        %v2444 = vpop.f32.mrf.mxu0
        %v2445 = vadd.f32 %v2363, %v2444
        %2446 = vdwg.mxu0
        %2447 = vmatpush.msra.mxu0 %v2282
        %2448 = vmatpush.msra.mxu0 %v2280
        %2449 = vmatpush.msra.mxu0 %v2278
        %2450 = vmatpush.msra.mxu0 %v2276
        %2451 = vmatpush.msra.mxu0 %v2274
        %2452 = vmatpush.msra.mxu0 %v2272
        %2453 = vmatpush.msra.mxu0 %v2270
        %2454 = vmatpush.msra.mxu0 %v2268
        %2455 = vmatpush.msra.mxu0 %v2266
        %2456 = vmatpush.msra.mxu0 %v2264
        %2457 = vmatpush.msra.mxu0 %v2262
        %2458 = vmatpush.msra.mxu0 %v2260
        %2459 = vmatpush.msra.mxu0 %v2258
        %2460 = vmatpush.msra.mxu0 %v2256
        %2461 = vmatpush.msra.mxu0 %v2254
        %2462 = vmatpush.msra.mxu0 %v2252
        %2463 = vmatmul.f32.gmra.mxu0 %v2243
        %v2464 = vpop.f32.mrf.mxu0
        %v2465 = vadd.f32 %v2383, %v2464
        %2466 = vmatmul.f32.gmra.mxu0 %v2244
        %v2467 = vpop.f32.mrf.mxu0
        %v2468 = vadd.f32 %v2386, %v2467
        %2469 = vmatmul.f32.gmra.mxu0 %v2245
        %v2470 = vpop.f32.mrf.mxu0
        %v2471 = vadd.f32 %v2389, %v2470
        %2472 = vmatmul.f32.gmra.mxu0 %v2246
        %v2473 = vpop.f32.mrf.mxu0
        %v2474 = vadd.f32 %v2392, %v2473
        %2475 = vmatmul.f32.gmra.mxu0 %v2247
        %v2476 = vpop.f32.mrf.mxu0
        %v2477 = vadd.f32 %v2395, %v2476
        %2478 = vmatmul.f32.gmra.mxu0 %v2248
        %v2479 = vpop.f32.mrf.mxu0
        %v2480 = vadd.f32 %v2398, %v2479
        %2481 = vmatmul.f32.gmra.mxu0 %v2249
        %v2482 = vpop.f32.mrf.mxu0
        %v2483 = vadd.f32 %v2401, %v2482
        %2484 = vmatmul.f32.gmra.mxu0 %v2250
        %v2485 = vpop.f32.mrf.mxu0
        %v2486 = vadd.f32 %v2404, %v2485
        %2487 = vdwg.mxu0
        %v2488 = vld [vmem:[%s2160] sm:$0xff]
        %v2489 = vld [vmem:[%s2160 + $0x8] sm:$0xff]
        %v2490 = vld [vmem:[%s2160 + $0x10] sm:$0xff]
        %v2491 = vld [vmem:[%s2160 + $0x18] sm:$0xff]
        %v2492 = vld [vmem:[%s2160 + $0x20] sm:$0xff]
        %v2493 = vld [vmem:[%s2160 + $0x28] sm:$0xff]
        %v2494 = vld [vmem:[%s2160 + $0x30] sm:$0xff]
        %v2495 = vld [vmem:[%s2160 + $0x38] sm:$0xff]
        %s2496 = scalar_lea.vmem [#allocation7], 512
        %v2497 = vld [vmem:[%s2496] sm:$0xff]
        %v2498 = vld [vmem:[%s2496 + $0x8] sm:$0xff]
        %v2499 = vld [vmem:[%s2496 + $0x10] sm:$0xff]
        %v2500 = vld [vmem:[%s2496 + $0x18] sm:$0xff]
        %v2501 = vld [vmem:[%s2496 + $0x20] sm:$0xff]
        %v2502 = vld [vmem:[%s2496 + $0x28] sm:$0xff]
        %v2503 = vld [vmem:[%s2496 + $0x30] sm:$0xff]
        %v2504 = vld [vmem:[%s2496 + $0x38] sm:$0xff]
        %v2505 = vld [vmem:[%s2496 + $0x40] sm:$0xff]
        %v2506 = vld [vmem:[%s2496 + $0x48] sm:$0xff]
        %v2507 = vld [vmem:[%s2496 + $0x50] sm:$0xff]
        %v2508 = vld [vmem:[%s2496 + $0x58] sm:$0xff]
        %v2509 = vld [vmem:[%s2496 + $0x60] sm:$0xff]
        %v2510 = vld [vmem:[%s2496 + $0x68] sm:$0xff]
        %v2511 = vld [vmem:[%s2496 + $0x70] sm:$0xff]
        %v2512 = vld [vmem:[%s2496 + $0x78] sm:$0xff]
        %v2513 = vld [vmem:[%s2496 + $0x80] sm:$0xff]
        %v2514 = vld [vmem:[%s2496 + $0x88] sm:$0xff]
        %v2515 = vld [vmem:[%s2496 + $0x90] sm:$0xff]
        %v2516 = vld [vmem:[%s2496 + $0x98] sm:$0xff]
        %v2517 = vld [vmem:[%s2496 + $0xa0] sm:$0xff]
        %v2518 = vld [vmem:[%s2496 + $0xa8] sm:$0xff]
        %v2519 = vld [vmem:[%s2496 + $0xb0] sm:$0xff]
        %v2520 = vld [vmem:[%s2496 + $0xb8] sm:$0xff]
        %v2521 = vld [vmem:[%s2496 + $0xc0] sm:$0xff]
        %v2522 = vld [vmem:[%s2496 + $0xc8] sm:$0xff]
        %v2523 = vld [vmem:[%s2496 + $0xd0] sm:$0xff]
        %v2524 = vld [vmem:[%s2496 + $0xd8] sm:$0xff]
        %v2525 = vld [vmem:[%s2496 + $0xe0] sm:$0xff]
        %v2526 = vld [vmem:[%s2496 + $0xe8] sm:$0xff]
        %v2527 = vld [vmem:[%s2496 + $0xf0] sm:$0xff]
        %v2528 = vld [vmem:[%s2496 + $0xf8] sm:$0xff]
        %2529 = vmatpush.msra.mxu0 %v2527
        %2530 = vmatpush.msra.mxu0 %v2525
        %2531 = vmatpush.msra.mxu0 %v2523
        %2532 = vmatpush.msra.mxu0 %v2521
        %2533 = vmatpush.msra.mxu0 %v2519
        %2534 = vmatpush.msra.mxu0 %v2517
        %2535 = vmatpush.msra.mxu0 %v2515
        %2536 = vmatpush.msra.mxu0 %v2513
        %2537 = vmatpush.msra.mxu0 %v2511
        %2538 = vmatpush.msra.mxu0 %v2509
        %2539 = vmatpush.msra.mxu0 %v2507
        %2540 = vmatpush.msra.mxu0 %v2505
        %2541 = vmatpush.msra.mxu0 %v2503
        %2542 = vmatpush.msra.mxu0 %v2501
        %2543 = vmatpush.msra.mxu0 %v2499
        %2544 = vmatpush.msra.mxu0 %v2497
        %2545 = vmatmul.f32.gmra.mxu0 %v2488
        %v2546 = vpop.f32.mrf.mxu0
        %v2547 = vadd.f32 0.0, %v2546
        %2548 = vmatmul.f32.gmra.mxu0 %v2489
        %v2549 = vpop.f32.mrf.mxu0
        %v2550 = vadd.f32 0.0, %v2549
        %2551 = vmatmul.f32.gmra.mxu0 %v2490
        %v2552 = vpop.f32.mrf.mxu0
        %v2553 = vadd.f32 0.0, %v2552
        %2554 = vmatmul.f32.gmra.mxu0 %v2491
        %v2555 = vpop.f32.mrf.mxu0
        %v2556 = vadd.f32 0.0, %v2555
        %2557 = vmatmul.f32.gmra.mxu0 %v2492
        %v2558 = vpop.f32.mrf.mxu0
        %v2559 = vadd.f32 0.0, %v2558
        %2560 = vmatmul.f32.gmra.mxu0 %v2493
        %v2561 = vpop.f32.mrf.mxu0
        %v2562 = vadd.f32 0.0, %v2561
        %2563 = vmatmul.f32.gmra.mxu0 %v2494
        %v2564 = vpop.f32.mrf.mxu0
        %v2565 = vadd.f32 0.0, %v2564
        %2566 = vmatmul.f32.gmra.mxu0 %v2495
        %v2567 = vpop.f32.mrf.mxu0
        %v2568 = vadd.f32 0.0, %v2567
        %2569 = vdwg.mxu0
        %2570 = vmatpush.msra.mxu0 %v2528
        %2571 = vmatpush.msra.mxu0 %v2526
        %2572 = vmatpush.msra.mxu0 %v2524
        %2573 = vmatpush.msra.mxu0 %v2522
        %2574 = vmatpush.msra.mxu0 %v2520
        %2575 = vmatpush.msra.mxu0 %v2518
        %2576 = vmatpush.msra.mxu0 %v2516
        %2577 = vmatpush.msra.mxu0 %v2514
        %2578 = vmatpush.msra.mxu0 %v2512
        %2579 = vmatpush.msra.mxu0 %v2510
        %2580 = vmatpush.msra.mxu0 %v2508
        %2581 = vmatpush.msra.mxu0 %v2506
        %2582 = vmatpush.msra.mxu0 %v2504
        %2583 = vmatpush.msra.mxu0 %v2502
        %2584 = vmatpush.msra.mxu0 %v2500
        %2585 = vmatpush.msra.mxu0 %v2498
        %2586 = vmatmul.f32.gmra.mxu0 %v2488
        %v2587 = vpop.f32.mrf.mxu0
        %v2588 = vadd.f32 0.0, %v2587
        %2589 = vmatmul.f32.gmra.mxu0 %v2489
        %v2590 = vpop.f32.mrf.mxu0
        %v2591 = vadd.f32 0.0, %v2590
        %2592 = vmatmul.f32.gmra.mxu0 %v2490
        %v2593 = vpop.f32.mrf.mxu0
        %v2594 = vadd.f32 0.0, %v2593
        %2595 = vmatmul.f32.gmra.mxu0 %v2491
        %v2596 = vpop.f32.mrf.mxu0
        %v2597 = vadd.f32 0.0, %v2596
        %2598 = vmatmul.f32.gmra.mxu0 %v2492
        %v2599 = vpop.f32.mrf.mxu0
        %v2600 = vadd.f32 0.0, %v2599
        %2601 = vmatmul.f32.gmra.mxu0 %v2493
        %v2602 = vpop.f32.mrf.mxu0
        %v2603 = vadd.f32 0.0, %v2602
        %2604 = vmatmul.f32.gmra.mxu0 %v2494
        %v2605 = vpop.f32.mrf.mxu0
        %v2606 = vadd.f32 0.0, %v2605
        %2607 = vmatmul.f32.gmra.mxu0 %v2495
        %v2608 = vpop.f32.mrf.mxu0
        %v2609 = vadd.f32 0.0, %v2608
        %2610 = vdwg.mxu0
        %v2611 = vadd.f32 %v2424, %v2547
        %v2612 = vadd.f32 %v2465, %v2588
        %v2613 = vadd.f32 %v2427, %v2550
        %v2614 = vadd.f32 %v2468, %v2591
        %v2615 = vadd.f32 %v2430, %v2553
        %v2616 = vadd.f32 %v2471, %v2594
        %v2617 = vadd.f32 %v2433, %v2556
        %v2618 = vadd.f32 %v2474, %v2597
        %v2619 = vadd.f32 %v2436, %v2559
        %v2620 = vadd.f32 %v2477, %v2600
        %v2621 = vadd.f32 %v2439, %v2562
        %v2622 = vadd.f32 %v2480, %v2603
        %v2623 = vadd.f32 %v2442, %v2565
        %v2624 = vadd.f32 %v2483, %v2606
        %v2625 = vadd.f32 %v2445, %v2568
        %v2626 = vadd.f32 %v2486, %v2609
        %v2627 = vld [vmem:[%s2169] sm:$0xff]
        %v2628 = vld [vmem:[%s2169 + $0x8] sm:$0xff]
        %v2629 = vld [vmem:[%s2169 + $0x10] sm:$0xff]
        %v2630 = vld [vmem:[%s2169 + $0x18] sm:$0xff]
        %v2631 = vld [vmem:[%s2169 + $0x20] sm:$0xff]
        %v2632 = vld [vmem:[%s2169 + $0x28] sm:$0xff]
        %v2633 = vld [vmem:[%s2169 + $0x30] sm:$0xff]
        %v2634 = vld [vmem:[%s2169 + $0x38] sm:$0xff]
        %s2635 = scalar_lea.vmem [#allocation7], 768
        %v2636 = vld [vmem:[%s2635] sm:$0xff]
        %v2637 = vld [vmem:[%s2635 + $0x8] sm:$0xff]
        %v2638 = vld [vmem:[%s2635 + $0x10] sm:$0xff]
        %v2639 = vld [vmem:[%s2635 + $0x18] sm:$0xff]
        %v2640 = vld [vmem:[%s2635 + $0x20] sm:$0xff]
        %v2641 = vld [vmem:[%s2635 + $0x28] sm:$0xff]
        %v2642 = vld [vmem:[%s2635 + $0x30] sm:$0xff]
        %v2643 = vld [vmem:[%s2635 + $0x38] sm:$0xff]
        %v2644 = vld [vmem:[%s2635 + $0x40] sm:$0xff]
        %v2645 = vld [vmem:[%s2635 + $0x48] sm:$0xff]
        %v2646 = vld [vmem:[%s2635 + $0x50] sm:$0xff]
        %v2647 = vld [vmem:[%s2635 + $0x58] sm:$0xff]
        %v2648 = vld [vmem:[%s2635 + $0x60] sm:$0xff]
        %v2649 = vld [vmem:[%s2635 + $0x68] sm:$0xff]
        %v2650 = vld [vmem:[%s2635 + $0x70] sm:$0xff]
        %v2651 = vld [vmem:[%s2635 + $0x78] sm:$0xff]
        %v2652 = vld [vmem:[%s2635 + $0x80] sm:$0xff]
        %v2653 = vld [vmem:[%s2635 + $0x88] sm:$0xff]
        %v2654 = vld [vmem:[%s2635 + $0x90] sm:$0xff]
        %v2655 = vld [vmem:[%s2635 + $0x98] sm:$0xff]
        %v2656 = vld [vmem:[%s2635 + $0xa0] sm:$0xff]
        %v2657 = vld [vmem:[%s2635 + $0xa8] sm:$0xff]
        %v2658 = vld [vmem:[%s2635 + $0xb0] sm:$0xff]
        %v2659 = vld [vmem:[%s2635 + $0xb8] sm:$0xff]
        %v2660 = vld [vmem:[%s2635 + $0xc0] sm:$0xff]
        %v2661 = vld [vmem:[%s2635 + $0xc8] sm:$0xff]
        %v2662 = vld [vmem:[%s2635 + $0xd0] sm:$0xff]
        %v2663 = vld [vmem:[%s2635 + $0xd8] sm:$0xff]
        %v2664 = vld [vmem:[%s2635 + $0xe0] sm:$0xff]
        %v2665 = vld [vmem:[%s2635 + $0xe8] sm:$0xff]
        %v2666 = vld [vmem:[%s2635 + $0xf0] sm:$0xff]
        %v2667 = vld [vmem:[%s2635 + $0xf8] sm:$0xff]
        %2668 = vmatpush.msra.mxu0 %v2666
        %2669 = vmatpush.msra.mxu0 %v2664
        %2670 = vmatpush.msra.mxu0 %v2662
        %2671 = vmatpush.msra.mxu0 %v2660
        %2672 = vmatpush.msra.mxu0 %v2658
        %2673 = vmatpush.msra.mxu0 %v2656
        %2674 = vmatpush.msra.mxu0 %v2654
        %2675 = vmatpush.msra.mxu0 %v2652
        %2676 = vmatpush.msra.mxu0 %v2650
        %2677 = vmatpush.msra.mxu0 %v2648
        %2678 = vmatpush.msra.mxu0 %v2646
        %2679 = vmatpush.msra.mxu0 %v2644
        %2680 = vmatpush.msra.mxu0 %v2642
        %2681 = vmatpush.msra.mxu0 %v2640
        %2682 = vmatpush.msra.mxu0 %v2638
        %2683 = vmatpush.msra.mxu0 %v2636
        %2684 = vmatmul.f32.gmra.mxu0 %v2627
        %v2685 = vpop.f32.mrf.mxu0
        %v2686 = vadd.f32 0.0, %v2685
        %2687 = vmatmul.f32.gmra.mxu0 %v2628
        %v2688 = vpop.f32.mrf.mxu0
        %v2689 = vadd.f32 0.0, %v2688
        %2690 = vmatmul.f32.gmra.mxu0 %v2629
        %v2691 = vpop.f32.mrf.mxu0
        %v2692 = vadd.f32 0.0, %v2691
        %2693 = vmatmul.f32.gmra.mxu0 %v2630
        %v2694 = vpop.f32.mrf.mxu0
        %v2695 = vadd.f32 0.0, %v2694
        %2696 = vmatmul.f32.gmra.mxu0 %v2631
        %v2697 = vpop.f32.mrf.mxu0
        %v2698 = vadd.f32 0.0, %v2697
        %2699 = vmatmul.f32.gmra.mxu0 %v2632
        %v2700 = vpop.f32.mrf.mxu0
        %v2701 = vadd.f32 0.0, %v2700
        %2702 = vmatmul.f32.gmra.mxu0 %v2633
        %v2703 = vpop.f32.mrf.mxu0
        %v2704 = vadd.f32 0.0, %v2703
        %2705 = vmatmul.f32.gmra.mxu0 %v2634
        %v2706 = vpop.f32.mrf.mxu0
        %v2707 = vadd.f32 0.0, %v2706
        %2708 = vdwg.mxu0
        %2709 = vmatpush.msra.mxu0 %v2667
        %2710 = vmatpush.msra.mxu0 %v2665
        %2711 = vmatpush.msra.mxu0 %v2663
        %2712 = vmatpush.msra.mxu0 %v2661
        %2713 = vmatpush.msra.mxu0 %v2659
        %2714 = vmatpush.msra.mxu0 %v2657
        %2715 = vmatpush.msra.mxu0 %v2655
        %2716 = vmatpush.msra.mxu0 %v2653
        %2717 = vmatpush.msra.mxu0 %v2651
        %2718 = vmatpush.msra.mxu0 %v2649
        %2719 = vmatpush.msra.mxu0 %v2647
        %2720 = vmatpush.msra.mxu0 %v2645
        %2721 = vmatpush.msra.mxu0 %v2643
        %2722 = vmatpush.msra.mxu0 %v2641
        %2723 = vmatpush.msra.mxu0 %v2639
        %2724 = vmatpush.msra.mxu0 %v2637
        %2725 = vmatmul.f32.gmra.mxu0 %v2627
        %v2726 = vpop.f32.mrf.mxu0
        %v2727 = vadd.f32 0.0, %v2726
        %2728 = vmatmul.f32.gmra.mxu0 %v2628
        %v2729 = vpop.f32.mrf.mxu0
        %v2730 = vadd.f32 0.0, %v2729
        %2731 = vmatmul.f32.gmra.mxu0 %v2629
        %v2732 = vpop.f32.mrf.mxu0
        %v2733 = vadd.f32 0.0, %v2732
        %2734 = vmatmul.f32.gmra.mxu0 %v2630
        %v2735 = vpop.f32.mrf.mxu0
        %v2736 = vadd.f32 0.0, %v2735
        %2737 = vmatmul.f32.gmra.mxu0 %v2631
        %v2738 = vpop.f32.mrf.mxu0
        %v2739 = vadd.f32 0.0, %v2738
        %2740 = vmatmul.f32.gmra.mxu0 %v2632
        %v2741 = vpop.f32.mrf.mxu0
        %v2742 = vadd.f32 0.0, %v2741
        %2743 = vmatmul.f32.gmra.mxu0 %v2633
        %v2744 = vpop.f32.mrf.mxu0
        %v2745 = vadd.f32 0.0, %v2744
        %2746 = vmatmul.f32.gmra.mxu0 %v2634
        %v2747 = vpop.f32.mrf.mxu0
        %v2748 = vadd.f32 0.0, %v2747
        %2749 = vdwg.mxu0
        %v2750 = vadd.f32 %v2611, %v2686
        %v2751 = vadd.f32 %v2612, %v2727
        %v2752 = vadd.f32 %v2613, %v2689
        %v2753 = vadd.f32 %v2614, %v2730
        %v2754 = vadd.f32 %v2615, %v2692
        %v2755 = vadd.f32 %v2616, %v2733
        %v2756 = vadd.f32 %v2617, %v2695
        %v2757 = vadd.f32 %v2618, %v2736
        %v2758 = vadd.f32 %v2619, %v2698
        %v2759 = vadd.f32 %v2620, %v2739
        %v2760 = vadd.f32 %v2621, %v2701
        %v2761 = vadd.f32 %v2622, %v2742
        %v2762 = vadd.f32 %v2623, %v2704
        %v2763 = vadd.f32 %v2624, %v2745
        %v2764 = vadd.f32 %v2625, %v2707
        %v2765 = vadd.f32 %v2626, %v2748
        %v2766 = vld [vmem:[%s2178] sm:$0xff]
        %v2767 = vld [vmem:[%s2178 + $0x8] sm:$0xff]
        %v2768 = vld [vmem:[%s2178 + $0x10] sm:$0xff]
        %v2769 = vld [vmem:[%s2178 + $0x18] sm:$0xff]
        %v2770 = vld [vmem:[%s2178 + $0x20] sm:$0xff]
        %v2771 = vld [vmem:[%s2178 + $0x28] sm:$0xff]
        %v2772 = vld [vmem:[%s2178 + $0x30] sm:$0xff]
        %v2773 = vld [vmem:[%s2178 + $0x38] sm:$0xff]
        %s2774 = scalar_lea.vmem [#allocation7], 1024
        %v2775 = vld [vmem:[%s2774] sm:$0xff]
        %v2776 = vld [vmem:[%s2774 + $0x8] sm:$0xff]
        %v2777 = vld [vmem:[%s2774 + $0x10] sm:$0xff]
        %v2778 = vld [vmem:[%s2774 + $0x18] sm:$0xff]
        %v2779 = vld [vmem:[%s2774 + $0x20] sm:$0xff]
        %v2780 = vld [vmem:[%s2774 + $0x28] sm:$0xff]
        %v2781 = vld [vmem:[%s2774 + $0x30] sm:$0xff]
        %v2782 = vld [vmem:[%s2774 + $0x38] sm:$0xff]
        %v2783 = vld [vmem:[%s2774 + $0x40] sm:$0xff]
        %v2784 = vld [vmem:[%s2774 + $0x48] sm:$0xff]
        %v2785 = vld [vmem:[%s2774 + $0x50] sm:$0xff]
        %v2786 = vld [vmem:[%s2774 + $0x58] sm:$0xff]
        %v2787 = vld [vmem:[%s2774 + $0x60] sm:$0xff]
        %v2788 = vld [vmem:[%s2774 + $0x68] sm:$0xff]
        %v2789 = vld [vmem:[%s2774 + $0x70] sm:$0xff]
        %v2790 = vld [vmem:[%s2774 + $0x78] sm:$0xff]
        %v2791 = vld [vmem:[%s2774 + $0x80] sm:$0xff]
        %v2792 = vld [vmem:[%s2774 + $0x88] sm:$0xff]
        %v2793 = vld [vmem:[%s2774 + $0x90] sm:$0xff]
        %v2794 = vld [vmem:[%s2774 + $0x98] sm:$0xff]
        %v2795 = vld [vmem:[%s2774 + $0xa0] sm:$0xff]
        %v2796 = vld [vmem:[%s2774 + $0xa8] sm:$0xff]
        %v2797 = vld [vmem:[%s2774 + $0xb0] sm:$0xff]
        %v2798 = vld [vmem:[%s2774 + $0xb8] sm:$0xff]
        %v2799 = vld [vmem:[%s2774 + $0xc0] sm:$0xff]
        %v2800 = vld [vmem:[%s2774 + $0xc8] sm:$0xff]
        %v2801 = vld [vmem:[%s2774 + $0xd0] sm:$0xff]
        %v2802 = vld [vmem:[%s2774 + $0xd8] sm:$0xff]
        %v2803 = vld [vmem:[%s2774 + $0xe0] sm:$0xff]
        %v2804 = vld [vmem:[%s2774 + $0xe8] sm:$0xff]
        %v2805 = vld [vmem:[%s2774 + $0xf0] sm:$0xff]
        %v2806 = vld [vmem:[%s2774 + $0xf8] sm:$0xff]
        %2807 = vmatpush.msra.mxu0 %v2805
        %2808 = vmatpush.msra.mxu0 %v2803
        %2809 = vmatpush.msra.mxu0 %v2801
        %2810 = vmatpush.msra.mxu0 %v2799
        %2811 = vmatpush.msra.mxu0 %v2797
        %2812 = vmatpush.msra.mxu0 %v2795
        %2813 = vmatpush.msra.mxu0 %v2793
        %2814 = vmatpush.msra.mxu0 %v2791
        %2815 = vmatpush.msra.mxu0 %v2789
        %2816 = vmatpush.msra.mxu0 %v2787
        %2817 = vmatpush.msra.mxu0 %v2785
        %2818 = vmatpush.msra.mxu0 %v2783
        %2819 = vmatpush.msra.mxu0 %v2781
        %2820 = vmatpush.msra.mxu0 %v2779
        %2821 = vmatpush.msra.mxu0 %v2777
        %2822 = vmatpush.msra.mxu0 %v2775
        %2823 = vmatmul.f32.gmra.mxu0 %v2766
        %v2824 = vpop.f32.mrf.mxu0
        %v2825 = vadd.f32 0.0, %v2824
        %2826 = vmatmul.f32.gmra.mxu0 %v2767
        %v2827 = vpop.f32.mrf.mxu0
        %v2828 = vadd.f32 0.0, %v2827
        %2829 = vmatmul.f32.gmra.mxu0 %v2768
        %v2830 = vpop.f32.mrf.mxu0
        %v2831 = vadd.f32 0.0, %v2830
        %2832 = vmatmul.f32.gmra.mxu0 %v2769
        %v2833 = vpop.f32.mrf.mxu0
        %v2834 = vadd.f32 0.0, %v2833
        %2835 = vmatmul.f32.gmra.mxu0 %v2770
        %v2836 = vpop.f32.mrf.mxu0
        %v2837 = vadd.f32 0.0, %v2836
        %2838 = vmatmul.f32.gmra.mxu0 %v2771
        %v2839 = vpop.f32.mrf.mxu0
        %v2840 = vadd.f32 0.0, %v2839
        %2841 = vmatmul.f32.gmra.mxu0 %v2772
        %v2842 = vpop.f32.mrf.mxu0
        %v2843 = vadd.f32 0.0, %v2842
        %2844 = vmatmul.f32.gmra.mxu0 %v2773
        %v2845 = vpop.f32.mrf.mxu0
        %v2846 = vadd.f32 0.0, %v2845
        %2847 = vdwg.mxu0
        %2848 = vmatpush.msra.mxu0 %v2806
        %2849 = vmatpush.msra.mxu0 %v2804
        %2850 = vmatpush.msra.mxu0 %v2802
        %2851 = vmatpush.msra.mxu0 %v2800
        %2852 = vmatpush.msra.mxu0 %v2798
        %2853 = vmatpush.msra.mxu0 %v2796
        %2854 = vmatpush.msra.mxu0 %v2794
        %2855 = vmatpush.msra.mxu0 %v2792
        %2856 = vmatpush.msra.mxu0 %v2790
        %2857 = vmatpush.msra.mxu0 %v2788
        %2858 = vmatpush.msra.mxu0 %v2786
        %2859 = vmatpush.msra.mxu0 %v2784
        %2860 = vmatpush.msra.mxu0 %v2782
        %2861 = vmatpush.msra.mxu0 %v2780
        %2862 = vmatpush.msra.mxu0 %v2778
        %2863 = vmatpush.msra.mxu0 %v2776
        %2864 = vmatmul.f32.gmra.mxu0 %v2766
        %v2865 = vpop.f32.mrf.mxu0
        %v2866 = vadd.f32 0.0, %v2865
        %2867 = vmatmul.f32.gmra.mxu0 %v2767
        %v2868 = vpop.f32.mrf.mxu0
        %v2869 = vadd.f32 0.0, %v2868
        %2870 = vmatmul.f32.gmra.mxu0 %v2768
        %v2871 = vpop.f32.mrf.mxu0
        %v2872 = vadd.f32 0.0, %v2871
        %2873 = vmatmul.f32.gmra.mxu0 %v2769
        %v2874 = vpop.f32.mrf.mxu0
        %v2875 = vadd.f32 0.0, %v2874
        %2876 = vmatmul.f32.gmra.mxu0 %v2770
        %v2877 = vpop.f32.mrf.mxu0
        %v2878 = vadd.f32 0.0, %v2877
        %2879 = vmatmul.f32.gmra.mxu0 %v2771
        %v2880 = vpop.f32.mrf.mxu0
        %v2881 = vadd.f32 0.0, %v2880
        %2882 = vmatmul.f32.gmra.mxu0 %v2772
        %v2883 = vpop.f32.mrf.mxu0
        %v2884 = vadd.f32 0.0, %v2883
        %2885 = vmatmul.f32.gmra.mxu0 %v2773
        %v2886 = vpop.f32.mrf.mxu0
        %v2887 = vadd.f32 0.0, %v2886
        %2888 = vdwg.mxu0
        %v2889 = vadd.f32 %v2750, %v2825
        %v2890 = vadd.f32 %v2751, %v2866
        %v2891 = vadd.f32 %v2752, %v2828
        %v2892 = vadd.f32 %v2753, %v2869
        %v2893 = vadd.f32 %v2754, %v2831
        %v2894 = vadd.f32 %v2755, %v2872
        %v2895 = vadd.f32 %v2756, %v2834
        %v2896 = vadd.f32 %v2757, %v2875
        %v2897 = vadd.f32 %v2758, %v2837
        %v2898 = vadd.f32 %v2759, %v2878
        %v2899 = vadd.f32 %v2760, %v2840
        %v2900 = vadd.f32 %v2761, %v2881
        %v2901 = vadd.f32 %v2762, %v2843
        %v2902 = vadd.f32 %v2763, %v2884
        %v2903 = vadd.f32 %v2764, %v2846
        %v2904 = vadd.f32 %v2765, %v2887
        %v2905 = vmax.f32 %v2889, %v2890
        %v2906 = vmax.f32 %v2891, %v2892
        %v2907 = vmax.f32 %v2893, %v2894
        %v2908 = vmax.f32 %v2895, %v2896
        %v2909 = vmax.f32 %v2897, %v2898
        %v2910 = vmax.f32 %v2899, %v2900
        %v2911 = vmax.f32 %v2901, %v2902
        %v2912 = vmax.f32 %v2903, %v2904
        %2913 = vst [vmem:[#allocation4] sm:$0xff] %v2905
        %2914 = vst [vmem:[#allocation4 + $0x8] sm:$0xff] %v2906
        %2915 = vst [vmem:[#allocation4 + $0x10] sm:$0xff] %v2907
        %2916 = vst [vmem:[#allocation4 + $0x18] sm:$0xff] %v2908
        %2917 = vst [vmem:[#allocation4 + $0x20] sm:$0xff] %v2909
        %2918 = vst [vmem:[#allocation4 + $0x28] sm:$0xff] %v2910
        %2919 = vst [vmem:[#allocation4 + $0x30] sm:$0xff] %v2911
        %2920 = vst [vmem:[#allocation4 + $0x38] sm:$0xff] %v2912
        %v2921 = vld [vmem:[%s4] sm:$0x1]
        %v2922 = vld [vmem:[#allocation4] sm:$0xff]
        %s2923 = scalar_lea.vmem [#allocation4], 8
        %v2924 = vld [vmem:[%s2923] sm:$0xff]
        %v2925 = vmax.f32 %v2922, %v2924
        %v2927 = vperm.slane %v2921, 0
        %v2929 = vadd.f32 %v2925, %v2927
        %v2930 = vmax.f32 %v2929, 0.0
        %2931 = vst [vmem:[#allocation5] sm:$0xff] %v2930
        %s2932 = scalar_lea.vmem [#allocation4], 16
        %v2933 = vld [vmem:[%s2932] sm:$0xff]
        %s2934 = scalar_lea.vmem [#allocation4], 24
        %v2935 = vld [vmem:[%s2934] sm:$0xff]
        %v2936 = vmax.f32 %v2933, %v2935
        %v2937 = vadd.f32 %v2936, %v2927
        %v2938 = vmax.f32 %v2937, 0.0
        %2939 = vst [vmem:[#allocation5 + $0x8] sm:$0xff] %v2938
        %s2940 = scalar_lea.vmem [#allocation4], 32
        %v2941 = vld [vmem:[%s2940] sm:$0xff]
        %s2942 = scalar_lea.vmem [#allocation4], 40
        %v2943 = vld [vmem:[%s2942] sm:$0xff]
        %v2944 = vmax.f32 %v2941, %v2943
        %v2945 = vadd.f32 %v2944, %v2927
        %v2946 = vmax.f32 %v2945, 0.0
        %2947 = vst [vmem:[#allocation5 + $0x10] sm:$0xff] %v2946
        %s2948 = scalar_lea.vmem [#allocation4], 48
        %v2949 = vld [vmem:[%s2948] sm:$0xff]
        %s2950 = scalar_lea.vmem [#allocation4], 56
        %v2951 = vld [vmem:[%s2950] sm:$0xff]
        %v2952 = vmax.f32 %v2949, %v2951
        %v2953 = vadd.f32 %v2952, %v2927
        %v2954 = vmax.f32 %v2953, 0.0
        %2955 = vst [vmem:[#allocation5 + $0x18] sm:$0xff] %v2954
        %v2956 = vld [vmem:[#allocation5] sm:$0xff]
        %v2957 = vld [vmem:[#allocation5 + $0x8] sm:$0xff]
        %v2958 = vld [vmem:[#allocation5 + $0x10] sm:$0xff]
        %v2959 = vld [vmem:[#allocation5 + $0x18] sm:$0xff]
        %v2960 = vld [vmem:[%s5] sm:$0xff]
        %v2961 = vld [vmem:[%s5 + $0x8] sm:$0xff]
        %v2962 = vld [vmem:[%s5 + $0x10] sm:$0xff]
        %v2963 = vld [vmem:[%s5 + $0x18] sm:$0xff]
        %v2964 = vld [vmem:[%s5 + $0x20] sm:$0xff]
        %v2965 = vld [vmem:[%s5 + $0x28] sm:$0xff]
        %v2966 = vld [vmem:[%s5 + $0x30] sm:$0xff]
        %v2967 = vld [vmem:[%s5 + $0x38] sm:$0xff]
        %v2968 = vld [vmem:[%s5 + $0x40] sm:$0xff]
        %v2969 = vld [vmem:[%s5 + $0x48] sm:$0xff]
        %v2970 = vld [vmem:[%s5 + $0x50] sm:$0xff]
        %v2971 = vld [vmem:[%s5 + $0x58] sm:$0xff]
        %v2972 = vld [vmem:[%s5 + $0x60] sm:$0xff]
        %v2973 = vld [vmem:[%s5 + $0x68] sm:$0xff]
        %v2974 = vld [vmem:[%s5 + $0x70] sm:$0xff]
        %v2975 = vld [vmem:[%s5 + $0x78] sm:$0xff]
        %v2976 = vld [vmem:[%s5 + $0x80] sm:$0xff]
        %v2977 = vld [vmem:[%s5 + $0x88] sm:$0xff]
        %v2978 = vld [vmem:[%s5 + $0x90] sm:$0xff]
        %v2979 = vld [vmem:[%s5 + $0x98] sm:$0xff]
        %v2980 = vld [vmem:[%s5 + $0xa0] sm:$0xff]
        %v2981 = vld [vmem:[%s5 + $0xa8] sm:$0xff]
        %v2982 = vld [vmem:[%s5 + $0xb0] sm:$0xff]
        %v2983 = vld [vmem:[%s5 + $0xb8] sm:$0xff]
        %v2984 = vld [vmem:[%s5 + $0xc0] sm:$0xff]
        %v2985 = vld [vmem:[%s5 + $0xc8] sm:$0xff]
        %v2986 = vld [vmem:[%s5 + $0xd0] sm:$0xff]
        %v2987 = vld [vmem:[%s5 + $0xd8] sm:$0xff]
        %v2988 = vld [vmem:[%s5 + $0xe0] sm:$0xff]
        %v2989 = vld [vmem:[%s5 + $0xe8] sm:$0xff]
        %v2990 = vld [vmem:[%s5 + $0xf0] sm:$0xff]
        %v2991 = vld [vmem:[%s5 + $0xf8] sm:$0xff]
        %v2992 = vld [vmem:[%s5 + $0x100] sm:$0xff]
        %v2993 = vld [vmem:[%s5 + $0x108] sm:$0xff]
        %v2994 = vld [vmem:[%s5 + $0x110] sm:$0xff]
        %v2995 = vld [vmem:[%s5 + $0x118] sm:$0xff]
        %v2996 = vld [vmem:[%s5 + $0x120] sm:$0xff]
        %v2997 = vld [vmem:[%s5 + $0x128] sm:$0xff]
        %v2998 = vld [vmem:[%s5 + $0x130] sm:$0xff]
        %v2999 = vld [vmem:[%s5 + $0x138] sm:$0xff]
        %v3000 = vld [vmem:[%s5 + $0x140] sm:$0xff]
        %v3001 = vld [vmem:[%s5 + $0x148] sm:$0xff]
        %v3002 = vld [vmem:[%s5 + $0x150] sm:$0xff]
        %v3003 = vld [vmem:[%s5 + $0x158] sm:$0xff]
        %v3004 = vld [vmem:[%s5 + $0x160] sm:$0xff]
        %v3005 = vld [vmem:[%s5 + $0x168] sm:$0xff]
        %v3006 = vld [vmem:[%s5 + $0x170] sm:$0xff]
        %v3007 = vld [vmem:[%s5 + $0x178] sm:$0xff]
        %v3008 = vld [vmem:[%s5 + $0x180] sm:$0xff]
        %v3009 = vld [vmem:[%s5 + $0x188] sm:$0xff]
        %v3010 = vld [vmem:[%s5 + $0x190] sm:$0xff]
        %v3011 = vld [vmem:[%s5 + $0x198] sm:$0xff]
        %v3012 = vld [vmem:[%s5 + $0x1a0] sm:$0xff]
        %v3013 = vld [vmem:[%s5 + $0x1a8] sm:$0xff]
        %v3014 = vld [vmem:[%s5 + $0x1b0] sm:$0xff]
        %v3015 = vld [vmem:[%s5 + $0x1b8] sm:$0xff]
        %v3016 = vld [vmem:[%s5 + $0x1c0] sm:$0xff]
        %v3017 = vld [vmem:[%s5 + $0x1c8] sm:$0xff]
        %v3018 = vld [vmem:[%s5 + $0x1d0] sm:$0xff]
        %v3019 = vld [vmem:[%s5 + $0x1d8] sm:$0xff]
        %v3020 = vld [vmem:[%s5 + $0x1e0] sm:$0xff]
        %v3021 = vld [vmem:[%s5 + $0x1e8] sm:$0xff]
        %v3022 = vld [vmem:[%s5 + $0x1f0] sm:$0xff]
        %v3023 = vld [vmem:[%s5 + $0x1f8] sm:$0xff]
        %v3024 = vld [vmem:[%s5 + $0x200] sm:$0xff]
        %v3025 = vld [vmem:[%s5 + $0x208] sm:$0xff]
        %v3026 = vld [vmem:[%s5 + $0x210] sm:$0xff]
        %v3027 = vld [vmem:[%s5 + $0x218] sm:$0xff]
        %v3028 = vld [vmem:[%s5 + $0x220] sm:$0xff]
        %v3029 = vld [vmem:[%s5 + $0x228] sm:$0xff]
        %v3030 = vld [vmem:[%s5 + $0x230] sm:$0xff]
        %v3031 = vld [vmem:[%s5 + $0x238] sm:$0xff]
        %v3032 = vld [vmem:[%s5 + $0x240] sm:$0xff]
        %v3033 = vld [vmem:[%s5 + $0x248] sm:$0xff]
        %v3034 = vld [vmem:[%s5 + $0x250] sm:$0xff]
        %v3035 = vld [vmem:[%s5 + $0x258] sm:$0xff]
        %v3036 = vld [vmem:[%s5 + $0x260] sm:$0xff]
        %v3037 = vld [vmem:[%s5 + $0x268] sm:$0xff]
        %v3038 = vld [vmem:[%s5 + $0x270] sm:$0xff]
        %v3039 = vld [vmem:[%s5 + $0x278] sm:$0xff]
        %v3040 = vld [vmem:[%s5 + $0x280] sm:$0xff]
        %v3041 = vld [vmem:[%s5 + $0x288] sm:$0xff]
        %v3042 = vld [vmem:[%s5 + $0x290] sm:$0xff]
        %v3043 = vld [vmem:[%s5 + $0x298] sm:$0xff]
        %v3044 = vld [vmem:[%s5 + $0x2a0] sm:$0xff]
        %v3045 = vld [vmem:[%s5 + $0x2a8] sm:$0xff]
        %v3046 = vld [vmem:[%s5 + $0x2b0] sm:$0xff]
        %v3047 = vld [vmem:[%s5 + $0x2b8] sm:$0xff]
        %v3048 = vld [vmem:[%s5 + $0x2c0] sm:$0xff]
        %v3049 = vld [vmem:[%s5 + $0x2c8] sm:$0xff]
        %v3050 = vld [vmem:[%s5 + $0x2d0] sm:$0xff]
        %v3051 = vld [vmem:[%s5 + $0x2d8] sm:$0xff]
        %v3052 = vld [vmem:[%s5 + $0x2e0] sm:$0xff]
        %v3053 = vld [vmem:[%s5 + $0x2e8] sm:$0xff]
        %v3054 = vld [vmem:[%s5 + $0x2f0] sm:$0xff]
        %v3055 = vld [vmem:[%s5 + $0x2f8] sm:$0xff]
        %v3056 = vld [vmem:[%s5 + $0x300] sm:$0xff]
        %v3057 = vld [vmem:[%s5 + $0x308] sm:$0xff]
        %v3058 = vld [vmem:[%s5 + $0x310] sm:$0xff]
        %v3059 = vld [vmem:[%s5 + $0x318] sm:$0xff]
        %v3060 = vld [vmem:[%s5 + $0x320] sm:$0xff]
        %v3061 = vld [vmem:[%s5 + $0x328] sm:$0xff]
        %v3062 = vld [vmem:[%s5 + $0x330] sm:$0xff]
        %v3063 = vld [vmem:[%s5 + $0x338] sm:$0xff]
        %v3064 = vld [vmem:[%s5 + $0x340] sm:$0xff]
        %v3065 = vld [vmem:[%s5 + $0x348] sm:$0xff]
        %v3066 = vld [vmem:[%s5 + $0x350] sm:$0xff]
        %v3067 = vld [vmem:[%s5 + $0x358] sm:$0xff]
        %v3068 = vld [vmem:[%s5 + $0x360] sm:$0xff]
        %v3069 = vld [vmem:[%s5 + $0x368] sm:$0xff]
        %v3070 = vld [vmem:[%s5 + $0x370] sm:$0xff]
        %v3071 = vld [vmem:[%s5 + $0x378] sm:$0xff]
        %v3072 = vld [vmem:[%s5 + $0x380] sm:$0xff]
        %v3073 = vld [vmem:[%s5 + $0x388] sm:$0xff]
        %v3074 = vld [vmem:[%s5 + $0x390] sm:$0xff]
        %v3075 = vld [vmem:[%s5 + $0x398] sm:$0xff]
        %v3076 = vld [vmem:[%s5 + $0x3a0] sm:$0xff]
        %v3077 = vld [vmem:[%s5 + $0x3a8] sm:$0xff]
        %v3078 = vld [vmem:[%s5 + $0x3b0] sm:$0xff]
        %v3079 = vld [vmem:[%s5 + $0x3b8] sm:$0xff]
        %v3080 = vld [vmem:[%s5 + $0x3c0] sm:$0xff]
        %v3081 = vld [vmem:[%s5 + $0x3c8] sm:$0xff]
        %v3082 = vld [vmem:[%s5 + $0x3d0] sm:$0xff]
        %v3083 = vld [vmem:[%s5 + $0x3d8] sm:$0xff]
        %v3084 = vld [vmem:[%s5 + $0x3e0] sm:$0xff]
        %v3085 = vld [vmem:[%s5 + $0x3e8] sm:$0xff]
        %v3086 = vld [vmem:[%s5 + $0x3f0] sm:$0xff]
        %v3087 = vld [vmem:[%s5 + $0x3f8] sm:$0xff]
        %v3088 = vld [vmem:[%s5 + $0x400] sm:$0xff]
        %v3089 = vld [vmem:[%s5 + $0x408] sm:$0xff]
        %v3090 = vld [vmem:[%s5 + $0x410] sm:$0xff]
        %v3091 = vld [vmem:[%s5 + $0x418] sm:$0xff]
        %v3092 = vld [vmem:[%s5 + $0x420] sm:$0xff]
        %v3093 = vld [vmem:[%s5 + $0x428] sm:$0xff]
        %v3094 = vld [vmem:[%s5 + $0x430] sm:$0xff]
        %v3095 = vld [vmem:[%s5 + $0x438] sm:$0xff]
        %v3096 = vld [vmem:[%s5 + $0x440] sm:$0xff]
        %v3097 = vld [vmem:[%s5 + $0x448] sm:$0xff]
        %v3098 = vld [vmem:[%s5 + $0x450] sm:$0xff]
        %v3099 = vld [vmem:[%s5 + $0x458] sm:$0xff]
        %v3100 = vld [vmem:[%s5 + $0x460] sm:$0xff]
        %v3101 = vld [vmem:[%s5 + $0x468] sm:$0xff]
        %v3102 = vld [vmem:[%s5 + $0x470] sm:$0xff]
        %v3103 = vld [vmem:[%s5 + $0x478] sm:$0xff]
        %v3104 = vld [vmem:[%s5 + $0x480] sm:$0xff]
        %v3105 = vld [vmem:[%s5 + $0x488] sm:$0xff]
        %v3106 = vld [vmem:[%s5 + $0x490] sm:$0xff]
        %v3107 = vld [vmem:[%s5 + $0x498] sm:$0xff]
        %v3108 = vld [vmem:[%s5 + $0x4a0] sm:$0xff]
        %v3109 = vld [vmem:[%s5 + $0x4a8] sm:$0xff]
        %v3110 = vld [vmem:[%s5 + $0x4b0] sm:$0xff]
        %v3111 = vld [vmem:[%s5 + $0x4b8] sm:$0xff]
        %v3112 = vld [vmem:[%s5 + $0x4c0] sm:$0xff]
        %v3113 = vld [vmem:[%s5 + $0x4c8] sm:$0xff]
        %v3114 = vld [vmem:[%s5 + $0x4d0] sm:$0xff]
        %v3115 = vld [vmem:[%s5 + $0x4d8] sm:$0xff]
        %v3116 = vld [vmem:[%s5 + $0x4e0] sm:$0xff]
        %v3117 = vld [vmem:[%s5 + $0x4e8] sm:$0xff]
        %v3118 = vld [vmem:[%s5 + $0x4f0] sm:$0xff]
        %v3119 = vld [vmem:[%s5 + $0x4f8] sm:$0xff]
        %v3120 = vld [vmem:[%s5 + $0x500] sm:$0xff]
        %v3121 = vld [vmem:[%s5 + $0x508] sm:$0xff]
        %v3122 = vld [vmem:[%s5 + $0x510] sm:$0xff]
        %v3123 = vld [vmem:[%s5 + $0x518] sm:$0xff]
        %v3124 = vld [vmem:[%s5 + $0x520] sm:$0xff]
        %v3125 = vld [vmem:[%s5 + $0x528] sm:$0xff]
        %v3126 = vld [vmem:[%s5 + $0x530] sm:$0xff]
        %v3127 = vld [vmem:[%s5 + $0x538] sm:$0xff]
        %v3128 = vld [vmem:[%s5 + $0x540] sm:$0xff]
        %v3129 = vld [vmem:[%s5 + $0x548] sm:$0xff]
        %v3130 = vld [vmem:[%s5 + $0x550] sm:$0xff]
        %v3131 = vld [vmem:[%s5 + $0x558] sm:$0xff]
        %v3132 = vld [vmem:[%s5 + $0x560] sm:$0xff]
        %v3133 = vld [vmem:[%s5 + $0x568] sm:$0xff]
        %v3134 = vld [vmem:[%s5 + $0x570] sm:$0xff]
        %v3135 = vld [vmem:[%s5 + $0x578] sm:$0xff]
        %v3136 = vld [vmem:[%s5 + $0x580] sm:$0xff]
        %v3137 = vld [vmem:[%s5 + $0x588] sm:$0xff]
        %v3138 = vld [vmem:[%s5 + $0x590] sm:$0xff]
        %v3139 = vld [vmem:[%s5 + $0x598] sm:$0xff]
        %v3140 = vld [vmem:[%s5 + $0x5a0] sm:$0xff]
        %v3141 = vld [vmem:[%s5 + $0x5a8] sm:$0xff]
        %v3142 = vld [vmem:[%s5 + $0x5b0] sm:$0xff]
        %v3143 = vld [vmem:[%s5 + $0x5b8] sm:$0xff]
        %v3144 = vld [vmem:[%s5 + $0x5c0] sm:$0xff]
        %v3145 = vld [vmem:[%s5 + $0x5c8] sm:$0xff]
        %v3146 = vld [vmem:[%s5 + $0x5d0] sm:$0xff]
        %v3147 = vld [vmem:[%s5 + $0x5d8] sm:$0xff]
        %v3148 = vld [vmem:[%s5 + $0x5e0] sm:$0xff]
        %v3149 = vld [vmem:[%s5 + $0x5e8] sm:$0xff]
        %v3150 = vld [vmem:[%s5 + $0x5f0] sm:$0xff]
        %v3151 = vld [vmem:[%s5 + $0x5f8] sm:$0xff]
        %v3152 = vld [vmem:[%s5 + $0x600] sm:$0xff]
        %v3153 = vld [vmem:[%s5 + $0x608] sm:$0xff]
        %v3154 = vld [vmem:[%s5 + $0x610] sm:$0xff]
        %v3155 = vld [vmem:[%s5 + $0x618] sm:$0xff]
        %v3156 = vld [vmem:[%s5 + $0x620] sm:$0xff]
        %v3157 = vld [vmem:[%s5 + $0x628] sm:$0xff]
        %v3158 = vld [vmem:[%s5 + $0x630] sm:$0xff]
        %v3159 = vld [vmem:[%s5 + $0x638] sm:$0xff]
        %v3160 = vld [vmem:[%s5 + $0x640] sm:$0xff]
        %v3161 = vld [vmem:[%s5 + $0x648] sm:$0xff]
        %v3162 = vld [vmem:[%s5 + $0x650] sm:$0xff]
        %v3163 = vld [vmem:[%s5 + $0x658] sm:$0xff]
        %v3164 = vld [vmem:[%s5 + $0x660] sm:$0xff]
        %v3165 = vld [vmem:[%s5 + $0x668] sm:$0xff]
        %v3166 = vld [vmem:[%s5 + $0x670] sm:$0xff]
        %v3167 = vld [vmem:[%s5 + $0x678] sm:$0xff]
        %v3168 = vld [vmem:[%s5 + $0x680] sm:$0xff]
        %v3169 = vld [vmem:[%s5 + $0x688] sm:$0xff]
        %v3170 = vld [vmem:[%s5 + $0x690] sm:$0xff]
        %v3171 = vld [vmem:[%s5 + $0x698] sm:$0xff]
        %v3172 = vld [vmem:[%s5 + $0x6a0] sm:$0xff]
        %v3173 = vld [vmem:[%s5 + $0x6a8] sm:$0xff]
        %v3174 = vld [vmem:[%s5 + $0x6b0] sm:$0xff]
        %v3175 = vld [vmem:[%s5 + $0x6b8] sm:$0xff]
        %v3176 = vld [vmem:[%s5 + $0x6c0] sm:$0xff]
        %v3177 = vld [vmem:[%s5 + $0x6c8] sm:$0xff]
        %v3178 = vld [vmem:[%s5 + $0x6d0] sm:$0xff]
        %v3179 = vld [vmem:[%s5 + $0x6d8] sm:$0xff]
        %v3180 = vld [vmem:[%s5 + $0x6e0] sm:$0xff]
        %v3181 = vld [vmem:[%s5 + $0x6e8] sm:$0xff]
        %v3182 = vld [vmem:[%s5 + $0x6f0] sm:$0xff]
        %v3183 = vld [vmem:[%s5 + $0x6f8] sm:$0xff]
        %v3184 = vld [vmem:[%s5 + $0x700] sm:$0xff]
        %v3185 = vld [vmem:[%s5 + $0x708] sm:$0xff]
        %v3186 = vld [vmem:[%s5 + $0x710] sm:$0xff]
        %v3187 = vld [vmem:[%s5 + $0x718] sm:$0xff]
        %v3188 = vld [vmem:[%s5 + $0x720] sm:$0xff]
        %v3189 = vld [vmem:[%s5 + $0x728] sm:$0xff]
        %v3190 = vld [vmem:[%s5 + $0x730] sm:$0xff]
        %v3191 = vld [vmem:[%s5 + $0x738] sm:$0xff]
        %v3192 = vld [vmem:[%s5 + $0x740] sm:$0xff]
        %v3193 = vld [vmem:[%s5 + $0x748] sm:$0xff]
        %v3194 = vld [vmem:[%s5 + $0x750] sm:$0xff]
        %v3195 = vld [vmem:[%s5 + $0x758] sm:$0xff]
        %v3196 = vld [vmem:[%s5 + $0x760] sm:$0xff]
        %v3197 = vld [vmem:[%s5 + $0x768] sm:$0xff]
        %v3198 = vld [vmem:[%s5 + $0x770] sm:$0xff]
        %v3199 = vld [vmem:[%s5 + $0x778] sm:$0xff]
        %v3200 = vld [vmem:[%s5 + $0x780] sm:$0xff]
        %v3201 = vld [vmem:[%s5 + $0x788] sm:$0xff]
        %v3202 = vld [vmem:[%s5 + $0x790] sm:$0xff]
        %v3203 = vld [vmem:[%s5 + $0x798] sm:$0xff]
        %v3204 = vld [vmem:[%s5 + $0x7a0] sm:$0xff]
        %v3205 = vld [vmem:[%s5 + $0x7a8] sm:$0xff]
        %v3206 = vld [vmem:[%s5 + $0x7b0] sm:$0xff]
        %v3207 = vld [vmem:[%s5 + $0x7b8] sm:$0xff]
        %v3208 = vld [vmem:[%s5 + $0x7c0] sm:$0xff]
        %v3209 = vld [vmem:[%s5 + $0x7c8] sm:$0xff]
        %v3210 = vld [vmem:[%s5 + $0x7d0] sm:$0xff]
        %v3211 = vld [vmem:[%s5 + $0x7d8] sm:$0xff]
        %v3212 = vld [vmem:[%s5 + $0x7e0] sm:$0xff]
        %v3213 = vld [vmem:[%s5 + $0x7e8] sm:$0xff]
        %v3214 = vld [vmem:[%s5 + $0x7f0] sm:$0xff]
        %v3215 = vld [vmem:[%s5 + $0x7f8] sm:$0xff]
        %3216 = vmatpush.msra.mxu0 %v3020
        %3217 = vmatpush.msra.mxu0 %v3016
        %3218 = vmatpush.msra.mxu0 %v3012
        %3219 = vmatpush.msra.mxu0 %v3008
        %3220 = vmatpush.msra.mxu0 %v3004
        %3221 = vmatpush.msra.mxu0 %v3000
        %3222 = vmatpush.msra.mxu0 %v2996
        %3223 = vmatpush.msra.mxu0 %v2992
        %3224 = vmatpush.msra.mxu0 %v2988
        %3225 = vmatpush.msra.mxu0 %v2984
        %3226 = vmatpush.msra.mxu0 %v2980
        %3227 = vmatpush.msra.mxu0 %v2976
        %3228 = vmatpush.msra.mxu0 %v2972
        %3229 = vmatpush.msra.mxu0 %v2968
        %3230 = vmatpush.msra.mxu0 %v2964
        %3231 = vmatpush.msra.mxu0 %v2960
        %3232 = vmatmul.f32.gmra.mxu0 %v2956
        %v3233 = vpop.f32.mrf.mxu0
        %v3234 = vadd.f32 0.0, %v3233
        %3235 = vdwg.mxu0
        %3236 = vmatpush.msra.mxu0 %v3084
        %3237 = vmatpush.msra.mxu0 %v3080
        %3238 = vmatpush.msra.mxu0 %v3076
        %3239 = vmatpush.msra.mxu0 %v3072
        %3240 = vmatpush.msra.mxu0 %v3068
        %3241 = vmatpush.msra.mxu0 %v3064
        %3242 = vmatpush.msra.mxu0 %v3060
        %3243 = vmatpush.msra.mxu0 %v3056
        %3244 = vmatpush.msra.mxu0 %v3052
        %3245 = vmatpush.msra.mxu0 %v3048
        %3246 = vmatpush.msra.mxu0 %v3044
        %3247 = vmatpush.msra.mxu0 %v3040
        %3248 = vmatpush.msra.mxu0 %v3036
        %3249 = vmatpush.msra.mxu0 %v3032
        %3250 = vmatpush.msra.mxu0 %v3028
        %3251 = vmatpush.msra.mxu0 %v3024
        %3252 = vmatmul.f32.gmra.mxu0 %v2957
        %v3253 = vpop.f32.mrf.mxu0
        %v3254 = vadd.f32 %v3234, %v3253
        %3255 = vdwg.mxu0
        %3256 = vmatpush.msra.mxu0 %v3148
        %3257 = vmatpush.msra.mxu0 %v3144
        %3258 = vmatpush.msra.mxu0 %v3140
        %3259 = vmatpush.msra.mxu0 %v3136
        %3260 = vmatpush.msra.mxu0 %v3132
        %3261 = vmatpush.msra.mxu0 %v3128
        %3262 = vmatpush.msra.mxu0 %v3124
        %3263 = vmatpush.msra.mxu0 %v3120
        %3264 = vmatpush.msra.mxu0 %v3116
        %3265 = vmatpush.msra.mxu0 %v3112
        %3266 = vmatpush.msra.mxu0 %v3108
        %3267 = vmatpush.msra.mxu0 %v3104
        %3268 = vmatpush.msra.mxu0 %v3100
        %3269 = vmatpush.msra.mxu0 %v3096
        %3270 = vmatpush.msra.mxu0 %v3092
        %3271 = vmatpush.msra.mxu0 %v3088
        %3272 = vmatmul.f32.gmra.mxu0 %v2958
        %v3273 = vpop.f32.mrf.mxu0
        %v3274 = vadd.f32 %v3254, %v3273
        %3275 = vdwg.mxu0
        %3276 = vmatpush.msra.mxu0 %v3212
        %3277 = vmatpush.msra.mxu0 %v3208
        %3278 = vmatpush.msra.mxu0 %v3204
        %3279 = vmatpush.msra.mxu0 %v3200
        %3280 = vmatpush.msra.mxu0 %v3196
        %3281 = vmatpush.msra.mxu0 %v3192
        %3282 = vmatpush.msra.mxu0 %v3188
        %3283 = vmatpush.msra.mxu0 %v3184
        %3284 = vmatpush.msra.mxu0 %v3180
        %3285 = vmatpush.msra.mxu0 %v3176
        %3286 = vmatpush.msra.mxu0 %v3172
        %3287 = vmatpush.msra.mxu0 %v3168
        %3288 = vmatpush.msra.mxu0 %v3164
        %3289 = vmatpush.msra.mxu0 %v3160
        %3290 = vmatpush.msra.mxu0 %v3156
        %3291 = vmatpush.msra.mxu0 %v3152
        %3292 = vmatmul.f32.gmra.mxu0 %v2959
        %v3293 = vpop.f32.mrf.mxu0
        %v3294 = vadd.f32 %v3274, %v3293
        %3295 = vdwg.mxu0
        %3296 = vmatpush.msra.mxu0 %v3021
        %3297 = vmatpush.msra.mxu0 %v3017
        %3298 = vmatpush.msra.mxu0 %v3013
        %3299 = vmatpush.msra.mxu0 %v3009
        %3300 = vmatpush.msra.mxu0 %v3005
        %3301 = vmatpush.msra.mxu0 %v3001
        %3302 = vmatpush.msra.mxu0 %v2997
        %3303 = vmatpush.msra.mxu0 %v2993
        %3304 = vmatpush.msra.mxu0 %v2989
        %3305 = vmatpush.msra.mxu0 %v2985
        %3306 = vmatpush.msra.mxu0 %v2981
        %3307 = vmatpush.msra.mxu0 %v2977
        %3308 = vmatpush.msra.mxu0 %v2973
        %3309 = vmatpush.msra.mxu0 %v2969
        %3310 = vmatpush.msra.mxu0 %v2965
        %3311 = vmatpush.msra.mxu0 %v2961
        %3312 = vmatmul.f32.gmra.mxu0 %v2956
        %v3313 = vpop.f32.mrf.mxu0
        %v3314 = vadd.f32 0.0, %v3313
        %3315 = vdwg.mxu0
        %3316 = vmatpush.msra.mxu0 %v3085
        %3317 = vmatpush.msra.mxu0 %v3081
        %3318 = vmatpush.msra.mxu0 %v3077
        %3319 = vmatpush.msra.mxu0 %v3073
        %3320 = vmatpush.msra.mxu0 %v3069
        %3321 = vmatpush.msra.mxu0 %v3065
        %3322 = vmatpush.msra.mxu0 %v3061
        %3323 = vmatpush.msra.mxu0 %v3057
        %3324 = vmatpush.msra.mxu0 %v3053
        %3325 = vmatpush.msra.mxu0 %v3049
        %3326 = vmatpush.msra.mxu0 %v3045
        %3327 = vmatpush.msra.mxu0 %v3041
        %3328 = vmatpush.msra.mxu0 %v3037
        %3329 = vmatpush.msra.mxu0 %v3033
        %3330 = vmatpush.msra.mxu0 %v3029
        %3331 = vmatpush.msra.mxu0 %v3025
        %3332 = vmatmul.f32.gmra.mxu0 %v2957
        %v3333 = vpop.f32.mrf.mxu0
        %v3334 = vadd.f32 %v3314, %v3333
        %3335 = vdwg.mxu0
        %3336 = vmatpush.msra.mxu0 %v3149
        %3337 = vmatpush.msra.mxu0 %v3145
        %3338 = vmatpush.msra.mxu0 %v3141
        %3339 = vmatpush.msra.mxu0 %v3137
        %3340 = vmatpush.msra.mxu0 %v3133
        %3341 = vmatpush.msra.mxu0 %v3129
        %3342 = vmatpush.msra.mxu0 %v3125
        %3343 = vmatpush.msra.mxu0 %v3121
        %3344 = vmatpush.msra.mxu0 %v3117
        %3345 = vmatpush.msra.mxu0 %v3113
        %3346 = vmatpush.msra.mxu0 %v3109
        %3347 = vmatpush.msra.mxu0 %v3105
        %3348 = vmatpush.msra.mxu0 %v3101
        %3349 = vmatpush.msra.mxu0 %v3097
        %3350 = vmatpush.msra.mxu0 %v3093
        %3351 = vmatpush.msra.mxu0 %v3089
        %3352 = vmatmul.f32.gmra.mxu0 %v2958
        %v3353 = vpop.f32.mrf.mxu0
        %v3354 = vadd.f32 %v3334, %v3353
        %3355 = vdwg.mxu0
        %3356 = vmatpush.msra.mxu0 %v3213
        %3357 = vmatpush.msra.mxu0 %v3209
        %3358 = vmatpush.msra.mxu0 %v3205
        %3359 = vmatpush.msra.mxu0 %v3201
        %3360 = vmatpush.msra.mxu0 %v3197
        %3361 = vmatpush.msra.mxu0 %v3193
        %3362 = vmatpush.msra.mxu0 %v3189
        %3363 = vmatpush.msra.mxu0 %v3185
        %3364 = vmatpush.msra.mxu0 %v3181
        %3365 = vmatpush.msra.mxu0 %v3177
        %3366 = vmatpush.msra.mxu0 %v3173
        %3367 = vmatpush.msra.mxu0 %v3169
        %3368 = vmatpush.msra.mxu0 %v3165
        %3369 = vmatpush.msra.mxu0 %v3161
        %3370 = vmatpush.msra.mxu0 %v3157
        %3371 = vmatpush.msra.mxu0 %v3153
        %3372 = vmatmul.f32.gmra.mxu0 %v2959
        %v3373 = vpop.f32.mrf.mxu0
        %v3374 = vadd.f32 %v3354, %v3373
        %3375 = vdwg.mxu0
        %3376 = vmatpush.msra.mxu0 %v3022
        %3377 = vmatpush.msra.mxu0 %v3018
        %3378 = vmatpush.msra.mxu0 %v3014
        %3379 = vmatpush.msra.mxu0 %v3010
        %3380 = vmatpush.msra.mxu0 %v3006
        %3381 = vmatpush.msra.mxu0 %v3002
        %3382 = vmatpush.msra.mxu0 %v2998
        %3383 = vmatpush.msra.mxu0 %v2994
        %3384 = vmatpush.msra.mxu0 %v2990
        %3385 = vmatpush.msra.mxu0 %v2986
        %3386 = vmatpush.msra.mxu0 %v2982
        %3387 = vmatpush.msra.mxu0 %v2978
        %3388 = vmatpush.msra.mxu0 %v2974
        %3389 = vmatpush.msra.mxu0 %v2970
        %3390 = vmatpush.msra.mxu0 %v2966
        %3391 = vmatpush.msra.mxu0 %v2962
        %3392 = vmatmul.f32.gmra.mxu0 %v2956
        %v3393 = vpop.f32.mrf.mxu0
        %v3394 = vadd.f32 0.0, %v3393
        %3395 = vdwg.mxu0
        %3396 = vmatpush.msra.mxu0 %v3086
        %3397 = vmatpush.msra.mxu0 %v3082
        %3398 = vmatpush.msra.mxu0 %v3078
        %3399 = vmatpush.msra.mxu0 %v3074
        %3400 = vmatpush.msra.mxu0 %v3070
        %3401 = vmatpush.msra.mxu0 %v3066
        %3402 = vmatpush.msra.mxu0 %v3062
        %3403 = vmatpush.msra.mxu0 %v3058
        %3404 = vmatpush.msra.mxu0 %v3054
        %3405 = vmatpush.msra.mxu0 %v3050
        %3406 = vmatpush.msra.mxu0 %v3046
        %3407 = vmatpush.msra.mxu0 %v3042
        %3408 = vmatpush.msra.mxu0 %v3038
        %3409 = vmatpush.msra.mxu0 %v3034
        %3410 = vmatpush.msra.mxu0 %v3030
        %3411 = vmatpush.msra.mxu0 %v3026
        %3412 = vmatmul.f32.gmra.mxu0 %v2957
        %v3413 = vpop.f32.mrf.mxu0
        %v3414 = vadd.f32 %v3394, %v3413
        %3415 = vdwg.mxu0
        %3416 = vmatpush.msra.mxu0 %v3150
        %3417 = vmatpush.msra.mxu0 %v3146
        %3418 = vmatpush.msra.mxu0 %v3142
        %3419 = vmatpush.msra.mxu0 %v3138
        %3420 = vmatpush.msra.mxu0 %v3134
        %3421 = vmatpush.msra.mxu0 %v3130
        %3422 = vmatpush.msra.mxu0 %v3126
        %3423 = vmatpush.msra.mxu0 %v3122
        %3424 = vmatpush.msra.mxu0 %v3118
        %3425 = vmatpush.msra.mxu0 %v3114
        %3426 = vmatpush.msra.mxu0 %v3110
        %3427 = vmatpush.msra.mxu0 %v3106
        %3428 = vmatpush.msra.mxu0 %v3102
        %3429 = vmatpush.msra.mxu0 %v3098
        %3430 = vmatpush.msra.mxu0 %v3094
        %3431 = vmatpush.msra.mxu0 %v3090
        %3432 = vmatmul.f32.gmra.mxu0 %v2958
        %v3433 = vpop.f32.mrf.mxu0
        %v3434 = vadd.f32 %v3414, %v3433
        %3435 = vdwg.mxu0
        %3436 = vmatpush.msra.mxu0 %v3214
        %3437 = vmatpush.msra.mxu0 %v3210
        %3438 = vmatpush.msra.mxu0 %v3206
        %3439 = vmatpush.msra.mxu0 %v3202
        %3440 = vmatpush.msra.mxu0 %v3198
        %3441 = vmatpush.msra.mxu0 %v3194
        %3442 = vmatpush.msra.mxu0 %v3190
        %3443 = vmatpush.msra.mxu0 %v3186
        %3444 = vmatpush.msra.mxu0 %v3182
        %3445 = vmatpush.msra.mxu0 %v3178
        %3446 = vmatpush.msra.mxu0 %v3174
        %3447 = vmatpush.msra.mxu0 %v3170
        %3448 = vmatpush.msra.mxu0 %v3166
        %3449 = vmatpush.msra.mxu0 %v3162
        %3450 = vmatpush.msra.mxu0 %v3158
        %3451 = vmatpush.msra.mxu0 %v3154
        %3452 = vmatmul.f32.gmra.mxu0 %v2959
        %v3453 = vpop.f32.mrf.mxu0
        %v3454 = vadd.f32 %v3434, %v3453
        %3455 = vdwg.mxu0
        %3456 = vmatpush.msra.mxu0 %v3023
        %3457 = vmatpush.msra.mxu0 %v3019
        %3458 = vmatpush.msra.mxu0 %v3015
        %3459 = vmatpush.msra.mxu0 %v3011
        %3460 = vmatpush.msra.mxu0 %v3007
        %3461 = vmatpush.msra.mxu0 %v3003
        %3462 = vmatpush.msra.mxu0 %v2999
        %3463 = vmatpush.msra.mxu0 %v2995
        %3464 = vmatpush.msra.mxu0 %v2991
        %3465 = vmatpush.msra.mxu0 %v2987
        %3466 = vmatpush.msra.mxu0 %v2983
        %3467 = vmatpush.msra.mxu0 %v2979
        %3468 = vmatpush.msra.mxu0 %v2975
        %3469 = vmatpush.msra.mxu0 %v2971
        %3470 = vmatpush.msra.mxu0 %v2967
        %3471 = vmatpush.msra.mxu0 %v2963
        %3472 = vmatmul.f32.gmra.mxu0 %v2956
        %v3473 = vpop.f32.mrf.mxu0
        %v3474 = vadd.f32 0.0, %v3473
        %3475 = vdwg.mxu0
        %3476 = vmatpush.msra.mxu0 %v3087
        %3477 = vmatpush.msra.mxu0 %v3083
        %3478 = vmatpush.msra.mxu0 %v3079
        %3479 = vmatpush.msra.mxu0 %v3075
        %3480 = vmatpush.msra.mxu0 %v3071
        %3481 = vmatpush.msra.mxu0 %v3067
        %3482 = vmatpush.msra.mxu0 %v3063
        %3483 = vmatpush.msra.mxu0 %v3059
        %3484 = vmatpush.msra.mxu0 %v3055
        %3485 = vmatpush.msra.mxu0 %v3051
        %3486 = vmatpush.msra.mxu0 %v3047
        %3487 = vmatpush.msra.mxu0 %v3043
        %3488 = vmatpush.msra.mxu0 %v3039
        %3489 = vmatpush.msra.mxu0 %v3035
        %3490 = vmatpush.msra.mxu0 %v3031
        %3491 = vmatpush.msra.mxu0 %v3027
        %3492 = vmatmul.f32.gmra.mxu0 %v2957
        %v3493 = vpop.f32.mrf.mxu0
        %v3494 = vadd.f32 %v3474, %v3493
        %3495 = vdwg.mxu0
        %3496 = vmatpush.msra.mxu0 %v3151
        %3497 = vmatpush.msra.mxu0 %v3147
        %3498 = vmatpush.msra.mxu0 %v3143
        %3499 = vmatpush.msra.mxu0 %v3139
        %3500 = vmatpush.msra.mxu0 %v3135
        %3501 = vmatpush.msra.mxu0 %v3131
        %3502 = vmatpush.msra.mxu0 %v3127
        %3503 = vmatpush.msra.mxu0 %v3123
        %3504 = vmatpush.msra.mxu0 %v3119
        %3505 = vmatpush.msra.mxu0 %v3115
        %3506 = vmatpush.msra.mxu0 %v3111
        %3507 = vmatpush.msra.mxu0 %v3107
        %3508 = vmatpush.msra.mxu0 %v3103
        %3509 = vmatpush.msra.mxu0 %v3099
        %3510 = vmatpush.msra.mxu0 %v3095
        %3511 = vmatpush.msra.mxu0 %v3091
        %3512 = vmatmul.f32.gmra.mxu0 %v2958
        %v3513 = vpop.f32.mrf.mxu0
        %v3514 = vadd.f32 %v3494, %v3513
        %3515 = vdwg.mxu0
        %3516 = vmatpush.msra.mxu0 %v3215
        %3517 = vmatpush.msra.mxu0 %v3211
        %3518 = vmatpush.msra.mxu0 %v3207
        %3519 = vmatpush.msra.mxu0 %v3203
        %3520 = vmatpush.msra.mxu0 %v3199
        %3521 = vmatpush.msra.mxu0 %v3195
        %3522 = vmatpush.msra.mxu0 %v3191
        %3523 = vmatpush.msra.mxu0 %v3187
        %3524 = vmatpush.msra.mxu0 %v3183
        %3525 = vmatpush.msra.mxu0 %v3179
        %3526 = vmatpush.msra.mxu0 %v3175
        %3527 = vmatpush.msra.mxu0 %v3171
        %3528 = vmatpush.msra.mxu0 %v3167
        %3529 = vmatpush.msra.mxu0 %v3163
        %3530 = vmatpush.msra.mxu0 %v3159
        %3531 = vmatpush.msra.mxu0 %v3155
        %3532 = vmatmul.f32.gmra.mxu0 %v2959
        %v3533 = vpop.f32.mrf.mxu0
        %v3534 = vadd.f32 %v3514, %v3533
        %3535 = vdwg.mxu0
        %v3536 = vmax.f32 %v3294, %v3374
        %v3537 = vmax.f32 %v3454, %v3534
        %v3538 = vmax.f32 %v3536, %v3537
        %v3539 = vld [vmem:[%s6] sm:$0x1]
        %v3541 = vperm.slane %v3539, 0
        %v3543 = vadd.f32 %v3538, %v3541
        %v3544 = vmax.f32 %v3543, 0.0
        %v3545 = vld [vmem:[%s7] sm:$0xff]
        %v3546 = vld [vmem:[%s7 + $0x8] sm:$0xff]
        %v3547 = vld [vmem:[%s7 + $0x10] sm:$0xff]
        %v3548 = vld [vmem:[%s7 + $0x18] sm:$0xff]
        %v3549 = vld [vmem:[%s7 + $0x20] sm:$0xff]
        %v3550 = vld [vmem:[%s7 + $0x28] sm:$0xff]
        %v3551 = vld [vmem:[%s7 + $0x30] sm:$0xff]
        %v3552 = vld [vmem:[%s7 + $0x38] sm:$0xff]
        %v3553 = vld [vmem:[%s7 + $0x40] sm:$0xff]
        %v3554 = vld [vmem:[%s7 + $0x48] sm:$0xff]
        %v3555 = vld [vmem:[%s7 + $0x50] sm:$0xff]
        %v3556 = vld [vmem:[%s7 + $0x58] sm:$0xff]
        %v3557 = vld [vmem:[%s7 + $0x60] sm:$0xff]
        %v3558 = vld [vmem:[%s7 + $0x68] sm:$0xff]
        %v3559 = vld [vmem:[%s7 + $0x70] sm:$0xff]
        %v3560 = vld [vmem:[%s7 + $0x78] sm:$0xff]
        %v3561 = vld [vmem:[%s8] sm:$0x1]
        %v3563 = vperm.slane %v3561, 0
        %3565 = vmatpush.msra.mxu0 %v3560
        %3566 = vmatpush.msra.mxu0 %v3559
        %3567 = vmatpush.msra.mxu0 %v3558
        %3568 = vmatpush.msra.mxu0 %v3557
        %3569 = vmatpush.msra.mxu0 %v3556
        %3570 = vmatpush.msra.mxu0 %v3555
        %3571 = vmatpush.msra.mxu0 %v3554
        %3572 = vmatpush.msra.mxu0 %v3553
        %3573 = vmatpush.msra.mxu0 %v3552
        %3574 = vmatpush.msra.mxu0 %v3551
        %3575 = vmatpush.msra.mxu0 %v3550
        %3576 = vmatpush.msra.mxu0 %v3549
        %3577 = vmatpush.msra.mxu0 %v3548
        %3578 = vmatpush.msra.mxu0 %v3547
        %3579 = vmatpush.msra.mxu0 %v3546
        %3580 = vmatpush.msra.mxu0 %v3545
        %3581 = vmatmul.f32.gmra.mxu0 %v3544
        %v3582 = vpop.f32.mrf.mxu0
        %v3583 = vadd.f32 %v3563, %v3582
        %3584 = vdwg.mxu0
        %v3585 = vlaneseq
        %v3586 = vand.u32 %v3585, 127
        %vm3587 = vcmp.lt.s32.totalorder %v3586, 10
        %v3588 = vsel %vm3587, %v3583, -1e+30
        %3589 = vmax.xlane.f32.xlu0 %v3588
        %v3590 = vpop.xlane.xlu0 %3589
        %v3591 = vsub.f32 %v3588, %v3590
        %v3592 = vmul.f32 %v3591, 1.442695
        %v3593 = vpow.pop %v3592
        %3594 = vadd.xlane.f32.xlu0 %v3593
        %v3595 = vpop.xlane.xlu0 %3594
        %v3596 = vrcp.pop %v3595
        %v3597 = vmul.f32 %v3595, %v3596
        %v3598 = vsub.f32 1.0, %v3597
        %v3599 = vmul.f32 %v3596, %v3598
        %v3600 = vadd.f32 %v3596, %v3599
        %vm3601 = vweird.f32 %v3595
        %vm3602 = vweird.f32 %v3596
        %vm3603 = vmor %vm3601, %vm3602
        %v3604 = vsel %vm3603, %v3596, %v3600
        %v3605 = vand.u32 2147483647, %v3595
        %vm3606 = vcmp.eq.f32.partialorder %v3605, 8.507059e+37
        %v3607 = vand.u32 %v3595, 2147483648
        %v3608 = vor.u32 1.1754944e-38, %v3607
        %v3609 = vsel %vm3606, %v3608, %v3604
        %v3610 = vmul.f32 %v3593, %v3609
        %3611 = vst [vmem:[%s490] sm:$0xff] %v3610
        %p3612 = scmp.lt.s32.totalorder %s21, 2
        %s3613 = scalar_select %p3612, %s21, 2
        %s3614 = smul.addr %s3613, 8
        %s3615 = scalar_lea.vmem %s9, %s3614
        // Predicated region
        $region99: #{net_forward.1} parent=89 // pred_check
          %p3616 = pneg %p233
        $region100: #{net_forward.1} parent=89 // pred_check_branch
          %3618 = sbr.rel (%p3616) target = $region102
        $region101: #{net_forward.1} parent=89 // pred_region
          _
        $region102: #{net_forward.1} parent=89 // pred_fallthru
          _
      $region90: #{net_forward.1} parent=5 // pred_fallthru
        _
      %p3619 = scmp.le.s32.totalorder 2, %s16
      // Predicated region
      $region103: #{net_forward.1} parent=5 // pred_check
        %p3620 = pneg %p3619
      $region104: #{net_forward.1} parent=5 // pred_check_branch
        %3622 = sbr.rel (%p3620) target = $region106
      $region105: #{net_forward.1} parent=5 // pred_region
        %s3623 = ssub.s32 %s16, 2
        // Predicated region
        $region107: #{net_forward.1} parent=105 // pred_check
          %p3624 = pneg %p239
        $region108: #{net_forward.1} parent=105 // pred_check_branch
          %3626 = sbr.rel (%p3624) target = $region110
        $region109: #{net_forward.1} parent=105 // pred_region
          %p3627 = scmp.lt.s32.totalorder %s22, 2
          %s3628 = scalar_select %p3627, %s22, 2
          %s3629 = smul.addr %s3628, 8
          %s3630 = scalar_lea.vmem %s9, %s3629
        $region110: #{net_forward.1} parent=105 // pred_fallthru
          _
      $region106: #{net_forward.1} parent=5 // pred_fallthru
        _
    $region6: #{net_forward.1} parent=1 // loop_footer
      %s20 = sadd.s32 1, %s16
    $region7: #{net_forward.1} parent=1 // loop_footer_branch
      %15 = sbr.rel target = $region3
    $region8: #{net_forward.1} parent=1 // loop_exit
      _
    %3631 = vsyncpa [#allocation8], 1
    %s3632 = scalar_lea.sflag [#allocation8], 1
    %3633 = vsyncpa %s3632, 1

</llo_original>
